<compile_context>
chip_gen: v7x
topology: tpu7x:2x2x1
jax: 0.10.0
libtpu: 0.0.40
codegen_flags: <defaults>
</compile_context>

<pallas_src>
import jax
import jax.numpy as jnp
from jax.experimental import pallas as pl
from jax.experimental.pallas import tpu as pltpu

# ---------------- model config (scaled-down RoBERTa) ----------------
VOCAB = 50
MAX_POS = 32
TYPE_VOCAB = 2
HIDDEN = 64          # stand-in for 768
HEADS = 4
HEAD_DIM = HIDDEN // HEADS
FFN = 128
LAYERS = 2
NUM_CLASSES = 4
B = 2
S = 8
DTYPE = jnp.float32
MXU_DTYPE = jnp.bfloat16   # matmul operand dtype (f32 accumulation)


# ---------------- fused Pallas kernel (whole forward pass) ----------------
def _fused_roberta_kernel(
    emb_ref, bias_ref, emb_g_ref, emb_b_ref,
    wqkv_ref, bqkv_ref, wo_ref, bo_ref,
    ln1_g_ref, ln1_b_ref, w1_ref, b1_ref, w2_ref, b2_ref,
    ln2_g_ref, ln2_b_ref,
    pre_w_ref, pre_b_ref, cls_w_ref, cls_b_ref,
    out_ref,
    qkv_scr, attn_scr,
):
    f32 = jnp.float32
    bf16 = jnp.bfloat16

    def layernorm(v, g, b):
        mean = jnp.mean(v, axis=-1, keepdims=True)
        vc = v - mean
        var = jnp.mean(vc * vc, axis=-1, keepdims=True)
        return vc * jax.lax.rsqrt(var + 1e-5) * g + b

    def mm(a, w):
        # bf16 MXU operands, f32 accumulation.
        return jnp.dot(a.astype(bf16), w.astype(bf16), preferred_element_type=f32)

    def gelu(v):
        return 0.5 * v * (1.0 + jnp.tanh(
            0.7978845608028654 * (v + 0.044715 * v * v * v)))

    # embedding layernorm fused into the same kernel
    x = layernorm(emb_ref[...].astype(f32), emb_g_ref[...], emb_b_ref[...])
    bias = bias_ref[...]                       # (B, S) additive key mask, f32
    scale = 1.0 / float(HEAD_DIM) ** 0.5

    # ---- transformer encoder: static unroll, weights VMEM-resident ----
    for l in range(LAYERS):
        # fused QKV projection: one (B*S, H) @ (H, 3H) MXU pass
        qkv_scr[...] = mm(x, wqkv_ref[l]) + bqkv_ref[l]

        # all B*HEADS attention blocks inside this same invocation;
        # heads are static lane slices (no transposes).
        for b in range(B):
            rows = pl.ds(b * S, S)
            bias_b = bias[b:b + 1, :]                              # (1, S)
            for h in range(HEADS):
                q = qkv_scr[rows, pl.ds(h * HEAD_DIM, HEAD_DIM)]
                k = qkv_scr[rows, pl.ds(HIDDEN + h * HEAD_DIM, HEAD_DIM)]
                v = qkv_scr[rows, pl.ds(2 * HIDDEN + h * HEAD_DIM, HEAD_DIM)]
                # contract last dims directly: no materialized k.T
                s = jax.lax.dot_general(
                    q.astype(bf16), k.astype(bf16),
                    dimension_numbers=(((1,), (1,)), ((), ())),
                    preferred_element_type=f32) * scale + bias_b
                s = s - jnp.max(s, axis=-1, keepdims=True)
                p = jnp.exp(s)
                p = p * pl.reciprocal(jnp.sum(p, axis=-1, keepdims=True),
                                      approx=True)
                o = jnp.dot(p.astype(bf16), v.astype(bf16),
                            preferred_element_type=f32)
                attn_scr[rows, pl.ds(h * HEAD_DIM, HEAD_DIM)] = o

        # output projection + residual + LN (fused epilogue)
        attn = mm(attn_scr[...], wo_ref[l]) + bo_ref[l]
        x = layernorm(x + attn, ln1_g_ref[l], ln1_b_ref[l])

        # FFN + residual + LN (fused epilogue)
        hmid = gelu(mm(x, w1_ref[l]) + b1_ref[l])
        x = layernorm(x + mm(hmid, w2_ref[l]) + b2_ref[l],
                      ln2_g_ref[l], ln2_b_ref[l])

    # ---- pooler = hidden_state[:, 0]; pre_classifier -> ReLU -> classifier ----
    for b in range(B):
        cls_tok = x[b * S:b * S + 1, :]                            # (1, H)
        hcls = jnp.maximum(mm(cls_tok, pre_w_ref[...]) + pre_b_ref[...], 0.0)
        # TODO(synk): nn.Dropout(0.3) is identity here (inference / eval mode).
        logits = mm(hcls, cls_w_ref[...]) + cls_b_ref[...]
        out_ref[b:b + 1, :] = logits.astype(out_ref.dtype)


# ---------------- parameter init (deterministic, synthetic) ----------------
def init_params(key):
    def nrm(k, shape, scale=0.02):
        return (scale * jax.random.normal(k, shape)).astype(DTYPE)

    keys = iter(jax.random.split(key, 64))
    p = {
        "word_emb": nrm(next(keys), (VOCAB, HIDDEN)),
        "pos_emb": nrm(next(keys), (MAX_POS, HIDDEN)),
        "type_emb": nrm(next(keys), (TYPE_VOCAB, HIDDEN)),
        "emb_ln_g": jnp.ones((1, HIDDEN), DTYPE),
        "emb_ln_b": jnp.zeros((1, HIDDEN), DTYPE),
    }
    wqkv, wo, w1, w2 = [], [], [], []
    for _ in range(LAYERS):
        wq = nrm(next(keys), (HIDDEN, HIDDEN))
        wk = nrm(next(keys), (HIDDEN, HIDDEN))
        wv = nrm(next(keys), (HIDDEN, HIDDEN))
        wqkv.append(jnp.concatenate([wq, wk, wv], axis=1))   # (H, 3H) fused QKV
        wo.append(nrm(next(keys), (HIDDEN, HIDDEN)))
        w1.append(nrm(next(keys), (HIDDEN, FFN)))
        w2.append(nrm(next(keys), (FFN, HIDDEN)))
    p.update({
        # matmul weights stored in bf16 (MXU-native); biases / LN params in f32
        "wqkv": jnp.stack(wqkv).astype(MXU_DTYPE),                 # (L, H, 3H)
        "bqkv": jnp.zeros((LAYERS, 1, 3 * HIDDEN), DTYPE),
        "wo": jnp.stack(wo).astype(MXU_DTYPE),                     # (L, H, H)
        "bo": jnp.zeros((LAYERS, 1, HIDDEN), DTYPE),
        "ln1_g": jnp.ones((LAYERS, 1, HIDDEN), DTYPE),
        "ln1_b": jnp.zeros((LAYERS, 1, HIDDEN), DTYPE),
        "w1": jnp.stack(w1).astype(MXU_DTYPE),                     # (L, H, FFN)
        "b1": jnp.zeros((LAYERS, 1, FFN), DTYPE),
        "w2": jnp.stack(w2).astype(MXU_DTYPE),                     # (L, FFN, H)
        "b2": jnp.zeros((LAYERS, 1, HIDDEN), DTYPE),
        "ln2_g": jnp.ones((LAYERS, 1, HIDDEN), DTYPE),
        "ln2_b": jnp.zeros((LAYERS, 1, HIDDEN), DTYPE),
        "pre_w": nrm(next(keys), (HIDDEN, HIDDEN)).astype(MXU_DTYPE),
        "pre_b": jnp.zeros((1, HIDDEN), DTYPE),
        "cls_w": nrm(next(keys), (HIDDEN, NUM_CLASSES)).astype(MXU_DTYPE),
        "cls_b": jnp.zeros((1, NUM_CLASSES), DTYPE),
    })
    return p


# ---------------- forward pass (mirrors RobertaClass.forward) ----------------
@jax.jit
def roberta_class_forward(params, input_ids, attention_mask, token_type_ids):
    # --- embeddings (gather = plain-JAX glue) ---
    positions = jnp.arange(S, dtype=jnp.int32)
    emb = (params["word_emb"][input_ids]
           + params["pos_emb"][positions][None, :, :]
           + params["type_emb"][token_type_ids])                   # (B, S, H)
    emb = emb.reshape(B * S, HIDDEN)
    # additive attention-mask bias per batch (broadcast over heads/queries in-kernel)
    bias = (1.0 - attention_mask.astype(DTYPE)) * -1e9             # (B, S)

    return pl.pallas_call(
        _fused_roberta_kernel,
        out_shape=jax.ShapeDtypeStruct((B, NUM_CLASSES), DTYPE),
        scratch_shapes=[
            pltpu.VMEM((B * S, 3 * HIDDEN), jnp.float32),   # fused QKV buffer
            pltpu.VMEM((B * S, HIDDEN), jnp.float32),       # attention output
        ],
    )(emb, bias,
      params["emb_ln_g"], params["emb_ln_b"],
      params["wqkv"], params["bqkv"], params["wo"], params["bo"],
      params["ln1_g"], params["ln1_b"], params["w1"], params["b1"],
      params["w2"], params["b2"], params["ln2_g"], params["ln2_b"],
      params["pre_w"], params["pre_b"], params["cls_w"], params["cls_b"])


if __name__ == "__main__":
    key = jax.random.PRNGKey(0)
    k_params, k_ids = jax.random.split(key)
    params = init_params(k_params)

    input_ids = jax.random.randint(k_ids, (B, S), 0, VOCAB, dtype=jnp.int32)
    attention_mask = jnp.concatenate(
        [jnp.ones((B, S - 2), jnp.int32), jnp.zeros((B, 2), jnp.int32)], axis=1)
    token_type_ids = jnp.zeros((B, S), jnp.int32)

    out = roberta_class_forward(params, input_ids, attention_mask, token_type_ids)
    out = jax.block_until_ready(out)
    assert out.shape == (B, NUM_CLASSES)
    assert bool(jnp.all(jnp.isfinite(out)))
    print("KERNEL_OK")
</pallas_src>

<mosaic_0001>
module attributes {stable_mosaic.version = 11 : i64} {
  func.func @_fused_roberta_kernel(%arg0: memref<16x64xf32, #tpu.memory_space<vmem>>, %arg1: memref<2x8xf32, #tpu.memory_space<vmem>>, %arg2: memref<1x64xf32, #tpu.memory_space<vmem>>, %arg3: memref<1x64xf32, #tpu.memory_space<vmem>>, %arg4: memref<2x64x192xbf16, #tpu.memory_space<vmem>>, %arg5: memref<2x1x192xf32, #tpu.memory_space<vmem>>, %arg6: memref<2x64x64xbf16, #tpu.memory_space<vmem>>, %arg7: memref<2x1x64xf32, #tpu.memory_space<vmem>>, %arg8: memref<2x1x64xf32, #tpu.memory_space<vmem>>, %arg9: memref<2x1x64xf32, #tpu.memory_space<vmem>>, %arg10: memref<2x64x128xbf16, #tpu.memory_space<vmem>>, %arg11: memref<2x1x128xf32, #tpu.memory_space<vmem>>, %arg12: memref<2x128x64xbf16, #tpu.memory_space<vmem>>, %arg13: memref<2x1x64xf32, #tpu.memory_space<vmem>>, %arg14: memref<2x1x64xf32, #tpu.memory_space<vmem>>, %arg15: memref<2x1x64xf32, #tpu.memory_space<vmem>>, %arg16: memref<64x64xbf16, #tpu.memory_space<vmem>>, %arg17: memref<1x64xf32, #tpu.memory_space<vmem>>, %arg18: memref<64x4xbf16, #tpu.memory_space<vmem>>, %arg19: memref<1x4xf32, #tpu.memory_space<vmem>>, %arg20: memref<2x4xf32, #tpu.memory_space<vmem>>, %arg21: memref<16x192xf32, #tpu.memory_space<vmem>>, %arg22: memref<16x64xf32, #tpu.memory_space<vmem>>) attributes {dimension_semantics = [], scalar_prefetch = 0 : i64, scratch_operands = 2 : i64, tpu.core_type = #tpu.core_type<tc>} {
    %c0 = arith.constant 0 : index
    %c0_0 = arith.constant 0 : index
    %0 = vector.load %arg0[%c0, %c0_0] : memref<16x64xf32, #tpu.memory_space<vmem>>, vector<16x64xf32>
    %c0_1 = arith.constant 0 : index
    %c0_2 = arith.constant 0 : index
    %1 = vector.load %arg2[%c0_1, %c0_2] : memref<1x64xf32, #tpu.memory_space<vmem>>, vector<1x64xf32>
    %c0_3 = arith.constant 0 : index
    %c0_4 = arith.constant 0 : index
    %2 = vector.load %arg3[%c0_3, %c0_4] : memref<1x64xf32, #tpu.memory_space<vmem>>, vector<1x64xf32>
    %cst = arith.constant dense<0.000000e+00> : vector<16xf32>
    %3 = vector.multi_reduction <add>, %0, %cst [1] : vector<16x64xf32> to vector<16xf32>
    %4 = vector.shape_cast %3 : vector<16xf32> to vector<16x1xf32>
    %cst_5 = arith.constant 6.400000e+01 : f32
    %5 = vector.broadcast %cst_5 : f32 to vector<16x1xf32>
    %6 = arith.divf %4, %5 : vector<16x1xf32>
    %7 = vector.broadcast %6 : vector<16x1xf32> to vector<16x64xf32>
    %8 = arith.subf %0, %7 : vector<16x64xf32>
    %9 = arith.mulf %8, %8 : vector<16x64xf32>
    %cst_6 = arith.constant dense<0.000000e+00> : vector<16xf32>
    %10 = vector.multi_reduction <add>, %9, %cst_6 [1] : vector<16x64xf32> to vector<16xf32>
    %11 = vector.shape_cast %10 : vector<16xf32> to vector<16x1xf32>
    %cst_7 = arith.constant 6.400000e+01 : f32
    %12 = vector.broadcast %cst_7 : f32 to vector<16x1xf32>
    %13 = arith.divf %11, %12 : vector<16x1xf32>
    %cst_8 = arith.constant 9.99999974E-6 : f32
    %14 = vector.broadcast %cst_8 : f32 to vector<16x1xf32>
    %15 = arith.addf %13, %14 : vector<16x1xf32>
    %16 = math.rsqrt %15 : vector<16x1xf32>
    %17 = vector.broadcast %16 : vector<16x1xf32> to vector<16x64xf32>
    %18 = arith.mulf %8, %17 : vector<16x64xf32>
    %19 = vector.broadcast %1 : vector<1x64xf32> to vector<16x64xf32>
    %20 = arith.mulf %18, %19 : vector<16x64xf32>
    %21 = vector.broadcast %2 : vector<1x64xf32> to vector<16x64xf32>
    %22 = arith.addf %20, %21 : vector<16x64xf32>
    %c0_9 = arith.constant 0 : index
    %c0_10 = arith.constant 0 : index
    %23 = vector.load %arg1[%c0_9, %c0_10] : memref<2x8xf32, #tpu.memory_space<vmem>>, vector<2x8xf32>
    %c0_11 = arith.constant 0 : index
    %c0_12 = arith.constant 0 : index
    %c0_13 = arith.constant 0 : index
    %24 = vector.load %arg4[%c0_11, %c0_12, %c0_13] : memref<2x64x192xbf16, #tpu.memory_space<vmem>>, vector<1x64x192xbf16>
    %25 = vector.shape_cast %24 : vector<1x64x192xbf16> to vector<64x192xbf16>
    %26 = arith.truncf %22 : vector<16x64xf32> to vector<16x64xbf16>
    %cst_14 = arith.constant dense<0.000000e+00> : vector<16x192xf32>
    %27 = tpu.matmul %26, %25, %cst_14 {dimension_numbers = #tpu.dot_dimension_numbers<[1], [0], [0], [1], [0, 0, 1, 1], [], []>} : vector<16x64xbf16>, vector<64x192xbf16>, vector<16x192xf32> -> vector<16x192xf32>
    %c0_15 = arith.constant 0 : index
    %c0_16 = arith.constant 0 : index
    %c0_17 = arith.constant 0 : index
    %28 = vector.load %arg5[%c0_15, %c0_16, %c0_17] : memref<2x1x192xf32, #tpu.memory_space<vmem>>, vector<1x1x192xf32>
    %29 = vector.shape_cast %28 : vector<1x1x192xf32> to vector<1x192xf32>
    %30 = vector.broadcast %29 : vector<1x192xf32> to vector<16x192xf32>
    %31 = arith.addf %27, %30 : vector<16x192xf32>
    %c0_18 = arith.constant 0 : index
    %c0_19 = arith.constant 0 : index
    %32 = vector.load %arg21[%c0_18, %c0_19] : memref<16x192xf32, #tpu.memory_space<vmem>>, vector<16x192xf32>
    tpu.vector_store %arg21[%c0_18, %c0_19], %31 {strides = array<i32>} : memref<16x192xf32, #tpu.memory_space<vmem>>, vector<16x192xf32>,
    %33 = vector.extract_strided_slice %23 {offsets = [0, 0], sizes = [1, 8], strides = [1, 1]} : vector<2x8xf32> to vector<1x8xf32>
    %c0_20 = arith.constant 0 : index
    %c0_21 = arith.constant 0 : index
    %34 = vector.load %arg21[%c0_20, %c0_21] : memref<16x192xf32, #tpu.memory_space<vmem>>, vector<8x16xf32>
    %c0_22 = arith.constant 0 : index
    %c64 = arith.constant 64 : index
    %35 = vector.load %arg21[%c0_22, %c64] : memref<16x192xf32, #tpu.memory_space<vmem>>, vector<8x16xf32>
    %c0_23 = arith.constant 0 : index
    %c128 = arith.constant 128 : index
    %36 = vector.load %arg21[%c0_23, %c128] : memref<16x192xf32, #tpu.memory_space<vmem>>, vector<8x16xf32>
    %37 = arith.truncf %34 : vector<8x16xf32> to vector<8x16xbf16>
    %38 = arith.truncf %35 : vector<8x16xf32> to vector<8x16xbf16>
    %cst_24 = arith.constant dense<0.000000e+00> : vector<8x8xf32>
    %39 = tpu.matmul %37, %38, %cst_24 {dimension_numbers = #tpu.dot_dimension_numbers<[1], [1], [0], [0], [0, 0, 1, 0], [], []>} : vector<8x16xbf16>, vector<8x16xbf16>, vector<8x8xf32> -> vector<8x8xf32>
    %cst_25 = arith.constant 2.500000e-01 : f32
    %40 = vector.broadcast %cst_25 : f32 to vector<8x8xf32>
    %41 = arith.mulf %39, %40 : vector<8x8xf32>
    %42 = vector.broadcast %33 : vector<1x8xf32> to vector<8x8xf32>
    %43 = arith.addf %41, %42 : vector<8x8xf32>
    %cst_26 = arith.constant dense<0xFF800000> : vector<8xf32>
    %44 = vector.multi_reduction <maximumf>, %43, %cst_26 [1] : vector<8x8xf32> to vector<8xf32>
    %45 = vector.shape_cast %44 : vector<8xf32> to vector<8x1xf32>
    %46 = vector.broadcast %45 : vector<8x1xf32> to vector<8x8xf32>
    %47 = arith.subf %43, %46 : vector<8x8xf32>
    %48 = math.exp %47 : vector<8x8xf32>
    %cst_27 = arith.constant dense<0.000000e+00> : vector<8xf32>
    %49 = vector.multi_reduction <add>, %48, %cst_27 [1] : vector<8x8xf32> to vector<8xf32>
    %50 = vector.shape_cast %49 : vector<8xf32> to vector<8x1xf32>
    %51 = tpu.reciprocal %50 {approx = true} : vector<8x1xf32> -> vector<8x1xf32>
    %52 = vector.broadcast %51 : vector<8x1xf32> to vector<8x8xf32>
    %53 = arith.mulf %48, %52 : vector<8x8xf32>
    %54 = arith.truncf %53 : vector<8x8xf32> to vector<8x8xbf16>
    %55 = arith.truncf %36 : vector<8x16xf32> to vector<8x16xbf16>
    %cst_28 = arith.constant dense<0.000000e+00> : vector<8x16xf32>
    %56 = tpu.matmul %54, %55, %cst_28 {dimension_numbers = #tpu.dot_dimension_numbers<[1], [0], [0], [1], [0, 0, 1, 1], [], []>} : vector<8x8xbf16>, vector<8x16xbf16>, vector<8x16xf32> -> vector<8x16xf32>
    %c0_29 = arith.constant 0 : index
    %c0_30 = arith.constant 0 : index
    %57 = vector.load %arg22[%c0_29, %c0_30] : memref<16x64xf32, #tpu.memory_space<vmem>>, vector<8x16xf32>
    tpu.vector_store %arg22[%c0_29, %c0_30], %56 {strides = array<i32>} : memref<16x64xf32, #tpu.memory_space<vmem>>, vector<8x16xf32>,
    %c0_31 = arith.constant 0 : index
    %c16 = arith.constant 16 : index
    %58 = vector.load %arg21[%c0_31, %c16] : memref<16x192xf32, #tpu.memory_space<vmem>>, vector<8x16xf32>
    %c0_32 = arith.constant 0 : index
    %c80 = arith.constant 80 : index
    %59 = vector.load %arg21[%c0_32, %c80] : memref<16x192xf32, #tpu.memory_space<vmem>>, vector<8x16xf32>
    %c0_33 = arith.constant 0 : index
    %c144 = arith.constant 144 : index
    %60 = vector.load %arg21[%c0_33, %c144] : memref<16x192xf32, #tpu.memory_space<vmem>>, vector<8x16xf32>
    %61 = arith.truncf %58 : vector<8x16xf32> to vector<8x16xbf16>
    %62 = arith.truncf %59 : vector<8x16xf32> to vector<8x16xbf16>
    %cst_34 = arith.constant dense<0.000000e+00> : vector<8x8xf32>
    %63 = tpu.matmul %61, %62, %cst_34 {dimension_numbers = #tpu.dot_dimension_numbers<[1], [1], [0], [0], [0, 0, 1, 0], [], []>} : vector<8x16xbf16>, vector<8x16xbf16>, vector<8x8xf32> -> vector<8x8xf32>
    %cst_35 = arith.constant 2.500000e-01 : f32
    %64 = vector.broadcast %cst_35 : f32 to vector<8x8xf32>
    %65 = arith.mulf %63, %64 : vector<8x8xf32>
    %66 = vector.broadcast %33 : vector<1x8xf32> to vector<8x8xf32>
    %67 = arith.addf %65, %66 : vector<8x8xf32>
    %cst_36 = arith.constant dense<0xFF800000> : vector<8xf32>
    %68 = vector.multi_reduction <maximumf>, %67, %cst_36 [1] : vector<8x8xf32> to vector<8xf32>
    %69 = vector.shape_cast %68 : vector<8xf32> to vector<8x1xf32>
    %70 = vector.broadcast %69 : vector<8x1xf32> to vector<8x8xf32>
    %71 = arith.subf %67, %70 : vector<8x8xf32>
    %72 = math.exp %71 : vector<8x8xf32>
    %cst_37 = arith.constant dense<0.000000e+00> : vector<8xf32>
    %73 = vector.multi_reduction <add>, %72, %cst_37 [1] : vector<8x8xf32> to vector<8xf32>
    %74 = vector.shape_cast %73 : vector<8xf32> to vector<8x1xf32>
    %75 = tpu.reciprocal %74 {approx = true} : vector<8x1xf32> -> vector<8x1xf32>
    %76 = vector.broadcast %75 : vector<8x1xf32> to vector<8x8xf32>
    %77 = arith.mulf %72, %76 : vector<8x8xf32>
    %78 = arith.truncf %77 : vector<8x8xf32> to vector<8x8xbf16>
    %79 = arith.truncf %60 : vector<8x16xf32> to vector<8x16xbf16>
    %cst_38 = arith.constant dense<0.000000e+00> : vector<8x16xf32>
    %80 = tpu.matmul %78, %79, %cst_38 {dimension_numbers = #tpu.dot_dimension_numbers<[1], [0], [0], [1], [0, 0, 1, 1], [], []>} : vector<8x8xbf16>, vector<8x16xbf16>, vector<8x16xf32> -> vector<8x16xf32>
    %c0_39 = arith.constant 0 : index
    %c16_40 = arith.constant 16 : index
    %81 = vector.load %arg22[%c0_39, %c16_40] : memref<16x64xf32, #tpu.memory_space<vmem>>, vector<8x16xf32>
    tpu.vector_store %arg22[%c0_39, %c16_40], %80 {strides = array<i32>} : memref<16x64xf32, #tpu.memory_space<vmem>>, vector<8x16xf32>,
    %c0_41 = arith.constant 0 : index
    %c32 = arith.constant 32 : index
    %82 = vector.load %arg21[%c0_41, %c32] : memref<16x192xf32, #tpu.memory_space<vmem>>, vector<8x16xf32>
    %c0_42 = arith.constant 0 : index
    %c96 = arith.constant 96 : index
    %83 = vector.load %arg21[%c0_42, %c96] : memref<16x192xf32, #tpu.memory_space<vmem>>, vector<8x16xf32>
    %c0_43 = arith.constant 0 : index
    %c160 = arith.constant 160 : index
    %84 = vector.load %arg21[%c0_43, %c160] : memref<16x192xf32, #tpu.memory_space<vmem>>, vector<8x16xf32>
    %85 = arith.truncf %82 : vector<8x16xf32> to vector<8x16xbf16>
    %86 = arith.truncf %83 : vector<8x16xf32> to vector<8x16xbf16>
    %cst_44 = arith.constant dense<0.000000e+00> : vector<8x8xf32>
    %87 = tpu.matmul %85, %86, %cst_44 {dimension_numbers = #tpu.dot_dimension_numbers<[1], [1], [0], [0], [0, 0, 1, 0], [], []>} : vector<8x16xbf16>, vector<8x16xbf16>, vector<8x8xf32> -> vector<8x8xf32>
    %cst_45 = arith.constant 2.500000e-01 : f32
    %88 = vector.broadcast %cst_45 : f32 to vector<8x8xf32>
    %89 = arith.mulf %87, %88 : vector<8x8xf32>
    %90 = vector.broadcast %33 : vector<1x8xf32> to vector<8x8xf32>
    %91 = arith.addf %89, %90 : vector<8x8xf32>
    %cst_46 = arith.constant dense<0xFF800000> : vector<8xf32>
    %92 = vector.multi_reduction <maximumf>, %91, %cst_46 [1] : vector<8x8xf32> to vector<8xf32>
    %93 = vector.shape_cast %92 : vector<8xf32> to vector<8x1xf32>
    %94 = vector.broadcast %93 : vector<8x1xf32> to vector<8x8xf32>
    %95 = arith.subf %91, %94 : vector<8x8xf32>
    %96 = math.exp %95 : vector<8x8xf32>
    %cst_47 = arith.constant dense<0.000000e+00> : vector<8xf32>
    %97 = vector.multi_reduction <add>, %96, %cst_47 [1] : vector<8x8xf32> to vector<8xf32>
    %98 = vector.shape_cast %97 : vector<8xf32> to vector<8x1xf32>
    %99 = tpu.reciprocal %98 {approx = true} : vector<8x1xf32> -> vector<8x1xf32>
    %100 = vector.broadcast %99 : vector<8x1xf32> to vector<8x8xf32>
    %101 = arith.mulf %96, %100 : vector<8x8xf32>
    %102 = arith.truncf %101 : vector<8x8xf32> to vector<8x8xbf16>
    %103 = arith.truncf %84 : vector<8x16xf32> to vector<8x16xbf16>
    %cst_48 = arith.constant dense<0.000000e+00> : vector<8x16xf32>
    %104 = tpu.matmul %102, %103, %cst_48 {dimension_numbers = #tpu.dot_dimension_numbers<[1], [0], [0], [1], [0, 0, 1, 1], [], []>} : vector<8x8xbf16>, vector<8x16xbf16>, vector<8x16xf32> -> vector<8x16xf32>
    %c0_49 = arith.constant 0 : index
    %c32_50 = arith.constant 32 : index
    %105 = vector.load %arg22[%c0_49, %c32_50] : memref<16x64xf32, #tpu.memory_space<vmem>>, vector<8x16xf32>
    tpu.vector_store %arg22[%c0_49, %c32_50], %104 {strides = array<i32>} : memref<16x64xf32, #tpu.memory_space<vmem>>, vector<8x16xf32>,
    %c0_51 = arith.constant 0 : index
    %c48 = arith.constant 48 : index
    %106 = vector.load %arg21[%c0_51, %c48] : memref<16x192xf32, #tpu.memory_space<vmem>>, vector<8x16xf32>
    %c0_52 = arith.constant 0 : index
    %c112 = arith.constant 112 : index
    %107 = vector.load %arg21[%c0_52, %c112] : memref<16x192xf32, #tpu.memory_space<vmem>>, vector<8x16xf32>
    %c0_53 = arith.constant 0 : index
    %c176 = arith.constant 176 : index
    %108 = vector.load %arg21[%c0_53, %c176] : memref<16x192xf32, #tpu.memory_space<vmem>>, vector<8x16xf32>
    %109 = arith.truncf %106 : vector<8x16xf32> to vector<8x16xbf16>
    %110 = arith.truncf %107 : vector<8x16xf32> to vector<8x16xbf16>
    %cst_54 = arith.constant dense<0.000000e+00> : vector<8x8xf32>
    %111 = tpu.matmul %109, %110, %cst_54 {dimension_numbers = #tpu.dot_dimension_numbers<[1], [1], [0], [0], [0, 0, 1, 0], [], []>} : vector<8x16xbf16>, vector<8x16xbf16>, vector<8x8xf32> -> vector<8x8xf32>
    %cst_55 = arith.constant 2.500000e-01 : f32
    %112 = vector.broadcast %cst_55 : f32 to vector<8x8xf32>
    %113 = arith.mulf %111, %112 : vector<8x8xf32>
    %114 = vector.broadcast %33 : vector<1x8xf32> to vector<8x8xf32>
    %115 = arith.addf %113, %114 : vector<8x8xf32>
    %cst_56 = arith.constant dense<0xFF800000> : vector<8xf32>
    %116 = vector.multi_reduction <maximumf>, %115, %cst_56 [1] : vector<8x8xf32> to vector<8xf32>
    %117 = vector.shape_cast %116 : vector<8xf32> to vector<8x1xf32>
    %118 = vector.broadcast %117 : vector<8x1xf32> to vector<8x8xf32>
    %119 = arith.subf %115, %118 : vector<8x8xf32>
    %120 = math.exp %119 : vector<8x8xf32>
    %cst_57 = arith.constant dense<0.000000e+00> : vector<8xf32>
    %121 = vector.multi_reduction <add>, %120, %cst_57 [1] : vector<8x8xf32> to vector<8xf32>
    %122 = vector.shape_cast %121 : vector<8xf32> to vector<8x1xf32>
    %123 = tpu.reciprocal %122 {approx = true} : vector<8x1xf32> -> vector<8x1xf32>
    %124 = vector.broadcast %123 : vector<8x1xf32> to vector<8x8xf32>
    %125 = arith.mulf %120, %124 : vector<8x8xf32>
    %126 = arith.truncf %125 : vector<8x8xf32> to vector<8x8xbf16>
    %127 = arith.truncf %108 : vector<8x16xf32> to vector<8x16xbf16>
    %cst_58 = arith.constant dense<0.000000e+00> : vector<8x16xf32>
    %128 = tpu.matmul %126, %127, %cst_58 {dimension_numbers = #tpu.dot_dimension_numbers<[1], [0], [0], [1], [0, 0, 1, 1], [], []>} : vector<8x8xbf16>, vector<8x16xbf16>, vector<8x16xf32> -> vector<8x16xf32>
    %c0_59 = arith.constant 0 : index
    %c48_60 = arith.constant 48 : index
    %129 = vector.load %arg22[%c0_59, %c48_60] : memref<16x64xf32, #tpu.memory_space<vmem>>, vector<8x16xf32>
    tpu.vector_store %arg22[%c0_59, %c48_60], %128 {strides = array<i32>} : memref<16x64xf32, #tpu.memory_space<vmem>>, vector<8x16xf32>,
    %130 = vector.extract_strided_slice %23 {offsets = [1, 0], sizes = [1, 8], strides = [1, 1]} : vector<2x8xf32> to vector<1x8xf32>
    %c8 = arith.constant 8 : index
    %c0_61 = arith.constant 0 : index
    %131 = vector.load %arg21[%c8, %c0_61] : memref<16x192xf32, #tpu.memory_space<vmem>>, vector<8x16xf32>
    %c8_62 = arith.constant 8 : index
    %c64_63 = arith.constant 64 : index
    %132 = vector.load %arg21[%c8_62, %c64_63] : memref<16x192xf32, #tpu.memory_space<vmem>>, vector<8x16xf32>
    %c8_64 = arith.constant 8 : index
    %c128_65 = arith.constant 128 : index
    %133 = vector.load %arg21[%c8_64, %c128_65] : memref<16x192xf32, #tpu.memory_space<vmem>>, vector<8x16xf32>
    %134 = arith.truncf %131 : vector<8x16xf32> to vector<8x16xbf16>
    %135 = arith.truncf %132 : vector<8x16xf32> to vector<8x16xbf16>
    %cst_66 = arith.constant dense<0.000000e+00> : vector<8x8xf32>
    %136 = tpu.matmul %134, %135, %cst_66 {dimension_numbers = #tpu.dot_dimension_numbers<[1], [1], [0], [0], [0, 0, 1, 0], [], []>} : vector<8x16xbf16>, vector<8x16xbf16>, vector<8x8xf32> -> vector<8x8xf32>
    %cst_67 = arith.constant 2.500000e-01 : f32
    %137 = vector.broadcast %cst_67 : f32 to vector<8x8xf32>
    %138 = arith.mulf %136, %137 : vector<8x8xf32>
    %139 = vector.broadcast %130 : vector<1x8xf32> to vector<8x8xf32>
    %140 = arith.addf %138, %139 : vector<8x8xf32>
    %cst_68 = arith.constant dense<0xFF800000> : vector<8xf32>
    %141 = vector.multi_reduction <maximumf>, %140, %cst_68 [1] : vector<8x8xf32> to vector<8xf32>
    %142 = vector.shape_cast %141 : vector<8xf32> to vector<8x1xf32>
    %143 = vector.broadcast %142 : vector<8x1xf32> to vector<8x8xf32>
    %144 = arith.subf %140, %143 : vector<8x8xf32>
    %145 = math.exp %144 : vector<8x8xf32>
    %cst_69 = arith.constant dense<0.000000e+00> : vector<8xf32>
    %146 = vector.multi_reduction <add>, %145, %cst_69 [1] : vector<8x8xf32> to vector<8xf32>
    %147 = vector.shape_cast %146 : vector<8xf32> to vector<8x1xf32>
    %148 = tpu.reciprocal %147 {approx = true} : vector<8x1xf32> -> vector<8x1xf32>
    %149 = vector.broadcast %148 : vector<8x1xf32> to vector<8x8xf32>
    %150 = arith.mulf %145, %149 : vector<8x8xf32>
    %151 = arith.truncf %150 : vector<8x8xf32> to vector<8x8xbf16>
    %152 = arith.truncf %133 : vector<8x16xf32> to vector<8x16xbf16>
    %cst_70 = arith.constant dense<0.000000e+00> : vector<8x16xf32>
    %153 = tpu.matmul %151, %152, %cst_70 {dimension_numbers = #tpu.dot_dimension_numbers<[1], [0], [0], [1], [0, 0, 1, 1], [], []>} : vector<8x8xbf16>, vector<8x16xbf16>, vector<8x16xf32> -> vector<8x16xf32>
    %c8_71 = arith.constant 8 : index
    %c0_72 = arith.constant 0 : index
    %154 = vector.load %arg22[%c8_71, %c0_72] : memref<16x64xf32, #tpu.memory_space<vmem>>, vector<8x16xf32>
    tpu.vector_store %arg22[%c8_71, %c0_72], %153 {strides = array<i32>} : memref<16x64xf32, #tpu.memory_space<vmem>>, vector<8x16xf32>,
    %c8_73 = arith.constant 8 : index
    %c16_74 = arith.constant 16 : index
    %155 = vector.load %arg21[%c8_73, %c16_74] : memref<16x192xf32, #tpu.memory_space<vmem>>, vector<8x16xf32>
    %c8_75 = arith.constant 8 : index
    %c80_76 = arith.constant 80 : index
    %156 = vector.load %arg21[%c8_75, %c80_76] : memref<16x192xf32, #tpu.memory_space<vmem>>, vector<8x16xf32>
    %c8_77 = arith.constant 8 : index
    %c144_78 = arith.constant 144 : index
    %157 = vector.load %arg21[%c8_77, %c144_78] : memref<16x192xf32, #tpu.memory_space<vmem>>, vector<8x16xf32>
    %158 = arith.truncf %155 : vector<8x16xf32> to vector<8x16xbf16>
    %159 = arith.truncf %156 : vector<8x16xf32> to vector<8x16xbf16>
    %cst_79 = arith.constant dense<0.000000e+00> : vector<8x8xf32>
    %160 = tpu.matmul %158, %159, %cst_79 {dimension_numbers = #tpu.dot_dimension_numbers<[1], [1], [0], [0], [0, 0, 1, 0], [], []>} : vector<8x16xbf16>, vector<8x16xbf16>, vector<8x8xf32> -> vector<8x8xf32>
    %cst_80 = arith.constant 2.500000e-01 : f32
    %161 = vector.broadcast %cst_80 : f32 to vector<8x8xf32>
    %162 = arith.mulf %160, %161 : vector<8x8xf32>
    %163 = vector.broadcast %130 : vector<1x8xf32> to vector<8x8xf32>
    %164 = arith.addf %162, %163 : vector<8x8xf32>
    %cst_81 = arith.constant dense<0xFF800000> : vector<8xf32>
    %165 = vector.multi_reduction <maximumf>, %164, %cst_81 [1] : vector<8x8xf32> to vector<8xf32>
    %166 = vector.shape_cast %165 : vector<8xf32> to vector<8x1xf32>
    %167 = vector.broadcast %166 : vector<8x1xf32> to vector<8x8xf32>
    %168 = arith.subf %164, %167 : vector<8x8xf32>
    %169 = math.exp %168 : vector<8x8xf32>
    %cst_82 = arith.constant dense<0.000000e+00> : vector<8xf32>
    %170 = vector.multi_reduction <add>, %169, %cst_82 [1] : vector<8x8xf32> to vector<8xf32>
    %171 = vector.shape_cast %170 : vector<8xf32> to vector<8x1xf32>
    %172 = tpu.reciprocal %171 {approx = true} : vector<8x1xf32> -> vector<8x1xf32>
    %173 = vector.broadcast %172 : vector<8x1xf32> to vector<8x8xf32>
    %174 = arith.mulf %169, %173 : vector<8x8xf32>
    %175 = arith.truncf %174 : vector<8x8xf32> to vector<8x8xbf16>
    %176 = arith.truncf %157 : vector<8x16xf32> to vector<8x16xbf16>
    %cst_83 = arith.constant dense<0.000000e+00> : vector<8x16xf32>
    %177 = tpu.matmul %175, %176, %cst_83 {dimension_numbers = #tpu.dot_dimension_numbers<[1], [0], [0], [1], [0, 0, 1, 1], [], []>} : vector<8x8xbf16>, vector<8x16xbf16>, vector<8x16xf32> -> vector<8x16xf32>
    %c8_84 = arith.constant 8 : index
    %c16_85 = arith.constant 16 : index
    %178 = vector.load %arg22[%c8_84, %c16_85] : memref<16x64xf32, #tpu.memory_space<vmem>>, vector<8x16xf32>
    tpu.vector_store %arg22[%c8_84, %c16_85], %177 {strides = array<i32>} : memref<16x64xf32, #tpu.memory_space<vmem>>, vector<8x16xf32>,
    %c8_86 = arith.constant 8 : index
    %c32_87 = arith.constant 32 : index
    %179 = vector.load %arg21[%c8_86, %c32_87] : memref<16x192xf32, #tpu.memory_space<vmem>>, vector<8x16xf32>
    %c8_88 = arith.constant 8 : index
    %c96_89 = arith.constant 96 : index
    %180 = vector.load %arg21[%c8_88, %c96_89] : memref<16x192xf32, #tpu.memory_space<vmem>>, vector<8x16xf32>
    %c8_90 = arith.constant 8 : index
    %c160_91 = arith.constant 160 : index
    %181 = vector.load %arg21[%c8_90, %c160_91] : memref<16x192xf32, #tpu.memory_space<vmem>>, vector<8x16xf32>
    %182 = arith.truncf %179 : vector<8x16xf32> to vector<8x16xbf16>
    %183 = arith.truncf %180 : vector<8x16xf32> to vector<8x16xbf16>
    %cst_92 = arith.constant dense<0.000000e+00> : vector<8x8xf32>
    %184 = tpu.matmul %182, %183, %cst_92 {dimension_numbers = #tpu.dot_dimension_numbers<[1], [1], [0], [0], [0, 0, 1, 0], [], []>} : vector<8x16xbf16>, vector<8x16xbf16>, vector<8x8xf32> -> vector<8x8xf32>
    %cst_93 = arith.constant 2.500000e-01 : f32
    %185 = vector.broadcast %cst_93 : f32 to vector<8x8xf32>
    %186 = arith.mulf %184, %185 : vector<8x8xf32>
    %187 = vector.broadcast %130 : vector<1x8xf32> to vector<8x8xf32>
    %188 = arith.addf %186, %187 : vector<8x8xf32>
    %cst_94 = arith.constant dense<0xFF800000> : vector<8xf32>
    %189 = vector.multi_reduction <maximumf>, %188, %cst_94 [1] : vector<8x8xf32> to vector<8xf32>
    %190 = vector.shape_cast %189 : vector<8xf32> to vector<8x1xf32>
    %191 = vector.broadcast %190 : vector<8x1xf32> to vector<8x8xf32>
    %192 = arith.subf %188, %191 : vector<8x8xf32>
    %193 = math.exp %192 : vector<8x8xf32>
    %cst_95 = arith.constant dense<0.000000e+00> : vector<8xf32>
    %194 = vector.multi_reduction <add>, %193, %cst_95 [1] : vector<8x8xf32> to vector<8xf32>
    %195 = vector.shape_cast %194 : vector<8xf32> to vector<8x1xf32>
    %196 = tpu.reciprocal %195 {approx = true} : vector<8x1xf32> -> vector<8x1xf32>
    %197 = vector.broadcast %196 : vector<8x1xf32> to vector<8x8xf32>
    %198 = arith.mulf %193, %197 : vector<8x8xf32>
    %199 = arith.truncf %198 : vector<8x8xf32> to vector<8x8xbf16>
    %200 = arith.truncf %181 : vector<8x16xf32> to vector<8x16xbf16>
    %cst_96 = arith.constant dense<0.000000e+00> : vector<8x16xf32>
    %201 = tpu.matmul %199, %200, %cst_96 {dimension_numbers = #tpu.dot_dimension_numbers<[1], [0], [0], [1], [0, 0, 1, 1], [], []>} : vector<8x8xbf16>, vector<8x16xbf16>, vector<8x16xf32> -> vector<8x16xf32>
    %c8_97 = arith.constant 8 : index
    %c32_98 = arith.constant 32 : index
    %202 = vector.load %arg22[%c8_97, %c32_98] : memref<16x64xf32, #tpu.memory_space<vmem>>, vector<8x16xf32>
    tpu.vector_store %arg22[%c8_97, %c32_98], %201 {strides = array<i32>} : memref<16x64xf32, #tpu.memory_space<vmem>>, vector<8x16xf32>,
    %c8_99 = arith.constant 8 : index
    %c48_100 = arith.constant 48 : index
    %203 = vector.load %arg21[%c8_99, %c48_100] : memref<16x192xf32, #tpu.memory_space<vmem>>, vector<8x16xf32>
    %c8_101 = arith.constant 8 : index
    %c112_102 = arith.constant 112 : index
    %204 = vector.load %arg21[%c8_101, %c112_102] : memref<16x192xf32, #tpu.memory_space<vmem>>, vector<8x16xf32>
    %c8_103 = arith.constant 8 : index
    %c176_104 = arith.constant 176 : index
    %205 = vector.load %arg21[%c8_103, %c176_104] : memref<16x192xf32, #tpu.memory_space<vmem>>, vector<8x16xf32>
    %206 = arith.truncf %203 : vector<8x16xf32> to vector<8x16xbf16>
    %207 = arith.truncf %204 : vector<8x16xf32> to vector<8x16xbf16>
    %cst_105 = arith.constant dense<0.000000e+00> : vector<8x8xf32>
    %208 = tpu.matmul %206, %207, %cst_105 {dimension_numbers = #tpu.dot_dimension_numbers<[1], [1], [0], [0], [0, 0, 1, 0], [], []>} : vector<8x16xbf16>, vector<8x16xbf16>, vector<8x8xf32> -> vector<8x8xf32>
    %cst_106 = arith.constant 2.500000e-01 : f32
    %209 = vector.broadcast %cst_106 : f32 to vector<8x8xf32>
    %210 = arith.mulf %208, %209 : vector<8x8xf32>
    %211 = vector.broadcast %130 : vector<1x8xf32> to vector<8x8xf32>
    %212 = arith.addf %210, %211 : vector<8x8xf32>
    %cst_107 = arith.constant dense<0xFF800000> : vector<8xf32>
    %213 = vector.multi_reduction <maximumf>, %212, %cst_107 [1] : vector<8x8xf32> to vector<8xf32>
    %214 = vector.shape_cast %213 : vector<8xf32> to vector<8x1xf32>
    %215 = vector.broadcast %214 : vector<8x1xf32> to vector<8x8xf32>
    %216 = arith.subf %212, %215 : vector<8x8xf32>
    %217 = math.exp %216 : vector<8x8xf32>
    %cst_108 = arith.constant dense<0.000000e+00> : vector<8xf32>
    %218 = vector.multi_reduction <add>, %217, %cst_108 [1] : vector<8x8xf32> to vector<8xf32>
    %219 = vector.shape_cast %218 : vector<8xf32> to vector<8x1xf32>
    %220 = tpu.reciprocal %219 {approx = true} : vector<8x1xf32> -> vector<8x1xf32>
    %221 = vector.broadcast %220 : vector<8x1xf32> to vector<8x8xf32>
    %222 = arith.mulf %217, %221 : vector<8x8xf32>
    %223 = arith.truncf %222 : vector<8x8xf32> to vector<8x8xbf16>
    %224 = arith.truncf %205 : vector<8x16xf32> to vector<8x16xbf16>
    %cst_109 = arith.constant dense<0.000000e+00> : vector<8x16xf32>
    %225 = tpu.matmul %223, %224, %cst_109 {dimension_numbers = #tpu.dot_dimension_numbers<[1], [0], [0], [1], [0, 0, 1, 1], [], []>} : vector<8x8xbf16>, vector<8x16xbf16>, vector<8x16xf32> -> vector<8x16xf32>
    %c8_110 = arith.constant 8 : index
    %c48_111 = arith.constant 48 : index
    %226 = vector.load %arg22[%c8_110, %c48_111] : memref<16x64xf32, #tpu.memory_space<vmem>>, vector<8x16xf32>
    tpu.vector_store %arg22[%c8_110, %c48_111], %225 {strides = array<i32>} : memref<16x64xf32, #tpu.memory_space<vmem>>, vector<8x16xf32>,
    %c0_112 = arith.constant 0 : index
    %c0_113 = arith.constant 0 : index
    %227 = vector.load %arg22[%c0_112, %c0_113] : memref<16x64xf32, #tpu.memory_space<vmem>>, vector<16x64xf32>
    %c0_114 = arith.constant 0 : index
    %c0_115 = arith.constant 0 : index
    %c0_116 = arith.constant 0 : index
    %228 = vector.load %arg6[%c0_114, %c0_115, %c0_116] : memref<2x64x64xbf16, #tpu.memory_space<vmem>>, vector<1x64x64xbf16>
    %229 = vector.shape_cast %228 : vector<1x64x64xbf16> to vector<64x64xbf16>
    %230 = arith.truncf %227 : vector<16x64xf32> to vector<16x64xbf16>
    %cst_117 = arith.constant dense<0.000000e+00> : vector<16x64xf32>
    %231 = tpu.matmul %230, %229, %cst_117 {dimension_numbers = #tpu.dot_dimension_numbers<[1], [0], [0], [1], [0, 0, 1, 1], [], []>} : vector<16x64xbf16>, vector<64x64xbf16>, vector<16x64xf32> -> vector<16x64xf32>
    %c0_118 = arith.constant 0 : index
    %c0_119 = arith.constant 0 : index
    %c0_120 = arith.constant 0 : index
    %232 = vector.load %arg7[%c0_118, %c0_119, %c0_120] : memref<2x1x64xf32, #tpu.memory_space<vmem>>, vector<1x1x64xf32>
    %233 = vector.shape_cast %232 : vector<1x1x64xf32> to vector<1x64xf32>
    %234 = vector.broadcast %233 : vector<1x64xf32> to vector<16x64xf32>
    %235 = arith.addf %231, %234 : vector<16x64xf32>
    %236 = arith.addf %22, %235 : vector<16x64xf32>
    %c0_121 = arith.constant 0 : index
    %c0_122 = arith.constant 0 : index
    %c0_123 = arith.constant 0 : index
    %237 = vector.load %arg8[%c0_121, %c0_122, %c0_123] : memref<2x1x64xf32, #tpu.memory_space<vmem>>, vector<1x1x64xf32>
    %238 = vector.shape_cast %237 : vector<1x1x64xf32> to vector<1x64xf32>
    %c0_124 = arith.constant 0 : index
    %c0_125 = arith.constant 0 : index
    %c0_126 = arith.constant 0 : index
    %239 = vector.load %arg9[%c0_124, %c0_125, %c0_126] : memref<2x1x64xf32, #tpu.memory_space<vmem>>, vector<1x1x64xf32>
    %240 = vector.shape_cast %239 : vector<1x1x64xf32> to vector<1x64xf32>
    %cst_127 = arith.constant dense<0.000000e+00> : vector<16xf32>
    %241 = vector.multi_reduction <add>, %236, %cst_127 [1] : vector<16x64xf32> to vector<16xf32>
    %242 = vector.shape_cast %241 : vector<16xf32> to vector<16x1xf32>
    %cst_128 = arith.constant 6.400000e+01 : f32
    %243 = vector.broadcast %cst_128 : f32 to vector<16x1xf32>
    %244 = arith.divf %242, %243 : vector<16x1xf32>
    %245 = vector.broadcast %244 : vector<16x1xf32> to vector<16x64xf32>
    %246 = arith.subf %236, %245 : vector<16x64xf32>
    %247 = arith.mulf %246, %246 : vector<16x64xf32>
    %cst_129 = arith.constant dense<0.000000e+00> : vector<16xf32>
    %248 = vector.multi_reduction <add>, %247, %cst_129 [1] : vector<16x64xf32> to vector<16xf32>
    %249 = vector.shape_cast %248 : vector<16xf32> to vector<16x1xf32>
    %cst_130 = arith.constant 6.400000e+01 : f32
    %250 = vector.broadcast %cst_130 : f32 to vector<16x1xf32>
    %251 = arith.divf %249, %250 : vector<16x1xf32>
    %cst_131 = arith.constant 9.99999974E-6 : f32
    %252 = vector.broadcast %cst_131 : f32 to vector<16x1xf32>
    %253 = arith.addf %251, %252 : vector<16x1xf32>
    %254 = math.rsqrt %253 : vector<16x1xf32>
    %255 = vector.broadcast %254 : vector<16x1xf32> to vector<16x64xf32>
    %256 = arith.mulf %246, %255 : vector<16x64xf32>
    %257 = vector.broadcast %238 : vector<1x64xf32> to vector<16x64xf32>
    %258 = arith.mulf %256, %257 : vector<16x64xf32>
    %259 = vector.broadcast %240 : vector<1x64xf32> to vector<16x64xf32>
    %260 = arith.addf %258, %259 : vector<16x64xf32>
    %c0_132 = arith.constant 0 : index
    %c0_133 = arith.constant 0 : index
    %c0_134 = arith.constant 0 : index
    %261 = vector.load %arg10[%c0_132, %c0_133, %c0_134] : memref<2x64x128xbf16, #tpu.memory_space<vmem>>, vector<1x64x128xbf16>
    %262 = vector.shape_cast %261 : vector<1x64x128xbf16> to vector<64x128xbf16>
    %263 = arith.truncf %260 : vector<16x64xf32> to vector<16x64xbf16>
    %cst_135 = arith.constant dense<0.000000e+00> : vector<16x128xf32>
    %264 = tpu.matmul %263, %262, %cst_135 {dimension_numbers = #tpu.dot_dimension_numbers<[1], [0], [0], [1], [0, 0, 1, 1], [], []>} : vector<16x64xbf16>, vector<64x128xbf16>, vector<16x128xf32> -> vector<16x128xf32>
    %c0_136 = arith.constant 0 : index
    %c0_137 = arith.constant 0 : index
    %c0_138 = arith.constant 0 : index
    %265 = vector.load %arg11[%c0_136, %c0_137, %c0_138] : memref<2x1x128xf32, #tpu.memory_space<vmem>>, vector<1x1x128xf32>
    %266 = vector.shape_cast %265 : vector<1x1x128xf32> to vector<1x128xf32>
    %267 = vector.broadcast %266 : vector<1x128xf32> to vector<16x128xf32>
    %268 = arith.addf %264, %267 : vector<16x128xf32>
    %cst_139 = arith.constant 5.000000e-01 : f32
    %269 = vector.broadcast %cst_139 : f32 to vector<16x128xf32>
    %270 = arith.mulf %269, %268 : vector<16x128xf32>
    %cst_140 = arith.constant 4.471500e-02 : f32
    %271 = vector.broadcast %cst_140 : f32 to vector<16x128xf32>
    %272 = arith.mulf %271, %268 : vector<16x128xf32>
    %273 = arith.mulf %272, %268 : vector<16x128xf32>
    %274 = arith.mulf %273, %268 : vector<16x128xf32>
    %275 = arith.addf %268, %274 : vector<16x128xf32>
    %cst_141 = arith.constant 0.797884583 : f32
    %276 = vector.broadcast %cst_141 : f32 to vector<16x128xf32>
    %277 = arith.mulf %276, %275 : vector<16x128xf32>
    %278 = math.tanh %277 : vector<16x128xf32>
    %cst_142 = arith.constant 1.000000e+00 : f32
    %279 = vector.broadcast %cst_142 : f32 to vector<16x128xf32>
    %280 = arith.addf %279, %278 : vector<16x128xf32>
    %281 = arith.mulf %270, %280 : vector<16x128xf32>
    %c0_143 = arith.constant 0 : index
    %c0_144 = arith.constant 0 : index
    %c0_145 = arith.constant 0 : index
    %282 = vector.load %arg12[%c0_143, %c0_144, %c0_145] : memref<2x128x64xbf16, #tpu.memory_space<vmem>>, vector<1x128x64xbf16>
    %283 = vector.shape_cast %282 : vector<1x128x64xbf16> to vector<128x64xbf16>
    %284 = arith.truncf %281 : vector<16x128xf32> to vector<16x128xbf16>
    %cst_146 = arith.constant dense<0.000000e+00> : vector<16x64xf32>
    %285 = tpu.matmul %284, %283, %cst_146 {dimension_numbers = #tpu.dot_dimension_numbers<[1], [0], [0], [1], [0, 0, 1, 1], [], []>} : vector<16x128xbf16>, vector<128x64xbf16>, vector<16x64xf32> -> vector<16x64xf32>
    %286 = arith.addf %260, %285 : vector<16x64xf32>
    %c0_147 = arith.constant 0 : index
    %c0_148 = arith.constant 0 : index
    %c0_149 = arith.constant 0 : index
    %287 = vector.load %arg13[%c0_147, %c0_148, %c0_149] : memref<2x1x64xf32, #tpu.memory_space<vmem>>, vector<1x1x64xf32>
    %288 = vector.shape_cast %287 : vector<1x1x64xf32> to vector<1x64xf32>
    %289 = vector.broadcast %288 : vector<1x64xf32> to vector<16x64xf32>
    %290 = arith.addf %286, %289 : vector<16x64xf32>
    %c0_150 = arith.constant 0 : index
    %c0_151 = arith.constant 0 : index
    %c0_152 = arith.constant 0 : index
    %291 = vector.load %arg14[%c0_150, %c0_151, %c0_152] : memref<2x1x64xf32, #tpu.memory_space<vmem>>, vector<1x1x64xf32>
    %292 = vector.shape_cast %291 : vector<1x1x64xf32> to vector<1x64xf32>
    %c0_153 = arith.constant 0 : index
    %c0_154 = arith.constant 0 : index
    %c0_155 = arith.constant 0 : index
    %293 = vector.load %arg15[%c0_153, %c0_154, %c0_155] : memref<2x1x64xf32, #tpu.memory_space<vmem>>, vector<1x1x64xf32>
    %294 = vector.shape_cast %293 : vector<1x1x64xf32> to vector<1x64xf32>
    %cst_156 = arith.constant dense<0.000000e+00> : vector<16xf32>
    %295 = vector.multi_reduction <add>, %290, %cst_156 [1] : vector<16x64xf32> to vector<16xf32>
    %296 = vector.shape_cast %295 : vector<16xf32> to vector<16x1xf32>
    %cst_157 = arith.constant 6.400000e+01 : f32
    %297 = vector.broadcast %cst_157 : f32 to vector<16x1xf32>
    %298 = arith.divf %296, %297 : vector<16x1xf32>
    %299 = vector.broadcast %298 : vector<16x1xf32> to vector<16x64xf32>
    %300 = arith.subf %290, %299 : vector<16x64xf32>
    %301 = arith.mulf %300, %300 : vector<16x64xf32>
    %cst_158 = arith.constant dense<0.000000e+00> : vector<16xf32>
    %302 = vector.multi_reduction <add>, %301, %cst_158 [1] : vector<16x64xf32> to vector<16xf32>
    %303 = vector.shape_cast %302 : vector<16xf32> to vector<16x1xf32>
    %cst_159 = arith.constant 6.400000e+01 : f32
    %304 = vector.broadcast %cst_159 : f32 to vector<16x1xf32>
    %305 = arith.divf %303, %304 : vector<16x1xf32>
    %cst_160 = arith.constant 9.99999974E-6 : f32
    %306 = vector.broadcast %cst_160 : f32 to vector<16x1xf32>
    %307 = arith.addf %305, %306 : vector<16x1xf32>
    %308 = math.rsqrt %307 : vector<16x1xf32>
    %309 = vector.broadcast %308 : vector<16x1xf32> to vector<16x64xf32>
    %310 = arith.mulf %300, %309 : vector<16x64xf32>
    %311 = vector.broadcast %292 : vector<1x64xf32> to vector<16x64xf32>
    %312 = arith.mulf %310, %311 : vector<16x64xf32>
    %313 = vector.broadcast %294 : vector<1x64xf32> to vector<16x64xf32>
    %314 = arith.addf %312, %313 : vector<16x64xf32>
    %c1 = arith.constant 1 : index
    %c0_161 = arith.constant 0 : index
    %c0_162 = arith.constant 0 : index
    %315 = vector.load %arg4[%c1, %c0_161, %c0_162] : memref<2x64x192xbf16, #tpu.memory_space<vmem>>, vector<1x64x192xbf16>
    %316 = vector.shape_cast %315 : vector<1x64x192xbf16> to vector<64x192xbf16>
    %317 = arith.truncf %314 : vector<16x64xf32> to vector<16x64xbf16>
    %cst_163 = arith.constant dense<0.000000e+00> : vector<16x192xf32>
    %318 = tpu.matmul %317, %316, %cst_163 {dimension_numbers = #tpu.dot_dimension_numbers<[1], [0], [0], [1], [0, 0, 1, 1], [], []>} : vector<16x64xbf16>, vector<64x192xbf16>, vector<16x192xf32> -> vector<16x192xf32>
    %c1_164 = arith.constant 1 : index
    %c0_165 = arith.constant 0 : index
    %c0_166 = arith.constant 0 : index
    %319 = vector.load %arg5[%c1_164, %c0_165, %c0_166] : memref<2x1x192xf32, #tpu.memory_space<vmem>>, vector<1x1x192xf32>
    %320 = vector.shape_cast %319 : vector<1x1x192xf32> to vector<1x192xf32>
    %321 = vector.broadcast %320 : vector<1x192xf32> to vector<16x192xf32>
    %322 = arith.addf %318, %321 : vector<16x192xf32>
    %c0_167 = arith.constant 0 : index
    %c0_168 = arith.constant 0 : index
    %323 = vector.load %arg21[%c0_167, %c0_168] : memref<16x192xf32, #tpu.memory_space<vmem>>, vector<16x192xf32>
    tpu.vector_store %arg21[%c0_167, %c0_168], %322 {strides = array<i32>} : memref<16x192xf32, #tpu.memory_space<vmem>>, vector<16x192xf32>,
    %324 = vector.extract_strided_slice %23 {offsets = [0, 0], sizes = [1, 8], strides = [1, 1]} : vector<2x8xf32> to vector<1x8xf32>
    %c0_169 = arith.constant 0 : index
    %c0_170 = arith.constant 0 : index
    %325 = vector.load %arg21[%c0_169, %c0_170] : memref<16x192xf32, #tpu.memory_space<vmem>>, vector<8x16xf32>
    %c0_171 = arith.constant 0 : index
    %c64_172 = arith.constant 64 : index
    %326 = vector.load %arg21[%c0_171, %c64_172] : memref<16x192xf32, #tpu.memory_space<vmem>>, vector<8x16xf32>
    %c0_173 = arith.constant 0 : index
    %c128_174 = arith.constant 128 : index
    %327 = vector.load %arg21[%c0_173, %c128_174] : memref<16x192xf32, #tpu.memory_space<vmem>>, vector<8x16xf32>
    %328 = arith.truncf %325 : vector<8x16xf32> to vector<8x16xbf16>
    %329 = arith.truncf %326 : vector<8x16xf32> to vector<8x16xbf16>
    %cst_175 = arith.constant dense<0.000000e+00> : vector<8x8xf32>
    %330 = tpu.matmul %328, %329, %cst_175 {dimension_numbers = #tpu.dot_dimension_numbers<[1], [1], [0], [0], [0, 0, 1, 0], [], []>} : vector<8x16xbf16>, vector<8x16xbf16>, vector<8x8xf32> -> vector<8x8xf32>
    %cst_176 = arith.constant 2.500000e-01 : f32
    %331 = vector.broadcast %cst_176 : f32 to vector<8x8xf32>
    %332 = arith.mulf %330, %331 : vector<8x8xf32>
    %333 = vector.broadcast %324 : vector<1x8xf32> to vector<8x8xf32>
    %334 = arith.addf %332, %333 : vector<8x8xf32>
    %cst_177 = arith.constant dense<0xFF800000> : vector<8xf32>
    %335 = vector.multi_reduction <maximumf>, %334, %cst_177 [1] : vector<8x8xf32> to vector<8xf32>
    %336 = vector.shape_cast %335 : vector<8xf32> to vector<8x1xf32>
    %337 = vector.broadcast %336 : vector<8x1xf32> to vector<8x8xf32>
    %338 = arith.subf %334, %337 : vector<8x8xf32>
    %339 = math.exp %338 : vector<8x8xf32>
    %cst_178 = arith.constant dense<0.000000e+00> : vector<8xf32>
    %340 = vector.multi_reduction <add>, %339, %cst_178 [1] : vector<8x8xf32> to vector<8xf32>
    %341 = vector.shape_cast %340 : vector<8xf32> to vector<8x1xf32>
    %342 = tpu.reciprocal %341 {approx = true} : vector<8x1xf32> -> vector<8x1xf32>
    %343 = vector.broadcast %342 : vector<8x1xf32> to vector<8x8xf32>
    %344 = arith.mulf %339, %343 : vector<8x8xf32>
    %345 = arith.truncf %344 : vector<8x8xf32> to vector<8x8xbf16>
    %346 = arith.truncf %327 : vector<8x16xf32> to vector<8x16xbf16>
    %cst_179 = arith.constant dense<0.000000e+00> : vector<8x16xf32>
    %347 = tpu.matmul %345, %346, %cst_179 {dimension_numbers = #tpu.dot_dimension_numbers<[1], [0], [0], [1], [0, 0, 1, 1], [], []>} : vector<8x8xbf16>, vector<8x16xbf16>, vector<8x16xf32> -> vector<8x16xf32>
    %c0_180 = arith.constant 0 : index
    %c0_181 = arith.constant 0 : index
    %348 = vector.load %arg22[%c0_180, %c0_181] : memref<16x64xf32, #tpu.memory_space<vmem>>, vector<8x16xf32>
    tpu.vector_store %arg22[%c0_180, %c0_181], %347 {strides = array<i32>} : memref<16x64xf32, #tpu.memory_space<vmem>>, vector<8x16xf32>,
    %c0_182 = arith.constant 0 : index
    %c16_183 = arith.constant 16 : index
    %349 = vector.load %arg21[%c0_182, %c16_183] : memref<16x192xf32, #tpu.memory_space<vmem>>, vector<8x16xf32>
    %c0_184 = arith.constant 0 : index
    %c80_185 = arith.constant 80 : index
    %350 = vector.load %arg21[%c0_184, %c80_185] : memref<16x192xf32, #tpu.memory_space<vmem>>, vector<8x16xf32>
    %c0_186 = arith.constant 0 : index
    %c144_187 = arith.constant 144 : index
    %351 = vector.load %arg21[%c0_186, %c144_187] : memref<16x192xf32, #tpu.memory_space<vmem>>, vector<8x16xf32>
    %352 = arith.truncf %349 : vector<8x16xf32> to vector<8x16xbf16>
    %353 = arith.truncf %350 : vector<8x16xf32> to vector<8x16xbf16>
    %cst_188 = arith.constant dense<0.000000e+00> : vector<8x8xf32>
    %354 = tpu.matmul %352, %353, %cst_188 {dimension_numbers = #tpu.dot_dimension_numbers<[1], [1], [0], [0], [0, 0, 1, 0], [], []>} : vector<8x16xbf16>, vector<8x16xbf16>, vector<8x8xf32> -> vector<8x8xf32>
    %cst_189 = arith.constant 2.500000e-01 : f32
    %355 = vector.broadcast %cst_189 : f32 to vector<8x8xf32>
    %356 = arith.mulf %354, %355 : vector<8x8xf32>
    %357 = vector.broadcast %324 : vector<1x8xf32> to vector<8x8xf32>
    %358 = arith.addf %356, %357 : vector<8x8xf32>
    %cst_190 = arith.constant dense<0xFF800000> : vector<8xf32>
    %359 = vector.multi_reduction <maximumf>, %358, %cst_190 [1] : vector<8x8xf32> to vector<8xf32>
    %360 = vector.shape_cast %359 : vector<8xf32> to vector<8x1xf32>
    %361 = vector.broadcast %360 : vector<8x1xf32> to vector<8x8xf32>
    %362 = arith.subf %358, %361 : vector<8x8xf32>
    %363 = math.exp %362 : vector<8x8xf32>
    %cst_191 = arith.constant dense<0.000000e+00> : vector<8xf32>
    %364 = vector.multi_reduction <add>, %363, %cst_191 [1] : vector<8x8xf32> to vector<8xf32>
    %365 = vector.shape_cast %364 : vector<8xf32> to vector<8x1xf32>
    %366 = tpu.reciprocal %365 {approx = true} : vector<8x1xf32> -> vector<8x1xf32>
    %367 = vector.broadcast %366 : vector<8x1xf32> to vector<8x8xf32>
    %368 = arith.mulf %363, %367 : vector<8x8xf32>
    %369 = arith.truncf %368 : vector<8x8xf32> to vector<8x8xbf16>
    %370 = arith.truncf %351 : vector<8x16xf32> to vector<8x16xbf16>
    %cst_192 = arith.constant dense<0.000000e+00> : vector<8x16xf32>
    %371 = tpu.matmul %369, %370, %cst_192 {dimension_numbers = #tpu.dot_dimension_numbers<[1], [0], [0], [1], [0, 0, 1, 1], [], []>} : vector<8x8xbf16>, vector<8x16xbf16>, vector<8x16xf32> -> vector<8x16xf32>
    %c0_193 = arith.constant 0 : index
    %c16_194 = arith.constant 16 : index
    %372 = vector.load %arg22[%c0_193, %c16_194] : memref<16x64xf32, #tpu.memory_space<vmem>>, vector<8x16xf32>
    tpu.vector_store %arg22[%c0_193, %c16_194], %371 {strides = array<i32>} : memref<16x64xf32, #tpu.memory_space<vmem>>, vector<8x16xf32>,
    %c0_195 = arith.constant 0 : index
    %c32_196 = arith.constant 32 : index
    %373 = vector.load %arg21[%c0_195, %c32_196] : memref<16x192xf32, #tpu.memory_space<vmem>>, vector<8x16xf32>
    %c0_197 = arith.constant 0 : index
    %c96_198 = arith.constant 96 : index
    %374 = vector.load %arg21[%c0_197, %c96_198] : memref<16x192xf32, #tpu.memory_space<vmem>>, vector<8x16xf32>
    %c0_199 = arith.constant 0 : index
    %c160_200 = arith.constant 160 : index
    %375 = vector.load %arg21[%c0_199, %c160_200] : memref<16x192xf32, #tpu.memory_space<vmem>>, vector<8x16xf32>
    %376 = arith.truncf %373 : vector<8x16xf32> to vector<8x16xbf16>
    %377 = arith.truncf %374 : vector<8x16xf32> to vector<8x16xbf16>
    %cst_201 = arith.constant dense<0.000000e+00> : vector<8x8xf32>
    %378 = tpu.matmul %376, %377, %cst_201 {dimension_numbers = #tpu.dot_dimension_numbers<[1], [1], [0], [0], [0, 0, 1, 0], [], []>} : vector<8x16xbf16>, vector<8x16xbf16>, vector<8x8xf32> -> vector<8x8xf32>
    %cst_202 = arith.constant 2.500000e-01 : f32
    %379 = vector.broadcast %cst_202 : f32 to vector<8x8xf32>
    %380 = arith.mulf %378, %379 : vector<8x8xf32>
    %381 = vector.broadcast %324 : vector<1x8xf32> to vector<8x8xf32>
    %382 = arith.addf %380, %381 : vector<8x8xf32>
    %cst_203 = arith.constant dense<0xFF800000> : vector<8xf32>
    %383 = vector.multi_reduction <maximumf>, %382, %cst_203 [1] : vector<8x8xf32> to vector<8xf32>
    %384 = vector.shape_cast %383 : vector<8xf32> to vector<8x1xf32>
    %385 = vector.broadcast %384 : vector<8x1xf32> to vector<8x8xf32>
    %386 = arith.subf %382, %385 : vector<8x8xf32>
    %387 = math.exp %386 : vector<8x8xf32>
    %cst_204 = arith.constant dense<0.000000e+00> : vector<8xf32>
    %388 = vector.multi_reduction <add>, %387, %cst_204 [1] : vector<8x8xf32> to vector<8xf32>
    %389 = vector.shape_cast %388 : vector<8xf32> to vector<8x1xf32>
    %390 = tpu.reciprocal %389 {approx = true} : vector<8x1xf32> -> vector<8x1xf32>
    %391 = vector.broadcast %390 : vector<8x1xf32> to vector<8x8xf32>
    %392 = arith.mulf %387, %391 : vector<8x8xf32>
    %393 = arith.truncf %392 : vector<8x8xf32> to vector<8x8xbf16>
    %394 = arith.truncf %375 : vector<8x16xf32> to vector<8x16xbf16>
    %cst_205 = arith.constant dense<0.000000e+00> : vector<8x16xf32>
    %395 = tpu.matmul %393, %394, %cst_205 {dimension_numbers = #tpu.dot_dimension_numbers<[1], [0], [0], [1], [0, 0, 1, 1], [], []>} : vector<8x8xbf16>, vector<8x16xbf16>, vector<8x16xf32> -> vector<8x16xf32>
    %c0_206 = arith.constant 0 : index
    %c32_207 = arith.constant 32 : index
    %396 = vector.load %arg22[%c0_206, %c32_207] : memref<16x64xf32, #tpu.memory_space<vmem>>, vector<8x16xf32>
    tpu.vector_store %arg22[%c0_206, %c32_207], %395 {strides = array<i32>} : memref<16x64xf32, #tpu.memory_space<vmem>>, vector<8x16xf32>,
    %c0_208 = arith.constant 0 : index
    %c48_209 = arith.constant 48 : index
    %397 = vector.load %arg21[%c0_208, %c48_209] : memref<16x192xf32, #tpu.memory_space<vmem>>, vector<8x16xf32>
    %c0_210 = arith.constant 0 : index
    %c112_211 = arith.constant 112 : index
    %398 = vector.load %arg21[%c0_210, %c112_211] : memref<16x192xf32, #tpu.memory_space<vmem>>, vector<8x16xf32>
    %c0_212 = arith.constant 0 : index
    %c176_213 = arith.constant 176 : index
    %399 = vector.load %arg21[%c0_212, %c176_213] : memref<16x192xf32, #tpu.memory_space<vmem>>, vector<8x16xf32>
    %400 = arith.truncf %397 : vector<8x16xf32> to vector<8x16xbf16>
    %401 = arith.truncf %398 : vector<8x16xf32> to vector<8x16xbf16>
    %cst_214 = arith.constant dense<0.000000e+00> : vector<8x8xf32>
    %402 = tpu.matmul %400, %401, %cst_214 {dimension_numbers = #tpu.dot_dimension_numbers<[1], [1], [0], [0], [0, 0, 1, 0], [], []>} : vector<8x16xbf16>, vector<8x16xbf16>, vector<8x8xf32> -> vector<8x8xf32>
    %cst_215 = arith.constant 2.500000e-01 : f32
    %403 = vector.broadcast %cst_215 : f32 to vector<8x8xf32>
    %404 = arith.mulf %402, %403 : vector<8x8xf32>
    %405 = vector.broadcast %324 : vector<1x8xf32> to vector<8x8xf32>
    %406 = arith.addf %404, %405 : vector<8x8xf32>
    %cst_216 = arith.constant dense<0xFF800000> : vector<8xf32>
    %407 = vector.multi_reduction <maximumf>, %406, %cst_216 [1] : vector<8x8xf32> to vector<8xf32>
    %408 = vector.shape_cast %407 : vector<8xf32> to vector<8x1xf32>
    %409 = vector.broadcast %408 : vector<8x1xf32> to vector<8x8xf32>
    %410 = arith.subf %406, %409 : vector<8x8xf32>
    %411 = math.exp %410 : vector<8x8xf32>
    %cst_217 = arith.constant dense<0.000000e+00> : vector<8xf32>
    %412 = vector.multi_reduction <add>, %411, %cst_217 [1] : vector<8x8xf32> to vector<8xf32>
    %413 = vector.shape_cast %412 : vector<8xf32> to vector<8x1xf32>
    %414 = tpu.reciprocal %413 {approx = true} : vector<8x1xf32> -> vector<8x1xf32>
    %415 = vector.broadcast %414 : vector<8x1xf32> to vector<8x8xf32>
    %416 = arith.mulf %411, %415 : vector<8x8xf32>
    %417 = arith.truncf %416 : vector<8x8xf32> to vector<8x8xbf16>
    %418 = arith.truncf %399 : vector<8x16xf32> to vector<8x16xbf16>
    %cst_218 = arith.constant dense<0.000000e+00> : vector<8x16xf32>
    %419 = tpu.matmul %417, %418, %cst_218 {dimension_numbers = #tpu.dot_dimension_numbers<[1], [0], [0], [1], [0, 0, 1, 1], [], []>} : vector<8x8xbf16>, vector<8x16xbf16>, vector<8x16xf32> -> vector<8x16xf32>
    %c0_219 = arith.constant 0 : index
    %c48_220 = arith.constant 48 : index
    %420 = vector.load %arg22[%c0_219, %c48_220] : memref<16x64xf32, #tpu.memory_space<vmem>>, vector<8x16xf32>
    tpu.vector_store %arg22[%c0_219, %c48_220], %419 {strides = array<i32>} : memref<16x64xf32, #tpu.memory_space<vmem>>, vector<8x16xf32>,
    %421 = vector.extract_strided_slice %23 {offsets = [1, 0], sizes = [1, 8], strides = [1, 1]} : vector<2x8xf32> to vector<1x8xf32>
    %c8_221 = arith.constant 8 : index
    %c0_222 = arith.constant 0 : index
    %422 = vector.load %arg21[%c8_221, %c0_222] : memref<16x192xf32, #tpu.memory_space<vmem>>, vector<8x16xf32>
    %c8_223 = arith.constant 8 : index
    %c64_224 = arith.constant 64 : index
    %423 = vector.load %arg21[%c8_223, %c64_224] : memref<16x192xf32, #tpu.memory_space<vmem>>, vector<8x16xf32>
    %c8_225 = arith.constant 8 : index
    %c128_226 = arith.constant 128 : index
    %424 = vector.load %arg21[%c8_225, %c128_226] : memref<16x192xf32, #tpu.memory_space<vmem>>, vector<8x16xf32>
    %425 = arith.truncf %422 : vector<8x16xf32> to vector<8x16xbf16>
    %426 = arith.truncf %423 : vector<8x16xf32> to vector<8x16xbf16>
    %cst_227 = arith.constant dense<0.000000e+00> : vector<8x8xf32>
    %427 = tpu.matmul %425, %426, %cst_227 {dimension_numbers = #tpu.dot_dimension_numbers<[1], [1], [0], [0], [0, 0, 1, 0], [], []>} : vector<8x16xbf16>, vector<8x16xbf16>, vector<8x8xf32> -> vector<8x8xf32>
    %cst_228 = arith.constant 2.500000e-01 : f32
    %428 = vector.broadcast %cst_228 : f32 to vector<8x8xf32>
    %429 = arith.mulf %427, %428 : vector<8x8xf32>
    %430 = vector.broadcast %421 : vector<1x8xf32> to vector<8x8xf32>
    %431 = arith.addf %429, %430 : vector<8x8xf32>
    %cst_229 = arith.constant dense<0xFF800000> : vector<8xf32>
    %432 = vector.multi_reduction <maximumf>, %431, %cst_229 [1] : vector<8x8xf32> to vector<8xf32>
    %433 = vector.shape_cast %432 : vector<8xf32> to vector<8x1xf32>
    %434 = vector.broadcast %433 : vector<8x1xf32> to vector<8x8xf32>
    %435 = arith.subf %431, %434 : vector<8x8xf32>
    %436 = math.exp %435 : vector<8x8xf32>
    %cst_230 = arith.constant dense<0.000000e+00> : vector<8xf32>
    %437 = vector.multi_reduction <add>, %436, %cst_230 [1] : vector<8x8xf32> to vector<8xf32>
    %438 = vector.shape_cast %437 : vector<8xf32> to vector<8x1xf32>
    %439 = tpu.reciprocal %438 {approx = true} : vector<8x1xf32> -> vector<8x1xf32>
    %440 = vector.broadcast %439 : vector<8x1xf32> to vector<8x8xf32>
    %441 = arith.mulf %436, %440 : vector<8x8xf32>
    %442 = arith.truncf %441 : vector<8x8xf32> to vector<8x8xbf16>
    %443 = arith.truncf %424 : vector<8x16xf32> to vector<8x16xbf16>
    %cst_231 = arith.constant dense<0.000000e+00> : vector<8x16xf32>
    %444 = tpu.matmul %442, %443, %cst_231 {dimension_numbers = #tpu.dot_dimension_numbers<[1], [0], [0], [1], [0, 0, 1, 1], [], []>} : vector<8x8xbf16>, vector<8x16xbf16>, vector<8x16xf32> -> vector<8x16xf32>
    %c8_232 = arith.constant 8 : index
    %c0_233 = arith.constant 0 : index
    %445 = vector.load %arg22[%c8_232, %c0_233] : memref<16x64xf32, #tpu.memory_space<vmem>>, vector<8x16xf32>
    tpu.vector_store %arg22[%c8_232, %c0_233], %444 {strides = array<i32>} : memref<16x64xf32, #tpu.memory_space<vmem>>, vector<8x16xf32>,
    %c8_234 = arith.constant 8 : index
    %c16_235 = arith.constant 16 : index
    %446 = vector.load %arg21[%c8_234, %c16_235] : memref<16x192xf32, #tpu.memory_space<vmem>>, vector<8x16xf32>
    %c8_236 = arith.constant 8 : index
    %c80_237 = arith.constant 80 : index
    %447 = vector.load %arg21[%c8_236, %c80_237] : memref<16x192xf32, #tpu.memory_space<vmem>>, vector<8x16xf32>
    %c8_238 = arith.constant 8 : index
    %c144_239 = arith.constant 144 : index
    %448 = vector.load %arg21[%c8_238, %c144_239] : memref<16x192xf32, #tpu.memory_space<vmem>>, vector<8x16xf32>
    %449 = arith.truncf %446 : vector<8x16xf32> to vector<8x16xbf16>
    %450 = arith.truncf %447 : vector<8x16xf32> to vector<8x16xbf16>
    %cst_240 = arith.constant dense<0.000000e+00> : vector<8x8xf32>
    %451 = tpu.matmul %449, %450, %cst_240 {dimension_numbers = #tpu.dot_dimension_numbers<[1], [1], [0], [0], [0, 0, 1, 0], [], []>} : vector<8x16xbf16>, vector<8x16xbf16>, vector<8x8xf32> -> vector<8x8xf32>
    %cst_241 = arith.constant 2.500000e-01 : f32
    %452 = vector.broadcast %cst_241 : f32 to vector<8x8xf32>
    %453 = arith.mulf %451, %452 : vector<8x8xf32>
    %454 = vector.broadcast %421 : vector<1x8xf32> to vector<8x8xf32>
    %455 = arith.addf %453, %454 : vector<8x8xf32>
    %cst_242 = arith.constant dense<0xFF800000> : vector<8xf32>
    %456 = vector.multi_reduction <maximumf>, %455, %cst_242 [1] : vector<8x8xf32> to vector<8xf32>
    %457 = vector.shape_cast %456 : vector<8xf32> to vector<8x1xf32>
    %458 = vector.broadcast %457 : vector<8x1xf32> to vector<8x8xf32>
    %459 = arith.subf %455, %458 : vector<8x8xf32>
    %460 = math.exp %459 : vector<8x8xf32>
    %cst_243 = arith.constant dense<0.000000e+00> : vector<8xf32>
    %461 = vector.multi_reduction <add>, %460, %cst_243 [1] : vector<8x8xf32> to vector<8xf32>
    %462 = vector.shape_cast %461 : vector<8xf32> to vector<8x1xf32>
    %463 = tpu.reciprocal %462 {approx = true} : vector<8x1xf32> -> vector<8x1xf32>
    %464 = vector.broadcast %463 : vector<8x1xf32> to vector<8x8xf32>
    %465 = arith.mulf %460, %464 : vector<8x8xf32>
    %466 = arith.truncf %465 : vector<8x8xf32> to vector<8x8xbf16>
    %467 = arith.truncf %448 : vector<8x16xf32> to vector<8x16xbf16>
    %cst_244 = arith.constant dense<0.000000e+00> : vector<8x16xf32>
    %468 = tpu.matmul %466, %467, %cst_244 {dimension_numbers = #tpu.dot_dimension_numbers<[1], [0], [0], [1], [0, 0, 1, 1], [], []>} : vector<8x8xbf16>, vector<8x16xbf16>, vector<8x16xf32> -> vector<8x16xf32>
    %c8_245 = arith.constant 8 : index
    %c16_246 = arith.constant 16 : index
    %469 = vector.load %arg22[%c8_245, %c16_246] : memref<16x64xf32, #tpu.memory_space<vmem>>, vector<8x16xf32>
    tpu.vector_store %arg22[%c8_245, %c16_246], %468 {strides = array<i32>} : memref<16x64xf32, #tpu.memory_space<vmem>>, vector<8x16xf32>,
    %c8_247 = arith.constant 8 : index
    %c32_248 = arith.constant 32 : index
    %470 = vector.load %arg21[%c8_247, %c32_248] : memref<16x192xf32, #tpu.memory_space<vmem>>, vector<8x16xf32>
    %c8_249 = arith.constant 8 : index
    %c96_250 = arith.constant 96 : index
    %471 = vector.load %arg21[%c8_249, %c96_250] : memref<16x192xf32, #tpu.memory_space<vmem>>, vector<8x16xf32>
    %c8_251 = arith.constant 8 : index
    %c160_252 = arith.constant 160 : index
    %472 = vector.load %arg21[%c8_251, %c160_252] : memref<16x192xf32, #tpu.memory_space<vmem>>, vector<8x16xf32>
    %473 = arith.truncf %470 : vector<8x16xf32> to vector<8x16xbf16>
    %474 = arith.truncf %471 : vector<8x16xf32> to vector<8x16xbf16>
    %cst_253 = arith.constant dense<0.000000e+00> : vector<8x8xf32>
    %475 = tpu.matmul %473, %474, %cst_253 {dimension_numbers = #tpu.dot_dimension_numbers<[1], [1], [0], [0], [0, 0, 1, 0], [], []>} : vector<8x16xbf16>, vector<8x16xbf16>, vector<8x8xf32> -> vector<8x8xf32>
    %cst_254 = arith.constant 2.500000e-01 : f32
    %476 = vector.broadcast %cst_254 : f32 to vector<8x8xf32>
    %477 = arith.mulf %475, %476 : vector<8x8xf32>
    %478 = vector.broadcast %421 : vector<1x8xf32> to vector<8x8xf32>
    %479 = arith.addf %477, %478 : vector<8x8xf32>
    %cst_255 = arith.constant dense<0xFF800000> : vector<8xf32>
    %480 = vector.multi_reduction <maximumf>, %479, %cst_255 [1] : vector<8x8xf32> to vector<8xf32>
    %481 = vector.shape_cast %480 : vector<8xf32> to vector<8x1xf32>
    %482 = vector.broadcast %481 : vector<8x1xf32> to vector<8x8xf32>
    %483 = arith.subf %479, %482 : vector<8x8xf32>
    %484 = math.exp %483 : vector<8x8xf32>
    %cst_256 = arith.constant dense<0.000000e+00> : vector<8xf32>
    %485 = vector.multi_reduction <add>, %484, %cst_256 [1] : vector<8x8xf32> to vector<8xf32>
    %486 = vector.shape_cast %485 : vector<8xf32> to vector<8x1xf32>
    %487 = tpu.reciprocal %486 {approx = true} : vector<8x1xf32> -> vector<8x1xf32>
    %488 = vector.broadcast %487 : vector<8x1xf32> to vector<8x8xf32>
    %489 = arith.mulf %484, %488 : vector<8x8xf32>
    %490 = arith.truncf %489 : vector<8x8xf32> to vector<8x8xbf16>
    %491 = arith.truncf %472 : vector<8x16xf32> to vector<8x16xbf16>
    %cst_257 = arith.constant dense<0.000000e+00> : vector<8x16xf32>
    %492 = tpu.matmul %490, %491, %cst_257 {dimension_numbers = #tpu.dot_dimension_numbers<[1], [0], [0], [1], [0, 0, 1, 1], [], []>} : vector<8x8xbf16>, vector<8x16xbf16>, vector<8x16xf32> -> vector<8x16xf32>
    %c8_258 = arith.constant 8 : index
    %c32_259 = arith.constant 32 : index
    %493 = vector.load %arg22[%c8_258, %c32_259] : memref<16x64xf32, #tpu.memory_space<vmem>>, vector<8x16xf32>
    tpu.vector_store %arg22[%c8_258, %c32_259], %492 {strides = array<i32>} : memref<16x64xf32, #tpu.memory_space<vmem>>, vector<8x16xf32>,
    %c8_260 = arith.constant 8 : index
    %c48_261 = arith.constant 48 : index
    %494 = vector.load %arg21[%c8_260, %c48_261] : memref<16x192xf32, #tpu.memory_space<vmem>>, vector<8x16xf32>
    %c8_262 = arith.constant 8 : index
    %c112_263 = arith.constant 112 : index
    %495 = vector.load %arg21[%c8_262, %c112_263] : memref<16x192xf32, #tpu.memory_space<vmem>>, vector<8x16xf32>
    %c8_264 = arith.constant 8 : index
    %c176_265 = arith.constant 176 : index
    %496 = vector.load %arg21[%c8_264, %c176_265] : memref<16x192xf32, #tpu.memory_space<vmem>>, vector<8x16xf32>
    %497 = arith.truncf %494 : vector<8x16xf32> to vector<8x16xbf16>
    %498 = arith.truncf %495 : vector<8x16xf32> to vector<8x16xbf16>
    %cst_266 = arith.constant dense<0.000000e+00> : vector<8x8xf32>
    %499 = tpu.matmul %497, %498, %cst_266 {dimension_numbers = #tpu.dot_dimension_numbers<[1], [1], [0], [0], [0, 0, 1, 0], [], []>} : vector<8x16xbf16>, vector<8x16xbf16>, vector<8x8xf32> -> vector<8x8xf32>
    %cst_267 = arith.constant 2.500000e-01 : f32
    %500 = vector.broadcast %cst_267 : f32 to vector<8x8xf32>
    %501 = arith.mulf %499, %500 : vector<8x8xf32>
    %502 = vector.broadcast %421 : vector<1x8xf32> to vector<8x8xf32>
    %503 = arith.addf %501, %502 : vector<8x8xf32>
    %cst_268 = arith.constant dense<0xFF800000> : vector<8xf32>
    %504 = vector.multi_reduction <maximumf>, %503, %cst_268 [1] : vector<8x8xf32> to vector<8xf32>
    %505 = vector.shape_cast %504 : vector<8xf32> to vector<8x1xf32>
    %506 = vector.broadcast %505 : vector<8x1xf32> to vector<8x8xf32>
    %507 = arith.subf %503, %506 : vector<8x8xf32>
    %508 = math.exp %507 : vector<8x8xf32>
    %cst_269 = arith.constant dense<0.000000e+00> : vector<8xf32>
    %509 = vector.multi_reduction <add>, %508, %cst_269 [1] : vector<8x8xf32> to vector<8xf32>
    %510 = vector.shape_cast %509 : vector<8xf32> to vector<8x1xf32>
    %511 = tpu.reciprocal %510 {approx = true} : vector<8x1xf32> -> vector<8x1xf32>
    %512 = vector.broadcast %511 : vector<8x1xf32> to vector<8x8xf32>
    %513 = arith.mulf %508, %512 : vector<8x8xf32>
    %514 = arith.truncf %513 : vector<8x8xf32> to vector<8x8xbf16>
    %515 = arith.truncf %496 : vector<8x16xf32> to vector<8x16xbf16>
    %cst_270 = arith.constant dense<0.000000e+00> : vector<8x16xf32>
    %516 = tpu.matmul %514, %515, %cst_270 {dimension_numbers = #tpu.dot_dimension_numbers<[1], [0], [0], [1], [0, 0, 1, 1], [], []>} : vector<8x8xbf16>, vector<8x16xbf16>, vector<8x16xf32> -> vector<8x16xf32>
    %c8_271 = arith.constant 8 : index
    %c48_272 = arith.constant 48 : index
    %517 = vector.load %arg22[%c8_271, %c48_272] : memref<16x64xf32, #tpu.memory_space<vmem>>, vector<8x16xf32>
    tpu.vector_store %arg22[%c8_271, %c48_272], %516 {strides = array<i32>} : memref<16x64xf32, #tpu.memory_space<vmem>>, vector<8x16xf32>,
    %c0_273 = arith.constant 0 : index
    %c0_274 = arith.constant 0 : index
    %518 = vector.load %arg22[%c0_273, %c0_274] : memref<16x64xf32, #tpu.memory_space<vmem>>, vector<16x64xf32>
    %c1_275 = arith.constant 1 : index
    %c0_276 = arith.constant 0 : index
    %c0_277 = arith.constant 0 : index
    %519 = vector.load %arg6[%c1_275, %c0_276, %c0_277] : memref<2x64x64xbf16, #tpu.memory_space<vmem>>, vector<1x64x64xbf16>
    %520 = vector.shape_cast %519 : vector<1x64x64xbf16> to vector<64x64xbf16>
    %521 = arith.truncf %518 : vector<16x64xf32> to vector<16x64xbf16>
    %cst_278 = arith.constant dense<0.000000e+00> : vector<16x64xf32>
    %522 = tpu.matmul %521, %520, %cst_278 {dimension_numbers = #tpu.dot_dimension_numbers<[1], [0], [0], [1], [0, 0, 1, 1], [], []>} : vector<16x64xbf16>, vector<64x64xbf16>, vector<16x64xf32> -> vector<16x64xf32>
    %c1_279 = arith.constant 1 : index
    %c0_280 = arith.constant 0 : index
    %c0_281 = arith.constant 0 : index
    %523 = vector.load %arg7[%c1_279, %c0_280, %c0_281] : memref<2x1x64xf32, #tpu.memory_space<vmem>>, vector<1x1x64xf32>
    %524 = vector.shape_cast %523 : vector<1x1x64xf32> to vector<1x64xf32>
    %525 = vector.broadcast %524 : vector<1x64xf32> to vector<16x64xf32>
    %526 = arith.addf %522, %525 : vector<16x64xf32>
    %527 = arith.addf %314, %526 : vector<16x64xf32>
    %c1_282 = arith.constant 1 : index
    %c0_283 = arith.constant 0 : index
    %c0_284 = arith.constant 0 : index
    %528 = vector.load %arg8[%c1_282, %c0_283, %c0_284] : memref<2x1x64xf32, #tpu.memory_space<vmem>>, vector<1x1x64xf32>
    %529 = vector.shape_cast %528 : vector<1x1x64xf32> to vector<1x64xf32>
    %c1_285 = arith.constant 1 : index
    %c0_286 = arith.constant 0 : index
    %c0_287 = arith.constant 0 : index
    %530 = vector.load %arg9[%c1_285, %c0_286, %c0_287] : memref<2x1x64xf32, #tpu.memory_space<vmem>>, vector<1x1x64xf32>
    %531 = vector.shape_cast %530 : vector<1x1x64xf32> to vector<1x64xf32>
    %cst_288 = arith.constant dense<0.000000e+00> : vector<16xf32>
    %532 = vector.multi_reduction <add>, %527, %cst_288 [1] : vector<16x64xf32> to vector<16xf32>
    %533 = vector.shape_cast %532 : vector<16xf32> to vector<16x1xf32>
    %cst_289 = arith.constant 6.400000e+01 : f32
    %534 = vector.broadcast %cst_289 : f32 to vector<16x1xf32>
    %535 = arith.divf %533, %534 : vector<16x1xf32>
    %536 = vector.broadcast %535 : vector<16x1xf32> to vector<16x64xf32>
    %537 = arith.subf %527, %536 : vector<16x64xf32>
    %538 = arith.mulf %537, %537 : vector<16x64xf32>
    %cst_290 = arith.constant dense<0.000000e+00> : vector<16xf32>
    %539 = vector.multi_reduction <add>, %538, %cst_290 [1] : vector<16x64xf32> to vector<16xf32>
    %540 = vector.shape_cast %539 : vector<16xf32> to vector<16x1xf32>
    %cst_291 = arith.constant 6.400000e+01 : f32
    %541 = vector.broadcast %cst_291 : f32 to vector<16x1xf32>
    %542 = arith.divf %540, %541 : vector<16x1xf32>
    %cst_292 = arith.constant 9.99999974E-6 : f32
    %543 = vector.broadcast %cst_292 : f32 to vector<16x1xf32>
    %544 = arith.addf %542, %543 : vector<16x1xf32>
    %545 = math.rsqrt %544 : vector<16x1xf32>
    %546 = vector.broadcast %545 : vector<16x1xf32> to vector<16x64xf32>
    %547 = arith.mulf %537, %546 : vector<16x64xf32>
    %548 = vector.broadcast %529 : vector<1x64xf32> to vector<16x64xf32>
    %549 = arith.mulf %547, %548 : vector<16x64xf32>
    %550 = vector.broadcast %531 : vector<1x64xf32> to vector<16x64xf32>
    %551 = arith.addf %549, %550 : vector<16x64xf32>
    %c1_293 = arith.constant 1 : index
    %c0_294 = arith.constant 0 : index
    %c0_295 = arith.constant 0 : index
    %552 = vector.load %arg10[%c1_293, %c0_294, %c0_295] : memref<2x64x128xbf16, #tpu.memory_space<vmem>>, vector<1x64x128xbf16>
    %553 = vector.shape_cast %552 : vector<1x64x128xbf16> to vector<64x128xbf16>
    %554 = arith.truncf %551 : vector<16x64xf32> to vector<16x64xbf16>
    %cst_296 = arith.constant dense<0.000000e+00> : vector<16x128xf32>
    %555 = tpu.matmul %554, %553, %cst_296 {dimension_numbers = #tpu.dot_dimension_numbers<[1], [0], [0], [1], [0, 0, 1, 1], [], []>} : vector<16x64xbf16>, vector<64x128xbf16>, vector<16x128xf32> -> vector<16x128xf32>
    %c1_297 = arith.constant 1 : index
    %c0_298 = arith.constant 0 : index
    %c0_299 = arith.constant 0 : index
    %556 = vector.load %arg11[%c1_297, %c0_298, %c0_299] : memref<2x1x128xf32, #tpu.memory_space<vmem>>, vector<1x1x128xf32>
    %557 = vector.shape_cast %556 : vector<1x1x128xf32> to vector<1x128xf32>
    %558 = vector.broadcast %557 : vector<1x128xf32> to vector<16x128xf32>
    %559 = arith.addf %555, %558 : vector<16x128xf32>
    %cst_300 = arith.constant 5.000000e-01 : f32
    %560 = vector.broadcast %cst_300 : f32 to vector<16x128xf32>
    %561 = arith.mulf %560, %559 : vector<16x128xf32>
    %cst_301 = arith.constant 4.471500e-02 : f32
    %562 = vector.broadcast %cst_301 : f32 to vector<16x128xf32>
    %563 = arith.mulf %562, %559 : vector<16x128xf32>
    %564 = arith.mulf %563, %559 : vector<16x128xf32>
    %565 = arith.mulf %564, %559 : vector<16x128xf32>
    %566 = arith.addf %559, %565 : vector<16x128xf32>
    %cst_302 = arith.constant 0.797884583 : f32
    %567 = vector.broadcast %cst_302 : f32 to vector<16x128xf32>
    %568 = arith.mulf %567, %566 : vector<16x128xf32>
    %569 = math.tanh %568 : vector<16x128xf32>
    %cst_303 = arith.constant 1.000000e+00 : f32
    %570 = vector.broadcast %cst_303 : f32 to vector<16x128xf32>
    %571 = arith.addf %570, %569 : vector<16x128xf32>
    %572 = arith.mulf %561, %571 : vector<16x128xf32>
    %c1_304 = arith.constant 1 : index
    %c0_305 = arith.constant 0 : index
    %c0_306 = arith.constant 0 : index
    %573 = vector.load %arg12[%c1_304, %c0_305, %c0_306] : memref<2x128x64xbf16, #tpu.memory_space<vmem>>, vector<1x128x64xbf16>
    %574 = vector.shape_cast %573 : vector<1x128x64xbf16> to vector<128x64xbf16>
    %575 = arith.truncf %572 : vector<16x128xf32> to vector<16x128xbf16>
    %cst_307 = arith.constant dense<0.000000e+00> : vector<16x64xf32>
    %576 = tpu.matmul %575, %574, %cst_307 {dimension_numbers = #tpu.dot_dimension_numbers<[1], [0], [0], [1], [0, 0, 1, 1], [], []>} : vector<16x128xbf16>, vector<128x64xbf16>, vector<16x64xf32> -> vector<16x64xf32>
    %577 = arith.addf %551, %576 : vector<16x64xf32>
    %c1_308 = arith.constant 1 : index
    %c0_309 = arith.constant 0 : index
    %c0_310 = arith.constant 0 : index
    %578 = vector.load %arg13[%c1_308, %c0_309, %c0_310] : memref<2x1x64xf32, #tpu.memory_space<vmem>>, vector<1x1x64xf32>
    %579 = vector.shape_cast %578 : vector<1x1x64xf32> to vector<1x64xf32>
    %580 = vector.broadcast %579 : vector<1x64xf32> to vector<16x64xf32>
    %581 = arith.addf %577, %580 : vector<16x64xf32>
    %c1_311 = arith.constant 1 : index
    %c0_312 = arith.constant 0 : index
    %c0_313 = arith.constant 0 : index
    %582 = vector.load %arg14[%c1_311, %c0_312, %c0_313] : memref<2x1x64xf32, #tpu.memory_space<vmem>>, vector<1x1x64xf32>
    %583 = vector.shape_cast %582 : vector<1x1x64xf32> to vector<1x64xf32>
    %c1_314 = arith.constant 1 : index
    %c0_315 = arith.constant 0 : index
    %c0_316 = arith.constant 0 : index
    %584 = vector.load %arg15[%c1_314, %c0_315, %c0_316] : memref<2x1x64xf32, #tpu.memory_space<vmem>>, vector<1x1x64xf32>
    %585 = vector.shape_cast %584 : vector<1x1x64xf32> to vector<1x64xf32>
    %cst_317 = arith.constant dense<0.000000e+00> : vector<16xf32>
    %586 = vector.multi_reduction <add>, %581, %cst_317 [1] : vector<16x64xf32> to vector<16xf32>
    %587 = vector.shape_cast %586 : vector<16xf32> to vector<16x1xf32>
    %cst_318 = arith.constant 6.400000e+01 : f32
    %588 = vector.broadcast %cst_318 : f32 to vector<16x1xf32>
    %589 = arith.divf %587, %588 : vector<16x1xf32>
    %590 = vector.broadcast %589 : vector<16x1xf32> to vector<16x64xf32>
    %591 = arith.subf %581, %590 : vector<16x64xf32>
    %592 = arith.mulf %591, %591 : vector<16x64xf32>
    %cst_319 = arith.constant dense<0.000000e+00> : vector<16xf32>
    %593 = vector.multi_reduction <add>, %592, %cst_319 [1] : vector<16x64xf32> to vector<16xf32>
    %594 = vector.shape_cast %593 : vector<16xf32> to vector<16x1xf32>
    %cst_320 = arith.constant 6.400000e+01 : f32
    %595 = vector.broadcast %cst_320 : f32 to vector<16x1xf32>
    %596 = arith.divf %594, %595 : vector<16x1xf32>
    %cst_321 = arith.constant 9.99999974E-6 : f32
    %597 = vector.broadcast %cst_321 : f32 to vector<16x1xf32>
    %598 = arith.addf %596, %597 : vector<16x1xf32>
    %599 = math.rsqrt %598 : vector<16x1xf32>
    %600 = vector.broadcast %599 : vector<16x1xf32> to vector<16x64xf32>
    %601 = arith.mulf %591, %600 : vector<16x64xf32>
    %602 = vector.broadcast %583 : vector<1x64xf32> to vector<16x64xf32>
    %603 = arith.mulf %601, %602 : vector<16x64xf32>
    %604 = vector.broadcast %585 : vector<1x64xf32> to vector<16x64xf32>
    %605 = arith.addf %603, %604 : vector<16x64xf32>
    %606 = vector.extract_strided_slice %605 {offsets = [0, 0], sizes = [1, 64], strides = [1, 1]} : vector<16x64xf32> to vector<1x64xf32>
    %c0_322 = arith.constant 0 : index
    %c0_323 = arith.constant 0 : index
    %607 = vector.load %arg16[%c0_322, %c0_323] : memref<64x64xbf16, #tpu.memory_space<vmem>>, vector<64x64xbf16>
    %608 = arith.truncf %606 : vector<1x64xf32> to vector<1x64xbf16>
    %cst_324 = arith.constant dense<0.000000e+00> : vector<1x64xf32>
    %609 = tpu.matmul %608, %607, %cst_324 {dimension_numbers = #tpu.dot_dimension_numbers<[1], [0], [0], [1], [0, 0, 1, 1], [], []>} : vector<1x64xbf16>, vector<64x64xbf16>, vector<1x64xf32> -> vector<1x64xf32>
    %c0_325 = arith.constant 0 : index
    %c0_326 = arith.constant 0 : index
    %610 = vector.load %arg17[%c0_325, %c0_326] : memref<1x64xf32, #tpu.memory_space<vmem>>, vector<1x64xf32>
    %611 = arith.addf %609, %610 : vector<1x64xf32>
    %cst_327 = arith.constant 0.000000e+00 : f32
    %612 = vector.broadcast %cst_327 : f32 to vector<1x64xf32>
    %613 = arith.maximumf %611, %612 : vector<1x64xf32>
    %c0_328 = arith.constant 0 : index
    %c0_329 = arith.constant 0 : index
    %614 = vector.load %arg18[%c0_328, %c0_329] : memref<64x4xbf16, #tpu.memory_space<vmem>>, vector<64x4xbf16>
    %615 = arith.truncf %613 : vector<1x64xf32> to vector<1x64xbf16>
    %cst_330 = arith.constant dense<0.000000e+00> : vector<1x4xf32>
    %616 = tpu.matmul %615, %614, %cst_330 {dimension_numbers = #tpu.dot_dimension_numbers<[1], [0], [0], [1], [0, 0, 1, 1], [], []>} : vector<1x64xbf16>, vector<64x4xbf16>, vector<1x4xf32> -> vector<1x4xf32>
    %c0_331 = arith.constant 0 : index
    %c0_332 = arith.constant 0 : index
    %617 = vector.load %arg19[%c0_331, %c0_332] : memref<1x4xf32, #tpu.memory_space<vmem>>, vector<1x4xf32>
    %618 = arith.addf %616, %617 : vector<1x4xf32>
    %c0_333 = arith.constant 0 : index
    %c0_334 = arith.constant 0 : index
    %619 = vector.load %arg20[%c0_333, %c0_334] : memref<2x4xf32, #tpu.memory_space<vmem>>, vector<1x4xf32>
    tpu.vector_store %arg20[%c0_333, %c0_334], %618 {strides = array<i32>} : memref<2x4xf32, #tpu.memory_space<vmem>>, vector<1x4xf32>,
    %620 = vector.extract_strided_slice %605 {offsets = [8, 0], sizes = [1, 64], strides = [1, 1]} : vector<16x64xf32> to vector<1x64xf32>
    %c0_335 = arith.constant 0 : index
    %c0_336 = arith.constant 0 : index
    %621 = vector.load %arg16[%c0_335, %c0_336] : memref<64x64xbf16, #tpu.memory_space<vmem>>, vector<64x64xbf16>
    %622 = arith.truncf %620 : vector<1x64xf32> to vector<1x64xbf16>
    %cst_337 = arith.constant dense<0.000000e+00> : vector<1x64xf32>
    %623 = tpu.matmul %622, %621, %cst_337 {dimension_numbers = #tpu.dot_dimension_numbers<[1], [0], [0], [1], [0, 0, 1, 1], [], []>} : vector<1x64xbf16>, vector<64x64xbf16>, vector<1x64xf32> -> vector<1x64xf32>
    %c0_338 = arith.constant 0 : index
    %c0_339 = arith.constant 0 : index
    %624 = vector.load %arg17[%c0_338, %c0_339] : memref<1x64xf32, #tpu.memory_space<vmem>>, vector<1x64xf32>
    %625 = arith.addf %623, %624 : vector<1x64xf32>
    %cst_340 = arith.constant 0.000000e+00 : f32
    %626 = vector.broadcast %cst_340 : f32 to vector<1x64xf32>
    %627 = arith.maximumf %625, %626 : vector<1x64xf32>
    %c0_341 = arith.constant 0 : index
    %c0_342 = arith.constant 0 : index
    %628 = vector.load %arg18[%c0_341, %c0_342] : memref<64x4xbf16, #tpu.memory_space<vmem>>, vector<64x4xbf16>
    %629 = arith.truncf %627 : vector<1x64xf32> to vector<1x64xbf16>
    %cst_343 = arith.constant dense<0.000000e+00> : vector<1x4xf32>
    %630 = tpu.matmul %629, %628, %cst_343 {dimension_numbers = #tpu.dot_dimension_numbers<[1], [0], [0], [1], [0, 0, 1, 1], [], []>} : vector<1x64xbf16>, vector<64x4xbf16>, vector<1x4xf32> -> vector<1x4xf32>
    %c0_344 = arith.constant 0 : index
    %c0_345 = arith.constant 0 : index
    %631 = vector.load %arg19[%c0_344, %c0_345] : memref<1x4xf32, #tpu.memory_space<vmem>>, vector<1x4xf32>
    %632 = arith.addf %630, %631 : vector<1x4xf32>
    %c1_346 = arith.constant 1 : index
    %c0_347 = arith.constant 0 : index
    %633 = vector.load %arg20[%c1_346, %c0_347] : memref<2x4xf32, #tpu.memory_space<vmem>>, vector<1x4xf32>
    tpu.vector_store %arg20[%c1_346, %c0_347], %632 {strides = array<i32>} : memref<2x4xf32, #tpu.memory_space<vmem>>, vector<1x4xf32>,
    return
  }
}

</mosaic_0001>

<llo_original>
// kernel: roberta_class_forward.1
$region0: #{roberta_class_forward.1}
  #allocation0 [shape = 'u32[]', space=smem, size = 0x4, offset = 0x4, fixed_abs, tag = 'smem constant byte address 0x4 - core index']
  #allocation1 [shape = 'u32[144,128]{1,0:T(1,128)}', space=vmem, size = 0x12000, scoped, tag = 'internal scratch']
  #allocation2 [shape = 'f32[16,192]{1,0:T(8,128)}', space=vmem, size = 0x4000, scoped, tag = 'scratch operand']
  #allocation3 [shape = 'f32[16,64]{1,0:T(8,128)}', space=vmem, size = 0x2000, scoped, tag = 'scratch operand']
  %s0 = inlined_call_operand.vmem [shape: f32[16,64], index: 0, kind: input, shape index: {}]
  %s1 = inlined_call_operand.vmem [shape: f32[2,8], index: 1, kind: input, shape index: {}]
  %s2 = inlined_call_operand.vmem [shape: f32[1,64], index: 2, kind: input, shape index: {}]
  %s3 = inlined_call_operand.vmem [shape: f32[1,64], index: 3, kind: input, shape index: {}]
  %s4 = inlined_call_operand.vmem [shape: bf16[2,64,192], index: 4, kind: input, shape index: {}]
  %s5 = inlined_call_operand.vmem [shape: f32[2,1,192], index: 5, kind: input, shape index: {}]
  %s6 = inlined_call_operand.vmem [shape: bf16[2,64,64], index: 6, kind: input, shape index: {}]
  %s7 = inlined_call_operand.vmem [shape: f32[2,1,64], index: 7, kind: input, shape index: {}]
  %s8 = inlined_call_operand.vmem [shape: f32[2,1,64], index: 8, kind: input, shape index: {}]
  %s9 = inlined_call_operand.vmem [shape: f32[2,1,64], index: 9, kind: input, shape index: {}]
  %s10 = inlined_call_operand.vmem [shape: bf16[2,64,128], index: 10, kind: input, shape index: {}]
  %s11 = inlined_call_operand.vmem [shape: f32[2,1,128], index: 11, kind: input, shape index: {}]
  %s12 = inlined_call_operand.vmem [shape: bf16[2,128,64], index: 12, kind: input, shape index: {}]
  %s13 = inlined_call_operand.vmem [shape: f32[2,1,64], index: 13, kind: input, shape index: {}]
  %s14 = inlined_call_operand.vmem [shape: f32[2,1,64], index: 14, kind: input, shape index: {}]
  %s15 = inlined_call_operand.vmem [shape: f32[2,1,64], index: 15, kind: input, shape index: {}]
  %s16 = inlined_call_operand.vmem [shape: bf16[64,64], index: 16, kind: input, shape index: {}]
  %s17 = inlined_call_operand.vmem [shape: f32[1,64], index: 17, kind: input, shape index: {}]
  %s18 = inlined_call_operand.vmem [shape: bf16[64,4], index: 18, kind: input, shape index: {}]
  %s19 = inlined_call_operand.vmem [shape: f32[1,4], index: 19, kind: input, shape index: {}]
  %s20 = inlined_call_operand.hbm [shape: f32[2,4], index: 20, kind: output, shape index: {}]
  %s21 = sld [smem:[#allocation0]]
  $region90: #{roberta_class_forward.1} parent=0
    _
  %s23 = ssub.s32 1, %s21
  %s24 = scalar_select 0, %s23, %s21
  $region1: #{roberta_class_forward.1} parent=0
    #allocation4 [shape = 'u8[1024]{0}', space=vmem, size = 0x400, scoped, tag = 'output window, operand 0, single buffered']
    #allocation5 [shape = 's32[1]{0}', space=sflag, size = 0x4, scoped, tag = 'scoped memory for roberta_class_forward.1']
    %25 = vsyncpa [#allocation5], 0
    // Predicated region
    $region2: #{roberta_class_forward.1} parent=1 // pred_check
      _
    $region3: #{roberta_class_forward.1} parent=1 // pred_check_branch
      %27 = sbr.rel (0) target = $region5
    $region4: #{roberta_class_forward.1} parent=1 // pred_region
      _
    $region5: #{roberta_class_forward.1} parent=1 // pred_fallthru
      _
    // Predicated region
    $region6: #{roberta_class_forward.1} parent=1 // pred_check
      _
    $region7: #{roberta_class_forward.1} parent=1 // pred_check_branch
      %29 = sbr.rel (0) target = $region9
    $region8: #{roberta_class_forward.1} parent=1 // pred_region
      _
    $region9: #{roberta_class_forward.1} parent=1 // pred_fallthru
      _
    // Predicated region
    $region10: #{roberta_class_forward.1} parent=1 // pred_check
      _
    $region11: #{roberta_class_forward.1} parent=1 // pred_check_branch
      %31 = sbr.rel (0) target = $region13
    $region12: #{roberta_class_forward.1} parent=1 // pred_region
      _
    $region13: #{roberta_class_forward.1} parent=1 // pred_fallthru
      _
    // Predicated region
    $region14: #{roberta_class_forward.1} parent=1 // pred_check
      _
    $region15: #{roberta_class_forward.1} parent=1 // pred_check_branch
      %33 = sbr.rel (0) target = $region17
    $region16: #{roberta_class_forward.1} parent=1 // pred_region
      _
    $region17: #{roberta_class_forward.1} parent=1 // pred_fallthru
      _
    // Predicated region
    $region18: #{roberta_class_forward.1} parent=1 // pred_check
      _
    $region19: #{roberta_class_forward.1} parent=1 // pred_check_branch
      %35 = sbr.rel (0) target = $region21
    $region20: #{roberta_class_forward.1} parent=1 // pred_region
      _
    $region21: #{roberta_class_forward.1} parent=1 // pred_fallthru
      _
    // Predicated region
    $region22: #{roberta_class_forward.1} parent=1 // pred_check
      _
    $region23: #{roberta_class_forward.1} parent=1 // pred_check_branch
      %37 = sbr.rel (0) target = $region25
    $region24: #{roberta_class_forward.1} parent=1 // pred_region
      _
    $region25: #{roberta_class_forward.1} parent=1 // pred_fallthru
      _
    // Predicated region
    $region26: #{roberta_class_forward.1} parent=1 // pred_check
      _
    $region27: #{roberta_class_forward.1} parent=1 // pred_check_branch
      %39 = sbr.rel (0) target = $region29
    $region28: #{roberta_class_forward.1} parent=1 // pred_region
      _
    $region29: #{roberta_class_forward.1} parent=1 // pred_fallthru
      _
    // Predicated region
    $region30: #{roberta_class_forward.1} parent=1 // pred_check
      _
    $region31: #{roberta_class_forward.1} parent=1 // pred_check_branch
      %41 = sbr.rel (0) target = $region33
    $region32: #{roberta_class_forward.1} parent=1 // pred_region
      _
    $region33: #{roberta_class_forward.1} parent=1 // pred_fallthru
      _
    // Predicated region
    $region34: #{roberta_class_forward.1} parent=1 // pred_check
      _
    $region35: #{roberta_class_forward.1} parent=1 // pred_check_branch
      %43 = sbr.rel (0) target = $region37
    $region36: #{roberta_class_forward.1} parent=1 // pred_region
      _
    $region37: #{roberta_class_forward.1} parent=1 // pred_fallthru
      _
    // Predicated region
    $region38: #{roberta_class_forward.1} parent=1 // pred_check
      _
    $region39: #{roberta_class_forward.1} parent=1 // pred_check_branch
      %45 = sbr.rel (0) target = $region41
    $region40: #{roberta_class_forward.1} parent=1 // pred_region
      _
    $region41: #{roberta_class_forward.1} parent=1 // pred_fallthru
      _
    // Predicated region
    $region42: #{roberta_class_forward.1} parent=1 // pred_check
      _
    $region43: #{roberta_class_forward.1} parent=1 // pred_check_branch
      %47 = sbr.rel (0) target = $region45
    $region44: #{roberta_class_forward.1} parent=1 // pred_region
      _
    $region45: #{roberta_class_forward.1} parent=1 // pred_fallthru
      _
    // Predicated region
    $region46: #{roberta_class_forward.1} parent=1 // pred_check
      _
    $region47: #{roberta_class_forward.1} parent=1 // pred_check_branch
      %49 = sbr.rel (0) target = $region49
    $region48: #{roberta_class_forward.1} parent=1 // pred_region
      _
    $region49: #{roberta_class_forward.1} parent=1 // pred_fallthru
      _
    // Predicated region
    $region50: #{roberta_class_forward.1} parent=1 // pred_check
      _
    $region51: #{roberta_class_forward.1} parent=1 // pred_check_branch
      %51 = sbr.rel (0) target = $region53
    $region52: #{roberta_class_forward.1} parent=1 // pred_region
      _
    $region53: #{roberta_class_forward.1} parent=1 // pred_fallthru
      _
    // Predicated region
    $region54: #{roberta_class_forward.1} parent=1 // pred_check
      _
    $region55: #{roberta_class_forward.1} parent=1 // pred_check_branch
      %53 = sbr.rel (0) target = $region57
    $region56: #{roberta_class_forward.1} parent=1 // pred_region
      _
    $region57: #{roberta_class_forward.1} parent=1 // pred_fallthru
      _
    // Predicated region
    $region58: #{roberta_class_forward.1} parent=1 // pred_check
      _
    $region59: #{roberta_class_forward.1} parent=1 // pred_check_branch
      %55 = sbr.rel (0) target = $region61
    $region60: #{roberta_class_forward.1} parent=1 // pred_region
      _
    $region61: #{roberta_class_forward.1} parent=1 // pred_fallthru
      _
    // Predicated region
    $region62: #{roberta_class_forward.1} parent=1 // pred_check
      _
    $region63: #{roberta_class_forward.1} parent=1 // pred_check_branch
      %57 = sbr.rel (0) target = $region65
    $region64: #{roberta_class_forward.1} parent=1 // pred_region
      _
    $region65: #{roberta_class_forward.1} parent=1 // pred_fallthru
      _
    // Predicated region
    $region66: #{roberta_class_forward.1} parent=1 // pred_check
      _
    $region67: #{roberta_class_forward.1} parent=1 // pred_check_branch
      %59 = sbr.rel (0) target = $region69
    $region68: #{roberta_class_forward.1} parent=1 // pred_region
      _
    $region69: #{roberta_class_forward.1} parent=1 // pred_fallthru
      _
    // Predicated region
    $region70: #{roberta_class_forward.1} parent=1 // pred_check
      _
    $region71: #{roberta_class_forward.1} parent=1 // pred_check_branch
      %61 = sbr.rel (0) target = $region73
    $region72: #{roberta_class_forward.1} parent=1 // pred_region
      _
    $region73: #{roberta_class_forward.1} parent=1 // pred_fallthru
      _
    // Predicated region
    $region74: #{roberta_class_forward.1} parent=1 // pred_check
      _
    $region75: #{roberta_class_forward.1} parent=1 // pred_check_branch
      %63 = sbr.rel (0) target = $region77
    $region76: #{roberta_class_forward.1} parent=1 // pred_region
      _
    $region77: #{roberta_class_forward.1} parent=1 // pred_fallthru
      _
    // Predicated region
    $region78: #{roberta_class_forward.1} parent=1 // pred_check
      _
    $region79: #{roberta_class_forward.1} parent=1 // pred_check_branch
      %65 = sbr.rel (0) target = $region81
    $region80: #{roberta_class_forward.1} parent=1 // pred_region
      _
    $region81: #{roberta_class_forward.1} parent=1 // pred_fallthru
      _
    %v67 = vld [vmem:[%s0] sm:$0xff]
    %v68 = vld [vmem:[%s0 + $0x8] sm:$0xff]
    %v69 = vld [vmem:[%s2] sm:$0x1]
    %v70 = vld [vmem:[%s3] sm:$0x1]
    %vm71 = vcmask 523264
    %v72 = vsel %vm71, %v67, 0.0
    %73 = vadd.xlane.f32.xlu0 %v72
    %v74 = vpop.xlane.xlu0 %73
    %v75 = vsel %vm71, %v68, 0.0
    %76 = vadd.xlane.f32.xlu0 %v75
    %v77 = vpop.xlane.xlu0 %76
    %v78 = vrcp.pop 64.0
    %v79 = vmul.f32 %v74, %v78
    %v80 = vmul.f32 %v77, %v78
    %v81 = vsub.f32 %v67, %v79
    %v82 = vsub.f32 %v68, %v80
    %v83 = vmul.f32 %v81, %v81
    %v84 = vmul.f32 %v82, %v82
    %v85 = vsel %vm71, %v83, 0.0
    %86 = vadd.xlane.f32.xlu0 %v85
    %v87 = vpop.xlane.xlu0 %86
    %v88 = vsel %vm71, %v84, 0.0
    %89 = vadd.xlane.f32.xlu0 %v88
    %v90 = vpop.xlane.xlu0 %89
    %v91 = vmul.f32 %v87, %v78
    %v92 = vmul.f32 %v90, %v78
    %v93 = vadd.f32 %v91, 1e-05
    %v94 = vadd.f32 %v92, 1e-05
    %v95 = vrsqrt.pop %v93
    %v96 = vrsqrt.pop %v94
    %v97 = vmul.f32 %v81, %v95
    %v98 = vmul.f32 %v82, %v96
    %v100 = vlaneseq
    %v101 = vshrl.u32 %v100, 7
    %v102 = vsub.s32 0, %v101
    %v103 = vrot.slane %v69, %v102
    %v105 = vmul.f32 %v97, %v103
    %v106 = vmul.f32 %v98, %v103
    %v108 = vlaneseq
    %v109 = vshrl.u32 %v108, 7
    %v110 = vsub.s32 0, %v109
    %v111 = vrot.slane %v70, %v110
    %v113 = vadd.f32 %v105, %v111
    %v114 = vadd.f32 %v106, %v111
    %v115 = vld [vmem:[%s1] sm:$0x3]
    %v116 = vld [vmem:[%s4] sm:$0xff]
    %v117 = vld [vmem:[%s4 + $0x8] sm:$0xff]
    %v118 = vld [vmem:[%s4 + $0x10] sm:$0xff]
    %v119 = vld [vmem:[%s4 + $0x18] sm:$0xff]
    %v120 = vld [vmem:[%s4 + $0x20] sm:$0xff]
    %v121 = vld [vmem:[%s4 + $0x28] sm:$0xff]
    %v122 = vld [vmem:[%s4 + $0x30] sm:$0xff]
    %v123 = vld [vmem:[%s4 + $0x38] sm:$0xff]
    %v124 = vpack.c.bf16 %v114, %v113
    %v125 = vld [vmem:[%s5] sm:$0x3]
    %v127 = vlaneseq
    %v128 = vshrl.u32 %v127, 7
    %v129 = vsub.s32 0, %v128
    %v130 = vrot.slane %v125, %v129
    %v131 = vlaneseq
    %v132 = vshrl.u32 %v131, 7
    %v133 = vsub.s32 1, %v132
    %v134 = vrot.slane %v125, %v133
    %v145 = vunpack.c.l.b16 %v116
    %v146 = vunpack.c.h.b16 %v116
    %v147 = vunpack.c.l.b16 %v117
    %v148 = vunpack.c.h.b16 %v117
    %v149 = vunpack.c.l.b16 %v118
    %v150 = vunpack.c.h.b16 %v118
    %v151 = vunpack.c.l.b16 %v119
    %v152 = vunpack.c.h.b16 %v119
    %v153 = vunpack.c.l.b16 %v120
    %v154 = vunpack.c.h.b16 %v120
    %v155 = vunpack.c.l.b16 %v121
    %v156 = vunpack.c.h.b16 %v121
    %v157 = vunpack.c.l.b16 %v122
    %v158 = vunpack.c.h.b16 %v122
    %v159 = vunpack.c.l.b16 %v123
    %v160 = vunpack.c.h.b16 %v123
    %v161 = vpack.c.b16 %v147, %v145
    %v162 = vpack.c.b16 %v148, %v146
    %v163 = vpack.c.b16 %v151, %v149
    %v164 = vpack.c.b16 %v152, %v150
    %v165 = vpack.c.b16 %v155, %v153
    %v166 = vpack.c.b16 %v156, %v154
    %v167 = vpack.c.b16 %v159, %v157
    %v168 = vpack.c.b16 %v160, %v158
    %v178 = vsel %vm71, %v124, 0
    %180 = vmatprep.subr.bf16.mxu0 %v162
    %181 = vmatpush1.bf16.msra.mxu0 %v161
    %182 = vmatprep.subr.bf16.mxu0 %v164
    %183 = vmatpush1.bf16.msra.mxu0 %v163
    %184 = vmatprep.subr.bf16.mxu0 %v166
    %185 = vmatpush1.bf16.msra.mxu0 %v165
    %186 = vmatprep.subr.bf16.mxu0 %v168
    %187 = vmatpush1.bf16.msra.mxu0 %v167
    %188 = vmatprep.subr.bf16.mxu0 0
    %189 = vmatpush1.bf16.msra.mxu0 0
    %190 = vmatprep.subr.bf16.mxu0 0
    %191 = vmatpush1.bf16.msra.mxu0 0
    %192 = vmatprep.subr.bf16.mxu0 0
    %193 = vmatpush1.bf16.msra.mxu0 0
    %194 = vmatprep.subr.bf16.mxu0 0
    %195 = vmatpush1.bf16.msra.mxu0 0
    %196 = vmatprep.subr.bf16.mxu0 0
    %197 = vmatpush1.bf16.msra.mxu0 0
    %198 = vmatprep.subr.bf16.mxu0 0
    %199 = vmatpush1.bf16.msra.mxu0 0
    %200 = vmatprep.subr.bf16.mxu0 0
    %201 = vmatpush1.bf16.msra.mxu0 0
    %202 = vmatprep.subr.bf16.mxu0 0
    %203 = vmatpush1.bf16.msra.mxu0 0
    %204 = vmatprep.subr.bf16.mxu0 0
    %205 = vmatpush1.bf16.msra.mxu0 0
    %206 = vmatprep.subr.bf16.mxu0 0
    %207 = vmatpush1.bf16.msra.mxu0 0
    %208 = vmatprep.subr.bf16.mxu0 0
    %209 = vmatpush1.bf16.msra.mxu0 0
    %210 = vmatprep.subr.bf16.mxu0 0
    %211 = vmatpush1.bf16.msra.mxu0 0
    %212 = vmatprep.mubr.bf16.mxu0 0
    %213 = vmatmul.mubr.bf16.gmra.mrb[0].mxu0 %v178
    %v214 = vpop.f32.mrb[0].mxu0
    %v215 = vadd.f32 %v130, %v214
    %v216 = vpop.f32.mrb[0].mxu0
    %v217 = vadd.f32 %v134, %v216
    %v218 = vpop.f32.mrb[0].mxu0
    %v219 = vadd.f32 %v130, %v218
    %v220 = vpop.f32.mrb[0].mxu0
    %v221 = vadd.f32 %v134, %v220
    %222 = vdwg.mxu0
    %223 = vst [vmem:[#allocation2] sm:$0xff] %v215
    %224 = vst.msk [vmem:[#allocation2 + $0x8] sm:$0xff] %vm71, %v217
    %225 = vst [vmem:[#allocation2 + $0x10] sm:$0xff] %v219
    %226 = vst.msk [vmem:[#allocation2 + $0x18] sm:$0xff] %vm71, %v221
    %v227 = vld [vmem:[#allocation2] sm:$0xff]
    %v228 = vld [vmem:[#allocation2 + $0x8] sm:$0xff]
    %v229 = vpack.c.bf16 %v227, %v227
    %231 = vrot.lane.b32.xlu0 %v229, 64
    %v232 = vpop.permute.xlu0 %231
    %vm233 = vcmask 130048
    %v235 = vsel %vm233, %v229, 0
    %v238 = vsel %vm233, %v232, 0
    %240 = vmatprep.subr.bf16.mxu0 0
    %241 = vmatpush1.bf16.xpose.msra.mxu0 %v238
    %242 = vmatprep.subr.bf16.mxu0 0
    %243 = vmatpush1.bf16.xpose.msra.mxu0 0
    %244 = vmatprep.subr.bf16.mxu0 0
    %245 = vmatpush1.bf16.xpose.msra.mxu0 0
    %246 = vmatprep.subr.bf16.mxu0 0
    %247 = vmatpush1.bf16.xpose.msra.mxu0 0
    %248 = vmatprep.subr.bf16.mxu0 0
    %249 = vmatpush1.bf16.xpose.msra.mxu0 0
    %250 = vmatprep.subr.bf16.mxu0 0
    %251 = vmatpush1.bf16.xpose.msra.mxu0 0
    %252 = vmatprep.subr.bf16.mxu0 0
    %253 = vmatpush1.bf16.xpose.msra.mxu0 0
    %254 = vmatprep.subr.bf16.mxu0 0
    %255 = vmatpush1.bf16.xpose.msra.mxu0 0
    %256 = vmatprep.subr.bf16.mxu0 0
    %257 = vmatpush1.bf16.xpose.msra.mxu0 0
    %258 = vmatprep.subr.bf16.mxu0 0
    %259 = vmatpush1.bf16.xpose.msra.mxu0 0
    %260 = vmatprep.subr.bf16.mxu0 0
    %261 = vmatpush1.bf16.xpose.msra.mxu0 0
    %262 = vmatprep.subr.bf16.mxu0 0
    %263 = vmatpush1.bf16.xpose.msra.mxu0 0
    %264 = vmatprep.subr.bf16.mxu0 0
    %265 = vmatpush1.bf16.xpose.msra.mxu0 0
    %266 = vmatprep.subr.bf16.mxu0 0
    %267 = vmatpush1.bf16.xpose.msra.mxu0 0
    %268 = vmatprep.subr.bf16.mxu0 0
    %269 = vmatpush1.bf16.xpose.msra.mxu0 0
    %270 = vmatprep.subr.bf16.mxu0 0
    %271 = vmatpush1.bf16.xpose.msra.mxu0 0
    %272 = vmatprep.mubr.bf16.mxu0 0
    %273 = vmatmul.mubr.bf16.gmra.mrb[0].mxu0 %v235
    %v274 = vpop.f32.mrb[0].mxu0
    %v275 = vadd.f32 0.0, %v274
    %v276 = vpop.f32.mrb[0].mxu0
    %v277 = vpop.f32.mrb[0].mxu0
    %v278 = vpop.f32.mrb[0].mxu0
    %279 = vdwg.mxu0
    %v280 = vmul.f32 %v275, 0.25
    %v281 = vlaneseq
    %v282 = vshrl.u32 %v281, 7
    %v283 = vsub.s32 0, %v282
    %v284 = vrot.slane %v115, %v283
    %v285 = vadd.f32 %v280, %v284
    %vm286 = vcmask 64512
    %v287 = vsel %vm286, %v285, -inf
    %288 = vmax.xlane.f32.xlu0 %v287
    %v289 = vpop.xlane.xlu0 %288
    %v290 = vsub.f32 %v285, %v289
    %v291 = vmul.f32 %v290, 1.442695
    %v292 = vpow.pop %v291
    %v293 = vsel %vm286, %v292, 0.0
    %294 = vadd.xlane.f32.xlu0 %v293
    %v295 = vpop.xlane.xlu0 %294
    %v296 = vrcp.pop %v295
    %v297 = vmul.f32 %v292, %v296
    %v298 = vpack.c.bf16 %v297, %v297
    %v299 = vpack.c.bf16 %v228, %v228
    %v301 = vsel %vm286, %v298, 0
    %vm303 = vcmask 1043456
    %v305 = vsel %vm303, %v299, 0
    %307 = vmatprep.subr.bf16.mxu0 0
    %308 = vmatpush1.bf16.msra.mxu0 %v305
    %309 = vmatprep.subr.bf16.mxu0 0
    %310 = vmatpush1.bf16.msra.mxu0 0
    %311 = vmatprep.subr.bf16.mxu0 0
    %312 = vmatpush1.bf16.msra.mxu0 0
    %313 = vmatprep.subr.bf16.mxu0 0
    %314 = vmatpush1.bf16.msra.mxu0 0
    %315 = vmatprep.subr.bf16.mxu0 0
    %316 = vmatpush1.bf16.msra.mxu0 0
    %317 = vmatprep.subr.bf16.mxu0 0
    %318 = vmatpush1.bf16.msra.mxu0 0
    %319 = vmatprep.subr.bf16.mxu0 0
    %320 = vmatpush1.bf16.msra.mxu0 0
    %321 = vmatprep.subr.bf16.mxu0 0
    %322 = vmatpush1.bf16.msra.mxu0 0
    %323 = vmatprep.subr.bf16.mxu0 0
    %324 = vmatpush1.bf16.msra.mxu0 0
    %325 = vmatprep.subr.bf16.mxu0 0
    %326 = vmatpush1.bf16.msra.mxu0 0
    %327 = vmatprep.subr.bf16.mxu0 0
    %328 = vmatpush1.bf16.msra.mxu0 0
    %329 = vmatprep.subr.bf16.mxu0 0
    %330 = vmatpush1.bf16.msra.mxu0 0
    %331 = vmatprep.subr.bf16.mxu0 0
    %332 = vmatpush1.bf16.msra.mxu0 0
    %333 = vmatprep.subr.bf16.mxu0 0
    %334 = vmatpush1.bf16.msra.mxu0 0
    %335 = vmatprep.subr.bf16.mxu0 0
    %336 = vmatpush1.bf16.msra.mxu0 0
    %337 = vmatprep.subr.bf16.mxu0 0
    %338 = vmatpush1.bf16.msra.mxu0 0
    %339 = vmatprep.mubr.bf16.mxu0 0
    %340 = vmatmul.mubr.bf16.gmra.mrb[0].mxu0 %v301
    %v341 = vpop.f32.mrb[0].mxu0
    %v342 = vadd.f32 0.0, %v341
    %v343 = vpop.f32.mrb[0].mxu0
    %v344 = vpop.f32.mrb[0].mxu0
    %v345 = vpop.f32.mrb[0].mxu0
    %346 = vdwg.mxu0
    %347 = vst.msk [vmem:[#allocation3] sm:$0xff] %vm233, %v342
    %v348 = vld [vmem:[#allocation2] sm:$0xff]
    %v349 = vld [vmem:[#allocation2 + $0x8] sm:$0xff]
    %v350 = vpack.c.bf16 %v348, %v348
    %352 = vrot.lane.b32.xlu0 %v350, 112
    %v353 = vpop.permute.xlu0 %352
    %354 = vrot.lane.b32.xlu0 %v350, 48
    %v355 = vpop.permute.xlu0 %354
    %v357 = vsel %vm233, %v353, 0
    %v360 = vsel %vm233, %v355, 0
    %362 = vmatprep.subr.bf16.mxu0 0
    %363 = vmatpush1.bf16.xpose.msra.mxu0 %v360
    %364 = vmatprep.subr.bf16.mxu0 0
    %365 = vmatpush1.bf16.xpose.msra.mxu0 0
    %366 = vmatprep.subr.bf16.mxu0 0
    %367 = vmatpush1.bf16.xpose.msra.mxu0 0
    %368 = vmatprep.subr.bf16.mxu0 0
    %369 = vmatpush1.bf16.xpose.msra.mxu0 0
    %370 = vmatprep.subr.bf16.mxu0 0
    %371 = vmatpush1.bf16.xpose.msra.mxu0 0
    %372 = vmatprep.subr.bf16.mxu0 0
    %373 = vmatpush1.bf16.xpose.msra.mxu0 0
    %374 = vmatprep.subr.bf16.mxu0 0
    %375 = vmatpush1.bf16.xpose.msra.mxu0 0
    %376 = vmatprep.subr.bf16.mxu0 0
    %377 = vmatpush1.bf16.xpose.msra.mxu0 0
    %378 = vmatprep.subr.bf16.mxu0 0
    %379 = vmatpush1.bf16.xpose.msra.mxu0 0
    %380 = vmatprep.subr.bf16.mxu0 0
    %381 = vmatpush1.bf16.xpose.msra.mxu0 0
    %382 = vmatprep.subr.bf16.mxu0 0
    %383 = vmatpush1.bf16.xpose.msra.mxu0 0
    %384 = vmatprep.subr.bf16.mxu0 0
    %385 = vmatpush1.bf16.xpose.msra.mxu0 0
    %386 = vmatprep.subr.bf16.mxu0 0
    %387 = vmatpush1.bf16.xpose.msra.mxu0 0
    %388 = vmatprep.subr.bf16.mxu0 0
    %389 = vmatpush1.bf16.xpose.msra.mxu0 0
    %390 = vmatprep.subr.bf16.mxu0 0
    %391 = vmatpush1.bf16.xpose.msra.mxu0 0
    %392 = vmatprep.subr.bf16.mxu0 0
    %393 = vmatpush1.bf16.xpose.msra.mxu0 0
    %394 = vmatprep.mubr.bf16.mxu0 0
    %395 = vmatmul.mubr.bf16.gmra.mrb[0].mxu0 %v357
    %v396 = vpop.f32.mrb[0].mxu0
    %v397 = vadd.f32 0.0, %v396
    %v398 = vpop.f32.mrb[0].mxu0
    %v399 = vpop.f32.mrb[0].mxu0
    %v400 = vpop.f32.mrb[0].mxu0
    %401 = vdwg.mxu0
    %v402 = vmul.f32 %v397, 0.25
    %v403 = vadd.f32 %v402, %v284
    %v404 = vsel %vm286, %v403, -inf
    %405 = vmax.xlane.f32.xlu0 %v404
    %v406 = vpop.xlane.xlu0 %405
    %v407 = vsub.f32 %v403, %v406
    %v408 = vmul.f32 %v407, 1.442695
    %v409 = vpow.pop %v408
    %v410 = vsel %vm286, %v409, 0.0
    %411 = vadd.xlane.f32.xlu0 %v410
    %v412 = vpop.xlane.xlu0 %411
    %v413 = vrcp.pop %v412
    %v414 = vmul.f32 %v409, %v413
    %v415 = vpack.c.bf16 %v414, %v414
    %v416 = vpack.c.bf16 %v349, %v349
    %418 = vrot.lane.b32.xlu0 %v416, 112
    %v419 = vpop.permute.xlu0 %418
    %v421 = vsel %vm286, %v415, 0
    %v424 = vsel %vm303, %v419, 0
    %426 = vmatprep.subr.bf16.mxu0 0
    %427 = vmatpush1.bf16.msra.mxu0 %v424
    %428 = vmatprep.subr.bf16.mxu0 0
    %429 = vmatpush1.bf16.msra.mxu0 0
    %430 = vmatprep.subr.bf16.mxu0 0
    %431 = vmatpush1.bf16.msra.mxu0 0
    %432 = vmatprep.subr.bf16.mxu0 0
    %433 = vmatpush1.bf16.msra.mxu0 0
    %434 = vmatprep.subr.bf16.mxu0 0
    %435 = vmatpush1.bf16.msra.mxu0 0
    %436 = vmatprep.subr.bf16.mxu0 0
    %437 = vmatpush1.bf16.msra.mxu0 0
    %438 = vmatprep.subr.bf16.mxu0 0
    %439 = vmatpush1.bf16.msra.mxu0 0
    %440 = vmatprep.subr.bf16.mxu0 0
    %441 = vmatpush1.bf16.msra.mxu0 0
    %442 = vmatprep.subr.bf16.mxu0 0
    %443 = vmatpush1.bf16.msra.mxu0 0
    %444 = vmatprep.subr.bf16.mxu0 0
    %445 = vmatpush1.bf16.msra.mxu0 0
    %446 = vmatprep.subr.bf16.mxu0 0
    %447 = vmatpush1.bf16.msra.mxu0 0
    %448 = vmatprep.subr.bf16.mxu0 0
    %449 = vmatpush1.bf16.msra.mxu0 0
    %450 = vmatprep.subr.bf16.mxu0 0
    %451 = vmatpush1.bf16.msra.mxu0 0
    %452 = vmatprep.subr.bf16.mxu0 0
    %453 = vmatpush1.bf16.msra.mxu0 0
    %454 = vmatprep.subr.bf16.mxu0 0
    %455 = vmatpush1.bf16.msra.mxu0 0
    %456 = vmatprep.subr.bf16.mxu0 0
    %457 = vmatpush1.bf16.msra.mxu0 0
    %458 = vmatprep.mubr.bf16.mxu0 0
    %459 = vmatmul.mubr.bf16.gmra.mrb[0].mxu0 %v421
    %v460 = vpop.f32.mrb[0].mxu0
    %v461 = vadd.f32 0.0, %v460
    %v462 = vpop.f32.mrb[0].mxu0
    %v463 = vpop.f32.mrb[0].mxu0
    %v464 = vpop.f32.mrb[0].mxu0
    %465 = vdwg.mxu0
    %467 = vrot.lane.b32.xlu0 %v461, 16
    %v468 = vpop.permute.xlu0 %467
    %vm470 = vcmask 261248
    %471 = vst.msk [vmem:[#allocation3] sm:$0xff] %vm470, %v468
    %v472 = vld [vmem:[#allocation2] sm:$0xff]
    %v473 = vld [vmem:[#allocation2 + $0x8] sm:$0xff]
    %v474 = vpack.c.bf16 %v472, %v472
    %476 = vrot.lane.b32.xlu0 %v474, 96
    %v477 = vpop.permute.xlu0 %476
    %478 = vrot.lane.b32.xlu0 %v474, 32
    %v479 = vpop.permute.xlu0 %478
    %v481 = vsel %vm233, %v477, 0
    %v484 = vsel %vm233, %v479, 0
    %486 = vmatprep.subr.bf16.mxu0 0
    %487 = vmatpush1.bf16.xpose.msra.mxu0 %v484
    %488 = vmatprep.subr.bf16.mxu0 0
    %489 = vmatpush1.bf16.xpose.msra.mxu0 0
    %490 = vmatprep.subr.bf16.mxu0 0
    %491 = vmatpush1.bf16.xpose.msra.mxu0 0
    %492 = vmatprep.subr.bf16.mxu0 0
    %493 = vmatpush1.bf16.xpose.msra.mxu0 0
    %494 = vmatprep.subr.bf16.mxu0 0
    %495 = vmatpush1.bf16.xpose.msra.mxu0 0
    %496 = vmatprep.subr.bf16.mxu0 0
    %497 = vmatpush1.bf16.xpose.msra.mxu0 0
    %498 = vmatprep.subr.bf16.mxu0 0
    %499 = vmatpush1.bf16.xpose.msra.mxu0 0
    %500 = vmatprep.subr.bf16.mxu0 0
    %501 = vmatpush1.bf16.xpose.msra.mxu0 0
    %502 = vmatprep.subr.bf16.mxu0 0
    %503 = vmatpush1.bf16.xpose.msra.mxu0 0
    %504 = vmatprep.subr.bf16.mxu0 0
    %505 = vmatpush1.bf16.xpose.msra.mxu0 0
    %506 = vmatprep.subr.bf16.mxu0 0
    %507 = vmatpush1.bf16.xpose.msra.mxu0 0
    %508 = vmatprep.subr.bf16.mxu0 0
    %509 = vmatpush1.bf16.xpose.msra.mxu0 0
    %510 = vmatprep.subr.bf16.mxu0 0
    %511 = vmatpush1.bf16.xpose.msra.mxu0 0
    %512 = vmatprep.subr.bf16.mxu0 0
    %513 = vmatpush1.bf16.xpose.msra.mxu0 0
    %514 = vmatprep.subr.bf16.mxu0 0
    %515 = vmatpush1.bf16.xpose.msra.mxu0 0
    %516 = vmatprep.subr.bf16.mxu0 0
    %517 = vmatpush1.bf16.xpose.msra.mxu0 0
    %518 = vmatprep.mubr.bf16.mxu0 0
    %519 = vmatmul.mubr.bf16.gmra.mrb[0].mxu0 %v481
    %v520 = vpop.f32.mrb[0].mxu0
    %v521 = vadd.f32 0.0, %v520
    %v522 = vpop.f32.mrb[0].mxu0
    %v523 = vpop.f32.mrb[0].mxu0
    %v524 = vpop.f32.mrb[0].mxu0
    %525 = vdwg.mxu0
    %v526 = vmul.f32 %v521, 0.25
    %v527 = vadd.f32 %v526, %v284
    %v528 = vsel %vm286, %v527, -inf
    %529 = vmax.xlane.f32.xlu0 %v528
    %v530 = vpop.xlane.xlu0 %529
    %v531 = vsub.f32 %v527, %v530
    %v532 = vmul.f32 %v531, 1.442695
    %v533 = vpow.pop %v532
    %v534 = vsel %vm286, %v533, 0.0
    %535 = vadd.xlane.f32.xlu0 %v534
    %v536 = vpop.xlane.xlu0 %535
    %v537 = vrcp.pop %v536
    %v538 = vmul.f32 %v533, %v537
    %v539 = vpack.c.bf16 %v538, %v538
    %v540 = vpack.c.bf16 %v473, %v473
    %542 = vrot.lane.b32.xlu0 %v540, 96
    %v543 = vpop.permute.xlu0 %542
    %v545 = vsel %vm286, %v539, 0
    %v548 = vsel %vm303, %v543, 0
    %550 = vmatprep.subr.bf16.mxu0 0
    %551 = vmatpush1.bf16.msra.mxu0 %v548
    %552 = vmatprep.subr.bf16.mxu0 0
    %553 = vmatpush1.bf16.msra.mxu0 0
    %554 = vmatprep.subr.bf16.mxu0 0
    %555 = vmatpush1.bf16.msra.mxu0 0
    %556 = vmatprep.subr.bf16.mxu0 0
    %557 = vmatpush1.bf16.msra.mxu0 0
    %558 = vmatprep.subr.bf16.mxu0 0
    %559 = vmatpush1.bf16.msra.mxu0 0
    %560 = vmatprep.subr.bf16.mxu0 0
    %561 = vmatpush1.bf16.msra.mxu0 0
    %562 = vmatprep.subr.bf16.mxu0 0
    %563 = vmatpush1.bf16.msra.mxu0 0
    %564 = vmatprep.subr.bf16.mxu0 0
    %565 = vmatpush1.bf16.msra.mxu0 0
    %566 = vmatprep.subr.bf16.mxu0 0
    %567 = vmatpush1.bf16.msra.mxu0 0
    %568 = vmatprep.subr.bf16.mxu0 0
    %569 = vmatpush1.bf16.msra.mxu0 0
    %570 = vmatprep.subr.bf16.mxu0 0
    %571 = vmatpush1.bf16.msra.mxu0 0
    %572 = vmatprep.subr.bf16.mxu0 0
    %573 = vmatpush1.bf16.msra.mxu0 0
    %574 = vmatprep.subr.bf16.mxu0 0
    %575 = vmatpush1.bf16.msra.mxu0 0
    %576 = vmatprep.subr.bf16.mxu0 0
    %577 = vmatpush1.bf16.msra.mxu0 0
    %578 = vmatprep.subr.bf16.mxu0 0
    %579 = vmatpush1.bf16.msra.mxu0 0
    %580 = vmatprep.subr.bf16.mxu0 0
    %581 = vmatpush1.bf16.msra.mxu0 0
    %582 = vmatprep.mubr.bf16.mxu0 0
    %583 = vmatmul.mubr.bf16.gmra.mrb[0].mxu0 %v545
    %v584 = vpop.f32.mrb[0].mxu0
    %v585 = vadd.f32 0.0, %v584
    %v586 = vpop.f32.mrb[0].mxu0
    %v587 = vpop.f32.mrb[0].mxu0
    %v588 = vpop.f32.mrb[0].mxu0
    %589 = vdwg.mxu0
    %591 = vrot.lane.b32.xlu0 %v585, 32
    %v592 = vpop.permute.xlu0 %591
    %vm594 = vcmask 392448
    %595 = vst.msk [vmem:[#allocation3] sm:$0xff] %vm594, %v592
    %v596 = vld [vmem:[#allocation2] sm:$0xff]
    %v597 = vld [vmem:[#allocation2 + $0x8] sm:$0xff]
    %v598 = vpack.c.bf16 %v596, %v596
    %600 = vrot.lane.b32.xlu0 %v598, 80
    %v601 = vpop.permute.xlu0 %600
    %602 = vrot.lane.b32.xlu0 %v598, 16
    %v603 = vpop.permute.xlu0 %602
    %v605 = vsel %vm233, %v601, 0
    %v608 = vsel %vm233, %v603, 0
    %610 = vmatprep.subr.bf16.mxu0 0
    %611 = vmatpush1.bf16.xpose.msra.mxu0 %v608
    %612 = vmatprep.subr.bf16.mxu0 0
    %613 = vmatpush1.bf16.xpose.msra.mxu0 0
    %614 = vmatprep.subr.bf16.mxu0 0
    %615 = vmatpush1.bf16.xpose.msra.mxu0 0
    %616 = vmatprep.subr.bf16.mxu0 0
    %617 = vmatpush1.bf16.xpose.msra.mxu0 0
    %618 = vmatprep.subr.bf16.mxu0 0
    %619 = vmatpush1.bf16.xpose.msra.mxu0 0
    %620 = vmatprep.subr.bf16.mxu0 0
    %621 = vmatpush1.bf16.xpose.msra.mxu0 0
    %622 = vmatprep.subr.bf16.mxu0 0
    %623 = vmatpush1.bf16.xpose.msra.mxu0 0
    %624 = vmatprep.subr.bf16.mxu0 0
    %625 = vmatpush1.bf16.xpose.msra.mxu0 0
    %626 = vmatprep.subr.bf16.mxu0 0
    %627 = vmatpush1.bf16.xpose.msra.mxu0 0
    %628 = vmatprep.subr.bf16.mxu0 0
    %629 = vmatpush1.bf16.xpose.msra.mxu0 0
    %630 = vmatprep.subr.bf16.mxu0 0
    %631 = vmatpush1.bf16.xpose.msra.mxu0 0
    %632 = vmatprep.subr.bf16.mxu0 0
    %633 = vmatpush1.bf16.xpose.msra.mxu0 0
    %634 = vmatprep.subr.bf16.mxu0 0
    %635 = vmatpush1.bf16.xpose.msra.mxu0 0
    %636 = vmatprep.subr.bf16.mxu0 0
    %637 = vmatpush1.bf16.xpose.msra.mxu0 0
    %638 = vmatprep.subr.bf16.mxu0 0
    %639 = vmatpush1.bf16.xpose.msra.mxu0 0
    %640 = vmatprep.subr.bf16.mxu0 0
    %641 = vmatpush1.bf16.xpose.msra.mxu0 0
    %642 = vmatprep.mubr.bf16.mxu0 0
    %643 = vmatmul.mubr.bf16.gmra.mrb[0].mxu0 %v605
    %v644 = vpop.f32.mrb[0].mxu0
    %v645 = vadd.f32 0.0, %v644
    %v646 = vpop.f32.mrb[0].mxu0
    %v647 = vpop.f32.mrb[0].mxu0
    %v648 = vpop.f32.mrb[0].mxu0
    %649 = vdwg.mxu0
    %v650 = vmul.f32 %v645, 0.25
    %v651 = vadd.f32 %v650, %v284
    %v652 = vsel %vm286, %v651, -inf
    %653 = vmax.xlane.f32.xlu0 %v652
    %v654 = vpop.xlane.xlu0 %653
    %v655 = vsub.f32 %v651, %v654
    %v656 = vmul.f32 %v655, 1.442695
    %v657 = vpow.pop %v656
    %v658 = vsel %vm286, %v657, 0.0
    %659 = vadd.xlane.f32.xlu0 %v658
    %v660 = vpop.xlane.xlu0 %659
    %v661 = vrcp.pop %v660
    %v662 = vmul.f32 %v657, %v661
    %v663 = vpack.c.bf16 %v662, %v662
    %v664 = vpack.c.bf16 %v597, %v597
    %666 = vrot.lane.b32.xlu0 %v664, 80
    %v667 = vpop.permute.xlu0 %666
    %v669 = vsel %vm286, %v663, 0
    %v672 = vsel %vm303, %v667, 0
    %674 = vmatprep.subr.bf16.mxu0 0
    %675 = vmatpush1.bf16.msra.mxu0 %v672
    %676 = vmatprep.subr.bf16.mxu0 0
    %677 = vmatpush1.bf16.msra.mxu0 0
    %678 = vmatprep.subr.bf16.mxu0 0
    %679 = vmatpush1.bf16.msra.mxu0 0
    %680 = vmatprep.subr.bf16.mxu0 0
    %681 = vmatpush1.bf16.msra.mxu0 0
    %682 = vmatprep.subr.bf16.mxu0 0
    %683 = vmatpush1.bf16.msra.mxu0 0
    %684 = vmatprep.subr.bf16.mxu0 0
    %685 = vmatpush1.bf16.msra.mxu0 0
    %686 = vmatprep.subr.bf16.mxu0 0
    %687 = vmatpush1.bf16.msra.mxu0 0
    %688 = vmatprep.subr.bf16.mxu0 0
    %689 = vmatpush1.bf16.msra.mxu0 0
    %690 = vmatprep.subr.bf16.mxu0 0
    %691 = vmatpush1.bf16.msra.mxu0 0
    %692 = vmatprep.subr.bf16.mxu0 0
    %693 = vmatpush1.bf16.msra.mxu0 0
    %694 = vmatprep.subr.bf16.mxu0 0
    %695 = vmatpush1.bf16.msra.mxu0 0
    %696 = vmatprep.subr.bf16.mxu0 0
    %697 = vmatpush1.bf16.msra.mxu0 0
    %698 = vmatprep.subr.bf16.mxu0 0
    %699 = vmatpush1.bf16.msra.mxu0 0
    %700 = vmatprep.subr.bf16.mxu0 0
    %701 = vmatpush1.bf16.msra.mxu0 0
    %702 = vmatprep.subr.bf16.mxu0 0
    %703 = vmatpush1.bf16.msra.mxu0 0
    %704 = vmatprep.subr.bf16.mxu0 0
    %705 = vmatpush1.bf16.msra.mxu0 0
    %706 = vmatprep.mubr.bf16.mxu0 0
    %707 = vmatmul.mubr.bf16.gmra.mrb[0].mxu0 %v669
    %v708 = vpop.f32.mrb[0].mxu0
    %v709 = vadd.f32 0.0, %v708
    %v710 = vpop.f32.mrb[0].mxu0
    %v711 = vpop.f32.mrb[0].mxu0
    %v712 = vpop.f32.mrb[0].mxu0
    %713 = vdwg.mxu0
    %715 = vrot.lane.b32.xlu0 %v709, 48
    %v716 = vpop.permute.xlu0 %715
    %vm718 = vcmask 523648
    %719 = vst.msk [vmem:[#allocation3] sm:$0xff] %vm718, %v716
    %v720 = vld [vmem:[#allocation2 + $0x10] sm:$0xff]
    %v721 = vld [vmem:[#allocation2 + $0x18] sm:$0xff]
    %v722 = vpack.c.bf16 %v720, %v720
    %724 = vrot.lane.b32.xlu0 %v722, 64
    %v725 = vpop.permute.xlu0 %724
    %v727 = vsel %vm233, %v722, 0
    %v730 = vsel %vm233, %v725, 0
    %732 = vmatprep.subr.bf16.mxu0 0
    %733 = vmatpush1.bf16.xpose.msra.mxu0 %v730
    %734 = vmatprep.subr.bf16.mxu0 0
    %735 = vmatpush1.bf16.xpose.msra.mxu0 0
    %736 = vmatprep.subr.bf16.mxu0 0
    %737 = vmatpush1.bf16.xpose.msra.mxu0 0
    %738 = vmatprep.subr.bf16.mxu0 0
    %739 = vmatpush1.bf16.xpose.msra.mxu0 0
    %740 = vmatprep.subr.bf16.mxu0 0
    %741 = vmatpush1.bf16.xpose.msra.mxu0 0
    %742 = vmatprep.subr.bf16.mxu0 0
    %743 = vmatpush1.bf16.xpose.msra.mxu0 0
    %744 = vmatprep.subr.bf16.mxu0 0
    %745 = vmatpush1.bf16.xpose.msra.mxu0 0
    %746 = vmatprep.subr.bf16.mxu0 0
    %747 = vmatpush1.bf16.xpose.msra.mxu0 0
    %748 = vmatprep.subr.bf16.mxu0 0
    %749 = vmatpush1.bf16.xpose.msra.mxu0 0
    %750 = vmatprep.subr.bf16.mxu0 0
    %751 = vmatpush1.bf16.xpose.msra.mxu0 0
    %752 = vmatprep.subr.bf16.mxu0 0
    %753 = vmatpush1.bf16.xpose.msra.mxu0 0
    %754 = vmatprep.subr.bf16.mxu0 0
    %755 = vmatpush1.bf16.xpose.msra.mxu0 0
    %756 = vmatprep.subr.bf16.mxu0 0
    %757 = vmatpush1.bf16.xpose.msra.mxu0 0
    %758 = vmatprep.subr.bf16.mxu0 0
    %759 = vmatpush1.bf16.xpose.msra.mxu0 0
    %760 = vmatprep.subr.bf16.mxu0 0
    %761 = vmatpush1.bf16.xpose.msra.mxu0 0
    %762 = vmatprep.subr.bf16.mxu0 0
    %763 = vmatpush1.bf16.xpose.msra.mxu0 0
    %764 = vmatprep.mubr.bf16.mxu0 0
    %765 = vmatmul.mubr.bf16.gmra.mrb[0].mxu0 %v727
    %v766 = vpop.f32.mrb[0].mxu0
    %v767 = vadd.f32 0.0, %v766
    %v768 = vpop.f32.mrb[0].mxu0
    %v769 = vpop.f32.mrb[0].mxu0
    %v770 = vpop.f32.mrb[0].mxu0
    %771 = vdwg.mxu0
    %v772 = vmul.f32 %v767, 0.25
    %v773 = vlaneseq
    %v774 = vshrl.u32 %v773, 7
    %v775 = vsub.s32 1, %v774
    %v776 = vrot.slane %v115, %v775
    %v777 = vadd.f32 %v772, %v776
    %v778 = vsel %vm286, %v777, -inf
    %779 = vmax.xlane.f32.xlu0 %v778
    %v780 = vpop.xlane.xlu0 %779
    %v781 = vsub.f32 %v777, %v780
    %v782 = vmul.f32 %v781, 1.442695
    %v783 = vpow.pop %v782
    %v784 = vsel %vm286, %v783, 0.0
    %785 = vadd.xlane.f32.xlu0 %v784
    %v786 = vpop.xlane.xlu0 %785
    %v787 = vrcp.pop %v786
    %v788 = vmul.f32 %v783, %v787
    %v789 = vpack.c.bf16 %v788, %v788
    %v790 = vpack.c.bf16 %v721, %v721
    %v792 = vsel %vm286, %v789, 0
    %v795 = vsel %vm303, %v790, 0
    %797 = vmatprep.subr.bf16.mxu0 0
    %798 = vmatpush1.bf16.msra.mxu0 %v795
    %799 = vmatprep.subr.bf16.mxu0 0
    %800 = vmatpush1.bf16.msra.mxu0 0
    %801 = vmatprep.subr.bf16.mxu0 0
    %802 = vmatpush1.bf16.msra.mxu0 0
    %803 = vmatprep.subr.bf16.mxu0 0
    %804 = vmatpush1.bf16.msra.mxu0 0
    %805 = vmatprep.subr.bf16.mxu0 0
    %806 = vmatpush1.bf16.msra.mxu0 0
    %807 = vmatprep.subr.bf16.mxu0 0
    %808 = vmatpush1.bf16.msra.mxu0 0
    %809 = vmatprep.subr.bf16.mxu0 0
    %810 = vmatpush1.bf16.msra.mxu0 0
    %811 = vmatprep.subr.bf16.mxu0 0
    %812 = vmatpush1.bf16.msra.mxu0 0
    %813 = vmatprep.subr.bf16.mxu0 0
    %814 = vmatpush1.bf16.msra.mxu0 0
    %815 = vmatprep.subr.bf16.mxu0 0
    %816 = vmatpush1.bf16.msra.mxu0 0
    %817 = vmatprep.subr.bf16.mxu0 0
    %818 = vmatpush1.bf16.msra.mxu0 0
    %819 = vmatprep.subr.bf16.mxu0 0
    %820 = vmatpush1.bf16.msra.mxu0 0
    %821 = vmatprep.subr.bf16.mxu0 0
    %822 = vmatpush1.bf16.msra.mxu0 0
    %823 = vmatprep.subr.bf16.mxu0 0
    %824 = vmatpush1.bf16.msra.mxu0 0
    %825 = vmatprep.subr.bf16.mxu0 0
    %826 = vmatpush1.bf16.msra.mxu0 0
    %827 = vmatprep.subr.bf16.mxu0 0
    %828 = vmatpush1.bf16.msra.mxu0 0
    %829 = vmatprep.mubr.bf16.mxu0 0
    %830 = vmatmul.mubr.bf16.gmra.mrb[0].mxu0 %v792
    %v831 = vpop.f32.mrb[0].mxu0
    %v832 = vadd.f32 0.0, %v831
    %v833 = vpop.f32.mrb[0].mxu0
    %v834 = vpop.f32.mrb[0].mxu0
    %v835 = vpop.f32.mrb[0].mxu0
    %836 = vdwg.mxu0
    %837 = vst.msk [vmem:[#allocation3 + $0x8] sm:$0xff] %vm233, %v832
    %v838 = vld [vmem:[#allocation2 + $0x10] sm:$0xff]
    %v839 = vld [vmem:[#allocation2 + $0x18] sm:$0xff]
    %v840 = vpack.c.bf16 %v838, %v838
    %842 = vrot.lane.b32.xlu0 %v840, 112
    %v843 = vpop.permute.xlu0 %842
    %844 = vrot.lane.b32.xlu0 %v840, 48
    %v845 = vpop.permute.xlu0 %844
    %v847 = vsel %vm233, %v843, 0
    %v850 = vsel %vm233, %v845, 0
    %852 = vmatprep.subr.bf16.mxu0 0
    %853 = vmatpush1.bf16.xpose.msra.mxu0 %v850
    %854 = vmatprep.subr.bf16.mxu0 0
    %855 = vmatpush1.bf16.xpose.msra.mxu0 0
    %856 = vmatprep.subr.bf16.mxu0 0
    %857 = vmatpush1.bf16.xpose.msra.mxu0 0
    %858 = vmatprep.subr.bf16.mxu0 0
    %859 = vmatpush1.bf16.xpose.msra.mxu0 0
    %860 = vmatprep.subr.bf16.mxu0 0
    %861 = vmatpush1.bf16.xpose.msra.mxu0 0
    %862 = vmatprep.subr.bf16.mxu0 0
    %863 = vmatpush1.bf16.xpose.msra.mxu0 0
    %864 = vmatprep.subr.bf16.mxu0 0
    %865 = vmatpush1.bf16.xpose.msra.mxu0 0
    %866 = vmatprep.subr.bf16.mxu0 0
    %867 = vmatpush1.bf16.xpose.msra.mxu0 0
    %868 = vmatprep.subr.bf16.mxu0 0
    %869 = vmatpush1.bf16.xpose.msra.mxu0 0
    %870 = vmatprep.subr.bf16.mxu0 0
    %871 = vmatpush1.bf16.xpose.msra.mxu0 0
    %872 = vmatprep.subr.bf16.mxu0 0
    %873 = vmatpush1.bf16.xpose.msra.mxu0 0
    %874 = vmatprep.subr.bf16.mxu0 0
    %875 = vmatpush1.bf16.xpose.msra.mxu0 0
    %876 = vmatprep.subr.bf16.mxu0 0
    %877 = vmatpush1.bf16.xpose.msra.mxu0 0
    %878 = vmatprep.subr.bf16.mxu0 0
    %879 = vmatpush1.bf16.xpose.msra.mxu0 0
    %880 = vmatprep.subr.bf16.mxu0 0
    %881 = vmatpush1.bf16.xpose.msra.mxu0 0
    %882 = vmatprep.subr.bf16.mxu0 0
    %883 = vmatpush1.bf16.xpose.msra.mxu0 0
    %884 = vmatprep.mubr.bf16.mxu0 0
    %885 = vmatmul.mubr.bf16.gmra.mrb[0].mxu0 %v847
    %v886 = vpop.f32.mrb[0].mxu0
    %v887 = vadd.f32 0.0, %v886
    %v888 = vpop.f32.mrb[0].mxu0
    %v889 = vpop.f32.mrb[0].mxu0
    %v890 = vpop.f32.mrb[0].mxu0
    %891 = vdwg.mxu0
    %v892 = vmul.f32 %v887, 0.25
    %v893 = vadd.f32 %v892, %v776
    %v894 = vsel %vm286, %v893, -inf
    %895 = vmax.xlane.f32.xlu0 %v894
    %v896 = vpop.xlane.xlu0 %895
    %v897 = vsub.f32 %v893, %v896
    %v898 = vmul.f32 %v897, 1.442695
    %v899 = vpow.pop %v898
    %v900 = vsel %vm286, %v899, 0.0
    %901 = vadd.xlane.f32.xlu0 %v900
    %v902 = vpop.xlane.xlu0 %901
    %v903 = vrcp.pop %v902
    %v904 = vmul.f32 %v899, %v903
    %v905 = vpack.c.bf16 %v904, %v904
    %v906 = vpack.c.bf16 %v839, %v839
    %908 = vrot.lane.b32.xlu0 %v906, 112
    %v909 = vpop.permute.xlu0 %908
    %v911 = vsel %vm286, %v905, 0
    %v914 = vsel %vm303, %v909, 0
    %916 = vmatprep.subr.bf16.mxu0 0
    %917 = vmatpush1.bf16.msra.mxu0 %v914
    %918 = vmatprep.subr.bf16.mxu0 0
    %919 = vmatpush1.bf16.msra.mxu0 0
    %920 = vmatprep.subr.bf16.mxu0 0
    %921 = vmatpush1.bf16.msra.mxu0 0
    %922 = vmatprep.subr.bf16.mxu0 0
    %923 = vmatpush1.bf16.msra.mxu0 0
    %924 = vmatprep.subr.bf16.mxu0 0
    %925 = vmatpush1.bf16.msra.mxu0 0
    %926 = vmatprep.subr.bf16.mxu0 0
    %927 = vmatpush1.bf16.msra.mxu0 0
    %928 = vmatprep.subr.bf16.mxu0 0
    %929 = vmatpush1.bf16.msra.mxu0 0
    %930 = vmatprep.subr.bf16.mxu0 0
    %931 = vmatpush1.bf16.msra.mxu0 0
    %932 = vmatprep.subr.bf16.mxu0 0
    %933 = vmatpush1.bf16.msra.mxu0 0
    %934 = vmatprep.subr.bf16.mxu0 0
    %935 = vmatpush1.bf16.msra.mxu0 0
    %936 = vmatprep.subr.bf16.mxu0 0
    %937 = vmatpush1.bf16.msra.mxu0 0
    %938 = vmatprep.subr.bf16.mxu0 0
    %939 = vmatpush1.bf16.msra.mxu0 0
    %940 = vmatprep.subr.bf16.mxu0 0
    %941 = vmatpush1.bf16.msra.mxu0 0
    %942 = vmatprep.subr.bf16.mxu0 0
    %943 = vmatpush1.bf16.msra.mxu0 0
    %944 = vmatprep.subr.bf16.mxu0 0
    %945 = vmatpush1.bf16.msra.mxu0 0
    %946 = vmatprep.subr.bf16.mxu0 0
    %947 = vmatpush1.bf16.msra.mxu0 0
    %948 = vmatprep.mubr.bf16.mxu0 0
    %949 = vmatmul.mubr.bf16.gmra.mrb[0].mxu0 %v911
    %v950 = vpop.f32.mrb[0].mxu0
    %v951 = vadd.f32 0.0, %v950
    %v952 = vpop.f32.mrb[0].mxu0
    %v953 = vpop.f32.mrb[0].mxu0
    %v954 = vpop.f32.mrb[0].mxu0
    %955 = vdwg.mxu0
    %957 = vrot.lane.b32.xlu0 %v951, 16
    %v958 = vpop.permute.xlu0 %957
    %960 = vst.msk [vmem:[#allocation3 + $0x8] sm:$0xff] %vm470, %v958
    %v961 = vld [vmem:[#allocation2 + $0x10] sm:$0xff]
    %v962 = vld [vmem:[#allocation2 + $0x18] sm:$0xff]
    %v963 = vpack.c.bf16 %v961, %v961
    %965 = vrot.lane.b32.xlu0 %v963, 96
    %v966 = vpop.permute.xlu0 %965
    %967 = vrot.lane.b32.xlu0 %v963, 32
    %v968 = vpop.permute.xlu0 %967
    %v970 = vsel %vm233, %v966, 0
    %v973 = vsel %vm233, %v968, 0
    %975 = vmatprep.subr.bf16.mxu0 0
    %976 = vmatpush1.bf16.xpose.msra.mxu0 %v973
    %977 = vmatprep.subr.bf16.mxu0 0
    %978 = vmatpush1.bf16.xpose.msra.mxu0 0
    %979 = vmatprep.subr.bf16.mxu0 0
    %980 = vmatpush1.bf16.xpose.msra.mxu0 0
    %981 = vmatprep.subr.bf16.mxu0 0
    %982 = vmatpush1.bf16.xpose.msra.mxu0 0
    %983 = vmatprep.subr.bf16.mxu0 0
    %984 = vmatpush1.bf16.xpose.msra.mxu0 0
    %985 = vmatprep.subr.bf16.mxu0 0
    %986 = vmatpush1.bf16.xpose.msra.mxu0 0
    %987 = vmatprep.subr.bf16.mxu0 0
    %988 = vmatpush1.bf16.xpose.msra.mxu0 0
    %989 = vmatprep.subr.bf16.mxu0 0
    %990 = vmatpush1.bf16.xpose.msra.mxu0 0
    %991 = vmatprep.subr.bf16.mxu0 0
    %992 = vmatpush1.bf16.xpose.msra.mxu0 0
    %993 = vmatprep.subr.bf16.mxu0 0
    %994 = vmatpush1.bf16.xpose.msra.mxu0 0
    %995 = vmatprep.subr.bf16.mxu0 0
    %996 = vmatpush1.bf16.xpose.msra.mxu0 0
    %997 = vmatprep.subr.bf16.mxu0 0
    %998 = vmatpush1.bf16.xpose.msra.mxu0 0
    %999 = vmatprep.subr.bf16.mxu0 0
    %1000 = vmatpush1.bf16.xpose.msra.mxu0 0
    %1001 = vmatprep.subr.bf16.mxu0 0
    %1002 = vmatpush1.bf16.xpose.msra.mxu0 0
    %1003 = vmatprep.subr.bf16.mxu0 0
    %1004 = vmatpush1.bf16.xpose.msra.mxu0 0
    %1005 = vmatprep.subr.bf16.mxu0 0
    %1006 = vmatpush1.bf16.xpose.msra.mxu0 0
    %1007 = vmatprep.mubr.bf16.mxu0 0
    %1008 = vmatmul.mubr.bf16.gmra.mrb[0].mxu0 %v970
    %v1009 = vpop.f32.mrb[0].mxu0
    %v1010 = vadd.f32 0.0, %v1009
    %v1011 = vpop.f32.mrb[0].mxu0
    %v1012 = vpop.f32.mrb[0].mxu0
    %v1013 = vpop.f32.mrb[0].mxu0
    %1014 = vdwg.mxu0
    %v1015 = vmul.f32 %v1010, 0.25
    %v1016 = vadd.f32 %v1015, %v776
    %v1017 = vsel %vm286, %v1016, -inf
    %1018 = vmax.xlane.f32.xlu0 %v1017
    %v1019 = vpop.xlane.xlu0 %1018
    %v1020 = vsub.f32 %v1016, %v1019
    %v1021 = vmul.f32 %v1020, 1.442695
    %v1022 = vpow.pop %v1021
    %v1023 = vsel %vm286, %v1022, 0.0
    %1024 = vadd.xlane.f32.xlu0 %v1023
    %v1025 = vpop.xlane.xlu0 %1024
    %v1026 = vrcp.pop %v1025
    %v1027 = vmul.f32 %v1022, %v1026
    %v1028 = vpack.c.bf16 %v1027, %v1027
    %v1029 = vpack.c.bf16 %v962, %v962
    %1031 = vrot.lane.b32.xlu0 %v1029, 96
    %v1032 = vpop.permute.xlu0 %1031
    %v1034 = vsel %vm286, %v1028, 0
    %v1037 = vsel %vm303, %v1032, 0
    %1039 = vmatprep.subr.bf16.mxu0 0
    %1040 = vmatpush1.bf16.msra.mxu0 %v1037
    %1041 = vmatprep.subr.bf16.mxu0 0
    %1042 = vmatpush1.bf16.msra.mxu0 0
    %1043 = vmatprep.subr.bf16.mxu0 0
    %1044 = vmatpush1.bf16.msra.mxu0 0
    %1045 = vmatprep.subr.bf16.mxu0 0
    %1046 = vmatpush1.bf16.msra.mxu0 0
    %1047 = vmatprep.subr.bf16.mxu0 0
    %1048 = vmatpush1.bf16.msra.mxu0 0
    %1049 = vmatprep.subr.bf16.mxu0 0
    %1050 = vmatpush1.bf16.msra.mxu0 0
    %1051 = vmatprep.subr.bf16.mxu0 0
    %1052 = vmatpush1.bf16.msra.mxu0 0
    %1053 = vmatprep.subr.bf16.mxu0 0
    %1054 = vmatpush1.bf16.msra.mxu0 0
    %1055 = vmatprep.subr.bf16.mxu0 0
    %1056 = vmatpush1.bf16.msra.mxu0 0
    %1057 = vmatprep.subr.bf16.mxu0 0
    %1058 = vmatpush1.bf16.msra.mxu0 0
    %1059 = vmatprep.subr.bf16.mxu0 0
    %1060 = vmatpush1.bf16.msra.mxu0 0
    %1061 = vmatprep.subr.bf16.mxu0 0
    %1062 = vmatpush1.bf16.msra.mxu0 0
    %1063 = vmatprep.subr.bf16.mxu0 0
    %1064 = vmatpush1.bf16.msra.mxu0 0
    %1065 = vmatprep.subr.bf16.mxu0 0
    %1066 = vmatpush1.bf16.msra.mxu0 0
    %1067 = vmatprep.subr.bf16.mxu0 0
    %1068 = vmatpush1.bf16.msra.mxu0 0
    %1069 = vmatprep.subr.bf16.mxu0 0
    %1070 = vmatpush1.bf16.msra.mxu0 0
    %1071 = vmatprep.mubr.bf16.mxu0 0
    %1072 = vmatmul.mubr.bf16.gmra.mrb[0].mxu0 %v1034
    %v1073 = vpop.f32.mrb[0].mxu0
    %v1074 = vadd.f32 0.0, %v1073
    %v1075 = vpop.f32.mrb[0].mxu0
    %v1076 = vpop.f32.mrb[0].mxu0
    %v1077 = vpop.f32.mrb[0].mxu0
    %1078 = vdwg.mxu0
    %1080 = vrot.lane.b32.xlu0 %v1074, 32
    %v1081 = vpop.permute.xlu0 %1080
    %1083 = vst.msk [vmem:[#allocation3 + $0x8] sm:$0xff] %vm594, %v1081
    %v1084 = vld [vmem:[#allocation2 + $0x10] sm:$0xff]
    %v1085 = vld [vmem:[#allocation2 + $0x18] sm:$0xff]
    %v1086 = vpack.c.bf16 %v1084, %v1084
    %1088 = vrot.lane.b32.xlu0 %v1086, 80
    %v1089 = vpop.permute.xlu0 %1088
    %1090 = vrot.lane.b32.xlu0 %v1086, 16
    %v1091 = vpop.permute.xlu0 %1090
    %v1093 = vsel %vm233, %v1089, 0
    %v1096 = vsel %vm233, %v1091, 0
    %1098 = vmatprep.subr.bf16.mxu0 0
    %1099 = vmatpush1.bf16.xpose.msra.mxu0 %v1096
    %1100 = vmatprep.subr.bf16.mxu0 0
    %1101 = vmatpush1.bf16.xpose.msra.mxu0 0
    %1102 = vmatprep.subr.bf16.mxu0 0
    %1103 = vmatpush1.bf16.xpose.msra.mxu0 0
    %1104 = vmatprep.subr.bf16.mxu0 0
    %1105 = vmatpush1.bf16.xpose.msra.mxu0 0
    %1106 = vmatprep.subr.bf16.mxu0 0
    %1107 = vmatpush1.bf16.xpose.msra.mxu0 0
    %1108 = vmatprep.subr.bf16.mxu0 0
    %1109 = vmatpush1.bf16.xpose.msra.mxu0 0
    %1110 = vmatprep.subr.bf16.mxu0 0
    %1111 = vmatpush1.bf16.xpose.msra.mxu0 0
    %1112 = vmatprep.subr.bf16.mxu0 0
    %1113 = vmatpush1.bf16.xpose.msra.mxu0 0
    %1114 = vmatprep.subr.bf16.mxu0 0
    %1115 = vmatpush1.bf16.xpose.msra.mxu0 0
    %1116 = vmatprep.subr.bf16.mxu0 0
    %1117 = vmatpush1.bf16.xpose.msra.mxu0 0
    %1118 = vmatprep.subr.bf16.mxu0 0
    %1119 = vmatpush1.bf16.xpose.msra.mxu0 0
    %1120 = vmatprep.subr.bf16.mxu0 0
    %1121 = vmatpush1.bf16.xpose.msra.mxu0 0
    %1122 = vmatprep.subr.bf16.mxu0 0
    %1123 = vmatpush1.bf16.xpose.msra.mxu0 0
    %1124 = vmatprep.subr.bf16.mxu0 0
    %1125 = vmatpush1.bf16.xpose.msra.mxu0 0
    %1126 = vmatprep.subr.bf16.mxu0 0
    %1127 = vmatpush1.bf16.xpose.msra.mxu0 0
    %1128 = vmatprep.subr.bf16.mxu0 0
    %1129 = vmatpush1.bf16.xpose.msra.mxu0 0
    %1130 = vmatprep.mubr.bf16.mxu0 0
    %1131 = vmatmul.mubr.bf16.gmra.mrb[0].mxu0 %v1093
    %v1132 = vpop.f32.mrb[0].mxu0
    %v1133 = vadd.f32 0.0, %v1132
    %v1134 = vpop.f32.mrb[0].mxu0
    %v1135 = vpop.f32.mrb[0].mxu0
    %v1136 = vpop.f32.mrb[0].mxu0
    %1137 = vdwg.mxu0
    %v1138 = vmul.f32 %v1133, 0.25
    %v1139 = vadd.f32 %v1138, %v776
    %v1140 = vsel %vm286, %v1139, -inf
    %1141 = vmax.xlane.f32.xlu0 %v1140
    %v1142 = vpop.xlane.xlu0 %1141
    %v1143 = vsub.f32 %v1139, %v1142
    %v1144 = vmul.f32 %v1143, 1.442695
    %v1145 = vpow.pop %v1144
    %v1146 = vsel %vm286, %v1145, 0.0
    %1147 = vadd.xlane.f32.xlu0 %v1146
    %v1148 = vpop.xlane.xlu0 %1147
    %v1149 = vrcp.pop %v1148
    %v1150 = vmul.f32 %v1145, %v1149
    %v1151 = vpack.c.bf16 %v1150, %v1150
    %v1152 = vpack.c.bf16 %v1085, %v1085
    %1154 = vrot.lane.b32.xlu0 %v1152, 80
    %v1155 = vpop.permute.xlu0 %1154
    %v1157 = vsel %vm286, %v1151, 0
    %v1160 = vsel %vm303, %v1155, 0
    %1162 = vmatprep.subr.bf16.mxu0 0
    %1163 = vmatpush1.bf16.msra.mxu0 %v1160
    %1164 = vmatprep.subr.bf16.mxu0 0
    %1165 = vmatpush1.bf16.msra.mxu0 0
    %1166 = vmatprep.subr.bf16.mxu0 0
    %1167 = vmatpush1.bf16.msra.mxu0 0
    %1168 = vmatprep.subr.bf16.mxu0 0
    %1169 = vmatpush1.bf16.msra.mxu0 0
    %1170 = vmatprep.subr.bf16.mxu0 0
    %1171 = vmatpush1.bf16.msra.mxu0 0
    %1172 = vmatprep.subr.bf16.mxu0 0
    %1173 = vmatpush1.bf16.msra.mxu0 0
    %1174 = vmatprep.subr.bf16.mxu0 0
    %1175 = vmatpush1.bf16.msra.mxu0 0
    %1176 = vmatprep.subr.bf16.mxu0 0
    %1177 = vmatpush1.bf16.msra.mxu0 0
    %1178 = vmatprep.subr.bf16.mxu0 0
    %1179 = vmatpush1.bf16.msra.mxu0 0
    %1180 = vmatprep.subr.bf16.mxu0 0
    %1181 = vmatpush1.bf16.msra.mxu0 0
    %1182 = vmatprep.subr.bf16.mxu0 0
    %1183 = vmatpush1.bf16.msra.mxu0 0
    %1184 = vmatprep.subr.bf16.mxu0 0
    %1185 = vmatpush1.bf16.msra.mxu0 0
    %1186 = vmatprep.subr.bf16.mxu0 0
    %1187 = vmatpush1.bf16.msra.mxu0 0
    %1188 = vmatprep.subr.bf16.mxu0 0
    %1189 = vmatpush1.bf16.msra.mxu0 0
    %1190 = vmatprep.subr.bf16.mxu0 0
    %1191 = vmatpush1.bf16.msra.mxu0 0
    %1192 = vmatprep.subr.bf16.mxu0 0
    %1193 = vmatpush1.bf16.msra.mxu0 0
    %1194 = vmatprep.mubr.bf16.mxu0 0
    %1195 = vmatmul.mubr.bf16.gmra.mrb[0].mxu0 %v1157
    %v1196 = vpop.f32.mrb[0].mxu0
    %v1197 = vadd.f32 0.0, %v1196
    %v1198 = vpop.f32.mrb[0].mxu0
    %v1199 = vpop.f32.mrb[0].mxu0
    %v1200 = vpop.f32.mrb[0].mxu0
    %1201 = vdwg.mxu0
    %1203 = vrot.lane.b32.xlu0 %v1197, 48
    %v1204 = vpop.permute.xlu0 %1203
    %1206 = vst.msk [vmem:[#allocation3 + $0x8] sm:$0xff] %vm718, %v1204
    %v1207 = vld [vmem:[#allocation3] sm:$0xff]
    %v1208 = vld [vmem:[#allocation3 + $0x8] sm:$0xff]
    %v1209 = vld [vmem:[%s6] sm:$0xf]
    %v1210 = vld [vmem:[%s6 + $0x4] sm:$0xf]
    %v1211 = vld [vmem:[%s6 + $0x8] sm:$0xf]
    %v1212 = vld [vmem:[%s6 + $0xc] sm:$0xf]
    %v1213 = vld [vmem:[%s6 + $0x10] sm:$0xf]
    %v1214 = vld [vmem:[%s6 + $0x14] sm:$0xf]
    %v1215 = vld [vmem:[%s6 + $0x18] sm:$0xf]
    %v1216 = vld [vmem:[%s6 + $0x1c] sm:$0xf]
    %v1217 = vpack.c.bf16 %v1208, %v1207
    %v1218 = vld [vmem:[%s7] sm:$0x1]
    %v1220 = vlaneseq
    %v1221 = vshrl.u32 %v1220, 7
    %v1222 = vsub.s32 0, %v1221
    %v1223 = vrot.slane %v1218, %v1222
    %v1233 = vunpack.c.l.b16 %v1209
    %v1234 = vunpack.c.l.b16 %v1210
    %v1235 = vunpack.c.l.b16 %v1211
    %v1236 = vunpack.c.l.b16 %v1212
    %v1237 = vunpack.c.l.b16 %v1213
    %v1238 = vunpack.c.l.b16 %v1214
    %v1239 = vunpack.c.l.b16 %v1215
    %v1240 = vunpack.c.l.b16 %v1216
    %v1241 = vpack.c.b16 %v1234, %v1233
    %v1242 = vpack.c.b16 %v1236, %v1235
    %v1243 = vpack.c.b16 %v1238, %v1237
    %v1244 = vpack.c.b16 %v1240, %v1239
    %v1250 = vsel %vm71, %v1217, 0
    %1252 = vmatprep.subr.bf16.mxu0 0
    %1253 = vmatpush1.bf16.msra.mxu0 %v1241
    %1254 = vmatprep.subr.bf16.mxu0 0
    %1255 = vmatpush1.bf16.msra.mxu0 %v1242
    %1256 = vmatprep.subr.bf16.mxu0 0
    %1257 = vmatpush1.bf16.msra.mxu0 %v1243
    %1258 = vmatprep.subr.bf16.mxu0 0
    %1259 = vmatpush1.bf16.msra.mxu0 %v1244
    %1260 = vmatprep.subr.bf16.mxu0 0
    %1261 = vmatpush1.bf16.msra.mxu0 0
    %1262 = vmatprep.subr.bf16.mxu0 0
    %1263 = vmatpush1.bf16.msra.mxu0 0
    %1264 = vmatprep.subr.bf16.mxu0 0
    %1265 = vmatpush1.bf16.msra.mxu0 0
    %1266 = vmatprep.subr.bf16.mxu0 0
    %1267 = vmatpush1.bf16.msra.mxu0 0
    %1268 = vmatprep.subr.bf16.mxu0 0
    %1269 = vmatpush1.bf16.msra.mxu0 0
    %1270 = vmatprep.subr.bf16.mxu0 0
    %1271 = vmatpush1.bf16.msra.mxu0 0
    %1272 = vmatprep.subr.bf16.mxu0 0
    %1273 = vmatpush1.bf16.msra.mxu0 0
    %1274 = vmatprep.subr.bf16.mxu0 0
    %1275 = vmatpush1.bf16.msra.mxu0 0
    %1276 = vmatprep.subr.bf16.mxu0 0
    %1277 = vmatpush1.bf16.msra.mxu0 0
    %1278 = vmatprep.subr.bf16.mxu0 0
    %1279 = vmatpush1.bf16.msra.mxu0 0
    %1280 = vmatprep.subr.bf16.mxu0 0
    %1281 = vmatpush1.bf16.msra.mxu0 0
    %1282 = vmatprep.subr.bf16.mxu0 0
    %1283 = vmatpush1.bf16.msra.mxu0 0
    %1284 = vmatprep.mubr.bf16.mxu0 0
    %1285 = vmatmul.mubr.bf16.gmra.mrb[0].mxu0 %v1250
    %v1286 = vpop.f32.mrb[0].mxu0
    %v1287 = vadd.f32 %v1223, %v1286
    %v1288 = vpop.f32.mrb[0].mxu0
    %v1289 = vpop.f32.mrb[0].mxu0
    %v1290 = vadd.f32 %v1223, %v1289
    %v1291 = vpop.f32.mrb[0].mxu0
    %1292 = vdwg.mxu0
    %v1293 = vadd.f32 %v113, %v1287
    %v1294 = vadd.f32 %v114, %v1290
    %v1295 = vld [vmem:[%s8] sm:$0x1]
    %v1296 = vld [vmem:[%s9] sm:$0x1]
    %v1297 = vsel %vm71, %v1293, 0.0
    %1298 = vadd.xlane.f32.xlu0 %v1297
    %v1299 = vpop.xlane.xlu0 %1298
    %v1300 = vsel %vm71, %v1294, 0.0
    %1301 = vadd.xlane.f32.xlu0 %v1300
    %v1302 = vpop.xlane.xlu0 %1301
    %v1303 = vmul.f32 %v1299, %v78
    %v1304 = vmul.f32 %v1302, %v78
    %v1305 = vsub.f32 %v1293, %v1303
    %v1306 = vsub.f32 %v1294, %v1304
    %v1307 = vmul.f32 %v1305, %v1305
    %v1308 = vmul.f32 %v1306, %v1306
    %v1309 = vsel %vm71, %v1307, 0.0
    %1310 = vadd.xlane.f32.xlu0 %v1309
    %v1311 = vpop.xlane.xlu0 %1310
    %v1312 = vsel %vm71, %v1308, 0.0
    %1313 = vadd.xlane.f32.xlu0 %v1312
    %v1314 = vpop.xlane.xlu0 %1313
    %v1315 = vmul.f32 %v1311, %v78
    %v1316 = vmul.f32 %v1314, %v78
    %v1317 = vadd.f32 %v1315, 1e-05
    %v1318 = vadd.f32 %v1316, 1e-05
    %v1319 = vrsqrt.pop %v1317
    %v1320 = vrsqrt.pop %v1318
    %v1321 = vmul.f32 %v1305, %v1319
    %v1322 = vmul.f32 %v1306, %v1320
    %v1324 = vlaneseq
    %v1325 = vshrl.u32 %v1324, 7
    %v1326 = vsub.s32 0, %v1325
    %v1327 = vrot.slane %v1295, %v1326
    %v1329 = vmul.f32 %v1321, %v1327
    %v1330 = vmul.f32 %v1322, %v1327
    %v1332 = vlaneseq
    %v1333 = vshrl.u32 %v1332, 7
    %v1334 = vsub.s32 0, %v1333
    %v1335 = vrot.slane %v1296, %v1334
    %v1337 = vadd.f32 %v1329, %v1335
    %v1338 = vadd.f32 %v1330, %v1335
    %v1339 = vld [vmem:[%s10] sm:$0xf]
    %v1340 = vld [vmem:[%s10 + $0x4] sm:$0xf]
    %v1341 = vld [vmem:[%s10 + $0x8] sm:$0xf]
    %v1342 = vld [vmem:[%s10 + $0xc] sm:$0xf]
    %v1343 = vld [vmem:[%s10 + $0x10] sm:$0xf]
    %v1344 = vld [vmem:[%s10 + $0x14] sm:$0xf]
    %v1345 = vld [vmem:[%s10 + $0x18] sm:$0xf]
    %v1346 = vld [vmem:[%s10 + $0x1c] sm:$0xf]
    %v1347 = vpack.c.bf16 %v1338, %v1337
    %v1348 = vld [vmem:[%s11] sm:$0x1]
    %v1350 = vlaneseq
    %v1351 = vshrl.u32 %v1350, 7
    %v1352 = vsub.s32 0, %v1351
    %v1353 = vrot.slane %v1348, %v1352
    %v1363 = vunpack.c.l.b16 %v1339
    %v1364 = vunpack.c.l.b16 %v1340
    %v1365 = vunpack.c.l.b16 %v1341
    %v1366 = vunpack.c.l.b16 %v1342
    %v1367 = vunpack.c.l.b16 %v1343
    %v1368 = vunpack.c.l.b16 %v1344
    %v1369 = vunpack.c.l.b16 %v1345
    %v1370 = vunpack.c.l.b16 %v1346
    %v1371 = vpack.c.b16 %v1364, %v1363
    %v1372 = vpack.c.b16 %v1366, %v1365
    %v1373 = vpack.c.b16 %v1368, %v1367
    %v1374 = vpack.c.b16 %v1370, %v1369
    %v1380 = vsel %vm71, %v1347, 0
    %1382 = vmatprep.subr.bf16.mxu0 0
    %1383 = vmatpush1.bf16.msra.mxu0 %v1371
    %1384 = vmatprep.subr.bf16.mxu0 0
    %1385 = vmatpush1.bf16.msra.mxu0 %v1372
    %1386 = vmatprep.subr.bf16.mxu0 0
    %1387 = vmatpush1.bf16.msra.mxu0 %v1373
    %1388 = vmatprep.subr.bf16.mxu0 0
    %1389 = vmatpush1.bf16.msra.mxu0 %v1374
    %1390 = vmatprep.subr.bf16.mxu0 0
    %1391 = vmatpush1.bf16.msra.mxu0 0
    %1392 = vmatprep.subr.bf16.mxu0 0
    %1393 = vmatpush1.bf16.msra.mxu0 0
    %1394 = vmatprep.subr.bf16.mxu0 0
    %1395 = vmatpush1.bf16.msra.mxu0 0
    %1396 = vmatprep.subr.bf16.mxu0 0
    %1397 = vmatpush1.bf16.msra.mxu0 0
    %1398 = vmatprep.subr.bf16.mxu0 0
    %1399 = vmatpush1.bf16.msra.mxu0 0
    %1400 = vmatprep.subr.bf16.mxu0 0
    %1401 = vmatpush1.bf16.msra.mxu0 0
    %1402 = vmatprep.subr.bf16.mxu0 0
    %1403 = vmatpush1.bf16.msra.mxu0 0
    %1404 = vmatprep.subr.bf16.mxu0 0
    %1405 = vmatpush1.bf16.msra.mxu0 0
    %1406 = vmatprep.subr.bf16.mxu0 0
    %1407 = vmatpush1.bf16.msra.mxu0 0
    %1408 = vmatprep.subr.bf16.mxu0 0
    %1409 = vmatpush1.bf16.msra.mxu0 0
    %1410 = vmatprep.subr.bf16.mxu0 0
    %1411 = vmatpush1.bf16.msra.mxu0 0
    %1412 = vmatprep.subr.bf16.mxu0 0
    %1413 = vmatpush1.bf16.msra.mxu0 0
    %1414 = vmatprep.mubr.bf16.mxu0 0
    %1415 = vmatmul.mubr.bf16.gmra.mrb[0].mxu0 %v1380
    %v1416 = vpop.f32.mrb[0].mxu0
    %v1417 = vadd.f32 %v1353, %v1416
    %v1418 = vpop.f32.mrb[0].mxu0
    %v1419 = vpop.f32.mrb[0].mxu0
    %v1420 = vadd.f32 %v1353, %v1419
    %v1421 = vpop.f32.mrb[0].mxu0
    %1422 = vdwg.mxu0
    %v1423 = vmul.f32 %v1417, 0.5
    %v1424 = vmul.f32 %v1420, 0.5
    %v1425 = vmul.f32 %v1417, 0.044715
    %v1426 = vmul.f32 %v1420, 0.044715
    %v1427 = vmul.f32 %v1425, %v1417
    %v1428 = vmul.f32 %v1426, %v1420
    %v1429 = vmul.f32 %v1427, %v1417
    %v1430 = vmul.f32 %v1428, %v1420
    %v1431 = vadd.f32 %v1417, %v1429
    %v1432 = vadd.f32 %v1420, %v1430
    %v1433 = vmul.f32 %v1431, 0.7978846
    %v1434 = vmul.f32 %v1432, 0.7978846
    %v1435 = vtanh.pop %v1433
    %v1436 = vtanh.pop %v1434
    %v1437 = vadd.f32 %v1435, 1.0
    %v1438 = vadd.f32 %v1436, 1.0
    %v1439 = vmul.f32 %v1423, %v1437
    %v1440 = vmul.f32 %v1424, %v1438
    %v1441 = vld [vmem:[%s12] sm:$0xf]
    %v1442 = vld [vmem:[%s12 + $0x4] sm:$0xf]
    %v1443 = vld [vmem:[%s12 + $0x8] sm:$0xf]
    %v1444 = vld [vmem:[%s12 + $0xc] sm:$0xf]
    %v1445 = vld [vmem:[%s12 + $0x10] sm:$0xf]
    %v1446 = vld [vmem:[%s12 + $0x14] sm:$0xf]
    %v1447 = vld [vmem:[%s12 + $0x18] sm:$0xf]
    %v1448 = vld [vmem:[%s12 + $0x1c] sm:$0xf]
    %v1449 = vld [vmem:[%s12 + $0x20] sm:$0xf]
    %v1450 = vld [vmem:[%s12 + $0x24] sm:$0xf]
    %v1451 = vld [vmem:[%s12 + $0x28] sm:$0xf]
    %v1452 = vld [vmem:[%s12 + $0x2c] sm:$0xf]
    %v1453 = vld [vmem:[%s12 + $0x30] sm:$0xf]
    %v1454 = vld [vmem:[%s12 + $0x34] sm:$0xf]
    %v1455 = vld [vmem:[%s12 + $0x38] sm:$0xf]
    %v1456 = vld [vmem:[%s12 + $0x3c] sm:$0xf]
    %v1457 = vpack.c.bf16 %v1440, %v1439
    %v1474 = vunpack.c.l.b16 %v1441
    %v1475 = vunpack.c.l.b16 %v1442
    %v1476 = vunpack.c.l.b16 %v1443
    %v1477 = vunpack.c.l.b16 %v1444
    %v1478 = vunpack.c.l.b16 %v1445
    %v1479 = vunpack.c.l.b16 %v1446
    %v1480 = vunpack.c.l.b16 %v1447
    %v1481 = vunpack.c.l.b16 %v1448
    %v1482 = vunpack.c.l.b16 %v1449
    %v1483 = vunpack.c.l.b16 %v1450
    %v1484 = vunpack.c.l.b16 %v1451
    %v1485 = vunpack.c.l.b16 %v1452
    %v1486 = vunpack.c.l.b16 %v1453
    %v1487 = vunpack.c.l.b16 %v1454
    %v1488 = vunpack.c.l.b16 %v1455
    %v1489 = vunpack.c.l.b16 %v1456
    %v1490 = vpack.c.b16 %v1475, %v1474
    %v1491 = vpack.c.b16 %v1477, %v1476
    %v1492 = vpack.c.b16 %v1479, %v1478
    %v1493 = vpack.c.b16 %v1481, %v1480
    %v1494 = vpack.c.b16 %v1483, %v1482
    %v1495 = vpack.c.b16 %v1485, %v1484
    %v1496 = vpack.c.b16 %v1487, %v1486
    %v1497 = vpack.c.b16 %v1489, %v1488
    %1506 = vmatprep.subr.bf16.mxu0 0
    %1507 = vmatpush1.bf16.msra.mxu0 %v1490
    %1508 = vmatprep.subr.bf16.mxu0 0
    %1509 = vmatpush1.bf16.msra.mxu0 %v1491
    %1510 = vmatprep.subr.bf16.mxu0 0
    %1511 = vmatpush1.bf16.msra.mxu0 %v1492
    %1512 = vmatprep.subr.bf16.mxu0 0
    %1513 = vmatpush1.bf16.msra.mxu0 %v1493
    %1514 = vmatprep.subr.bf16.mxu0 0
    %1515 = vmatpush1.bf16.msra.mxu0 %v1494
    %1516 = vmatprep.subr.bf16.mxu0 0
    %1517 = vmatpush1.bf16.msra.mxu0 %v1495
    %1518 = vmatprep.subr.bf16.mxu0 0
    %1519 = vmatpush1.bf16.msra.mxu0 %v1496
    %1520 = vmatprep.subr.bf16.mxu0 0
    %1521 = vmatpush1.bf16.msra.mxu0 %v1497
    %1522 = vmatprep.subr.bf16.mxu0 0
    %1523 = vmatpush1.bf16.msra.mxu0 0
    %1524 = vmatprep.subr.bf16.mxu0 0
    %1525 = vmatpush1.bf16.msra.mxu0 0
    %1526 = vmatprep.subr.bf16.mxu0 0
    %1527 = vmatpush1.bf16.msra.mxu0 0
    %1528 = vmatprep.subr.bf16.mxu0 0
    %1529 = vmatpush1.bf16.msra.mxu0 0
    %1530 = vmatprep.subr.bf16.mxu0 0
    %1531 = vmatpush1.bf16.msra.mxu0 0
    %1532 = vmatprep.subr.bf16.mxu0 0
    %1533 = vmatpush1.bf16.msra.mxu0 0
    %1534 = vmatprep.subr.bf16.mxu0 0
    %1535 = vmatpush1.bf16.msra.mxu0 0
    %1536 = vmatprep.subr.bf16.mxu0 0
    %1537 = vmatpush1.bf16.msra.mxu0 0
    %1538 = vmatprep.mubr.bf16.mxu0 0
    %1539 = vmatmul.mubr.bf16.gmra.mrb[0].mxu0 %v1457
    %v1540 = vpop.f32.mrb[0].mxu0
    %v1541 = vadd.f32 0.0, %v1540
    %v1542 = vpop.f32.mrb[0].mxu0
    %v1543 = vpop.f32.mrb[0].mxu0
    %v1544 = vadd.f32 0.0, %v1543
    %v1545 = vpop.f32.mrb[0].mxu0
    %1546 = vdwg.mxu0
    %v1547 = vadd.f32 %v1337, %v1541
    %v1548 = vadd.f32 %v1338, %v1544
    %v1549 = vld [vmem:[%s13] sm:$0x1]
    %v1551 = vlaneseq
    %v1552 = vshrl.u32 %v1551, 7
    %v1553 = vsub.s32 0, %v1552
    %v1554 = vrot.slane %v1549, %v1553
    %v1556 = vadd.f32 %v1547, %v1554
    %v1557 = vadd.f32 %v1548, %v1554
    %v1558 = vld [vmem:[%s14] sm:$0x1]
    %v1559 = vld [vmem:[%s15] sm:$0x1]
    %v1560 = vsel %vm71, %v1556, 0.0
    %1561 = vadd.xlane.f32.xlu0 %v1560
    %v1562 = vpop.xlane.xlu0 %1561
    %v1563 = vsel %vm71, %v1557, 0.0
    %1564 = vadd.xlane.f32.xlu0 %v1563
    %v1565 = vpop.xlane.xlu0 %1564
    %v1566 = vmul.f32 %v1562, %v78
    %v1567 = vmul.f32 %v1565, %v78
    %v1568 = vsub.f32 %v1556, %v1566
    %v1569 = vsub.f32 %v1557, %v1567
    %v1570 = vmul.f32 %v1568, %v1568
    %v1571 = vmul.f32 %v1569, %v1569
    %v1572 = vsel %vm71, %v1570, 0.0
    %1573 = vadd.xlane.f32.xlu0 %v1572
    %v1574 = vpop.xlane.xlu0 %1573
    %v1575 = vsel %vm71, %v1571, 0.0
    %1576 = vadd.xlane.f32.xlu0 %v1575
    %v1577 = vpop.xlane.xlu0 %1576
    %v1578 = vmul.f32 %v1574, %v78
    %v1579 = vmul.f32 %v1577, %v78
    %v1580 = vadd.f32 %v1578, 1e-05
    %v1581 = vadd.f32 %v1579, 1e-05
    %v1582 = vrsqrt.pop %v1580
    %v1583 = vrsqrt.pop %v1581
    %v1584 = vmul.f32 %v1568, %v1582
    %v1585 = vmul.f32 %v1569, %v1583
    %v1587 = vlaneseq
    %v1588 = vshrl.u32 %v1587, 7
    %v1589 = vsub.s32 0, %v1588
    %v1590 = vrot.slane %v1558, %v1589
    %v1592 = vmul.f32 %v1584, %v1590
    %v1593 = vmul.f32 %v1585, %v1590
    %v1595 = vlaneseq
    %v1596 = vshrl.u32 %v1595, 7
    %v1597 = vsub.s32 0, %v1596
    %v1598 = vrot.slane %v1559, %v1597
    %v1600 = vadd.f32 %v1592, %v1598
    %v1601 = vadd.f32 %v1593, %v1598
    %s1602 = scalar_lea.vmem %s4, 64
    %v1603 = vld [vmem:[%s1602] sm:$0xff]
    %v1604 = vld [vmem:[%s1602 + $0x8] sm:$0xff]
    %v1605 = vld [vmem:[%s1602 + $0x10] sm:$0xff]
    %v1606 = vld [vmem:[%s1602 + $0x18] sm:$0xff]
    %v1607 = vld [vmem:[%s1602 + $0x20] sm:$0xff]
    %v1608 = vld [vmem:[%s1602 + $0x28] sm:$0xff]
    %v1609 = vld [vmem:[%s1602 + $0x30] sm:$0xff]
    %v1610 = vld [vmem:[%s1602 + $0x38] sm:$0xff]
    %v1611 = vpack.c.bf16 %v1601, %v1600
    %s1612 = scalar_lea.vmem %s5, 2
    %v1613 = vld [vmem:[%s1612] sm:$0x3]
    %v1615 = vlaneseq
    %v1616 = vshrl.u32 %v1615, 7
    %v1617 = vsub.s32 0, %v1616
    %v1618 = vrot.slane %v1613, %v1617
    %v1619 = vlaneseq
    %v1620 = vshrl.u32 %v1619, 7
    %v1621 = vsub.s32 1, %v1620
    %v1622 = vrot.slane %v1613, %v1621
    %v1633 = vunpack.c.l.b16 %v1603
    %v1634 = vunpack.c.h.b16 %v1603
    %v1635 = vunpack.c.l.b16 %v1604
    %v1636 = vunpack.c.h.b16 %v1604
    %v1637 = vunpack.c.l.b16 %v1605
    %v1638 = vunpack.c.h.b16 %v1605
    %v1639 = vunpack.c.l.b16 %v1606
    %v1640 = vunpack.c.h.b16 %v1606
    %v1641 = vunpack.c.l.b16 %v1607
    %v1642 = vunpack.c.h.b16 %v1607
    %v1643 = vunpack.c.l.b16 %v1608
    %v1644 = vunpack.c.h.b16 %v1608
    %v1645 = vunpack.c.l.b16 %v1609
    %v1646 = vunpack.c.h.b16 %v1609
    %v1647 = vunpack.c.l.b16 %v1610
    %v1648 = vunpack.c.h.b16 %v1610
    %v1649 = vpack.c.b16 %v1635, %v1633
    %v1650 = vpack.c.b16 %v1636, %v1634
    %v1651 = vpack.c.b16 %v1639, %v1637
    %v1652 = vpack.c.b16 %v1640, %v1638
    %v1653 = vpack.c.b16 %v1643, %v1641
    %v1654 = vpack.c.b16 %v1644, %v1642
    %v1655 = vpack.c.b16 %v1647, %v1645
    %v1656 = vpack.c.b16 %v1648, %v1646
    %v1666 = vsel %vm71, %v1611, 0
    %1668 = vmatprep.subr.bf16.mxu0 %v1650
    %1669 = vmatpush1.bf16.msra.mxu0 %v1649
    %1670 = vmatprep.subr.bf16.mxu0 %v1652
    %1671 = vmatpush1.bf16.msra.mxu0 %v1651
    %1672 = vmatprep.subr.bf16.mxu0 %v1654
    %1673 = vmatpush1.bf16.msra.mxu0 %v1653
    %1674 = vmatprep.subr.bf16.mxu0 %v1656
    %1675 = vmatpush1.bf16.msra.mxu0 %v1655
    %1676 = vmatprep.subr.bf16.mxu0 0
    %1677 = vmatpush1.bf16.msra.mxu0 0
    %1678 = vmatprep.subr.bf16.mxu0 0
    %1679 = vmatpush1.bf16.msra.mxu0 0
    %1680 = vmatprep.subr.bf16.mxu0 0
    %1681 = vmatpush1.bf16.msra.mxu0 0
    %1682 = vmatprep.subr.bf16.mxu0 0
    %1683 = vmatpush1.bf16.msra.mxu0 0
    %1684 = vmatprep.subr.bf16.mxu0 0
    %1685 = vmatpush1.bf16.msra.mxu0 0
    %1686 = vmatprep.subr.bf16.mxu0 0
    %1687 = vmatpush1.bf16.msra.mxu0 0
    %1688 = vmatprep.subr.bf16.mxu0 0
    %1689 = vmatpush1.bf16.msra.mxu0 0
    %1690 = vmatprep.subr.bf16.mxu0 0
    %1691 = vmatpush1.bf16.msra.mxu0 0
    %1692 = vmatprep.subr.bf16.mxu0 0
    %1693 = vmatpush1.bf16.msra.mxu0 0
    %1694 = vmatprep.subr.bf16.mxu0 0
    %1695 = vmatpush1.bf16.msra.mxu0 0
    %1696 = vmatprep.subr.bf16.mxu0 0
    %1697 = vmatpush1.bf16.msra.mxu0 0
    %1698 = vmatprep.subr.bf16.mxu0 0
    %1699 = vmatpush1.bf16.msra.mxu0 0
    %1700 = vmatprep.mubr.bf16.mxu0 0
    %1701 = vmatmul.mubr.bf16.gmra.mrb[0].mxu0 %v1666
    %v1702 = vpop.f32.mrb[0].mxu0
    %v1703 = vadd.f32 %v1618, %v1702
    %v1704 = vpop.f32.mrb[0].mxu0
    %v1705 = vadd.f32 %v1622, %v1704
    %v1706 = vpop.f32.mrb[0].mxu0
    %v1707 = vadd.f32 %v1618, %v1706
    %v1708 = vpop.f32.mrb[0].mxu0
    %v1709 = vadd.f32 %v1622, %v1708
    %1710 = vdwg.mxu0
    %1711 = vst [vmem:[#allocation2] sm:$0xff] %v1703
    %1712 = vst.msk [vmem:[#allocation2 + $0x8] sm:$0xff] %vm71, %v1705
    %1713 = vst [vmem:[#allocation2 + $0x10] sm:$0xff] %v1707
    %1714 = vst.msk [vmem:[#allocation2 + $0x18] sm:$0xff] %vm71, %v1709
    %v1715 = vld [vmem:[#allocation2] sm:$0xff]
    %v1716 = vld [vmem:[#allocation2 + $0x8] sm:$0xff]
    %v1717 = vpack.c.bf16 %v1715, %v1715
    %1719 = vrot.lane.b32.xlu0 %v1717, 64
    %v1720 = vpop.permute.xlu0 %1719
    %v1722 = vsel %vm233, %v1717, 0
    %v1725 = vsel %vm233, %v1720, 0
    %1727 = vmatprep.subr.bf16.mxu0 0
    %1728 = vmatpush1.bf16.xpose.msra.mxu0 %v1725
    %1729 = vmatprep.subr.bf16.mxu0 0
    %1730 = vmatpush1.bf16.xpose.msra.mxu0 0
    %1731 = vmatprep.subr.bf16.mxu0 0
    %1732 = vmatpush1.bf16.xpose.msra.mxu0 0
    %1733 = vmatprep.subr.bf16.mxu0 0
    %1734 = vmatpush1.bf16.xpose.msra.mxu0 0
    %1735 = vmatprep.subr.bf16.mxu0 0
    %1736 = vmatpush1.bf16.xpose.msra.mxu0 0
    %1737 = vmatprep.subr.bf16.mxu0 0
    %1738 = vmatpush1.bf16.xpose.msra.mxu0 0
    %1739 = vmatprep.subr.bf16.mxu0 0
    %1740 = vmatpush1.bf16.xpose.msra.mxu0 0
    %1741 = vmatprep.subr.bf16.mxu0 0
    %1742 = vmatpush1.bf16.xpose.msra.mxu0 0
    %1743 = vmatprep.subr.bf16.mxu0 0
    %1744 = vmatpush1.bf16.xpose.msra.mxu0 0
    %1745 = vmatprep.subr.bf16.mxu0 0
    %1746 = vmatpush1.bf16.xpose.msra.mxu0 0
    %1747 = vmatprep.subr.bf16.mxu0 0
    %1748 = vmatpush1.bf16.xpose.msra.mxu0 0
    %1749 = vmatprep.subr.bf16.mxu0 0
    %1750 = vmatpush1.bf16.xpose.msra.mxu0 0
    %1751 = vmatprep.subr.bf16.mxu0 0
    %1752 = vmatpush1.bf16.xpose.msra.mxu0 0
    %1753 = vmatprep.subr.bf16.mxu0 0
    %1754 = vmatpush1.bf16.xpose.msra.mxu0 0
    %1755 = vmatprep.subr.bf16.mxu0 0
    %1756 = vmatpush1.bf16.xpose.msra.mxu0 0
    %1757 = vmatprep.subr.bf16.mxu0 0
    %1758 = vmatpush1.bf16.xpose.msra.mxu0 0
    %1759 = vmatprep.mubr.bf16.mxu0 0
    %1760 = vmatmul.mubr.bf16.gmra.mrb[0].mxu0 %v1722
    %v1761 = vpop.f32.mrb[0].mxu0
    %v1762 = vadd.f32 0.0, %v1761
    %v1763 = vpop.f32.mrb[0].mxu0
    %v1764 = vpop.f32.mrb[0].mxu0
    %v1765 = vpop.f32.mrb[0].mxu0
    %1766 = vdwg.mxu0
    %v1767 = vmul.f32 %v1762, 0.25
    %v1768 = vadd.f32 %v1767, %v284
    %v1769 = vsel %vm286, %v1768, -inf
    %1770 = vmax.xlane.f32.xlu0 %v1769
    %v1771 = vpop.xlane.xlu0 %1770
    %v1772 = vsub.f32 %v1768, %v1771
    %v1773 = vmul.f32 %v1772, 1.442695
    %v1774 = vpow.pop %v1773
    %v1775 = vsel %vm286, %v1774, 0.0
    %1776 = vadd.xlane.f32.xlu0 %v1775
    %v1777 = vpop.xlane.xlu0 %1776
    %v1778 = vrcp.pop %v1777
    %v1779 = vmul.f32 %v1774, %v1778
    %v1780 = vpack.c.bf16 %v1779, %v1779
    %v1781 = vpack.c.bf16 %v1716, %v1716
    %v1783 = vsel %vm286, %v1780, 0
    %v1786 = vsel %vm303, %v1781, 0
    %1788 = vmatprep.subr.bf16.mxu0 0
    %1789 = vmatpush1.bf16.msra.mxu0 %v1786
    %1790 = vmatprep.subr.bf16.mxu0 0
    %1791 = vmatpush1.bf16.msra.mxu0 0
    %1792 = vmatprep.subr.bf16.mxu0 0
    %1793 = vmatpush1.bf16.msra.mxu0 0
    %1794 = vmatprep.subr.bf16.mxu0 0
    %1795 = vmatpush1.bf16.msra.mxu0 0
    %1796 = vmatprep.subr.bf16.mxu0 0
    %1797 = vmatpush1.bf16.msra.mxu0 0
    %1798 = vmatprep.subr.bf16.mxu0 0
    %1799 = vmatpush1.bf16.msra.mxu0 0
    %1800 = vmatprep.subr.bf16.mxu0 0
    %1801 = vmatpush1.bf16.msra.mxu0 0
    %1802 = vmatprep.subr.bf16.mxu0 0
    %1803 = vmatpush1.bf16.msra.mxu0 0
    %1804 = vmatprep.subr.bf16.mxu0 0
    %1805 = vmatpush1.bf16.msra.mxu0 0
    %1806 = vmatprep.subr.bf16.mxu0 0
    %1807 = vmatpush1.bf16.msra.mxu0 0
    %1808 = vmatprep.subr.bf16.mxu0 0
    %1809 = vmatpush1.bf16.msra.mxu0 0
    %1810 = vmatprep.subr.bf16.mxu0 0
    %1811 = vmatpush1.bf16.msra.mxu0 0
    %1812 = vmatprep.subr.bf16.mxu0 0
    %1813 = vmatpush1.bf16.msra.mxu0 0
    %1814 = vmatprep.subr.bf16.mxu0 0
    %1815 = vmatpush1.bf16.msra.mxu0 0
    %1816 = vmatprep.subr.bf16.mxu0 0
    %1817 = vmatpush1.bf16.msra.mxu0 0
    %1818 = vmatprep.subr.bf16.mxu0 0
    %1819 = vmatpush1.bf16.msra.mxu0 0
    %1820 = vmatprep.mubr.bf16.mxu0 0
    %1821 = vmatmul.mubr.bf16.gmra.mrb[0].mxu0 %v1783
    %v1822 = vpop.f32.mrb[0].mxu0
    %v1823 = vadd.f32 0.0, %v1822
    %v1824 = vpop.f32.mrb[0].mxu0
    %v1825 = vpop.f32.mrb[0].mxu0
    %v1826 = vpop.f32.mrb[0].mxu0
    %1827 = vdwg.mxu0
    %1828 = vst.msk [vmem:[#allocation3] sm:$0xff] %vm233, %v1823
    %v1829 = vld [vmem:[#allocation2] sm:$0xff]
    %v1830 = vld [vmem:[#allocation2 + $0x8] sm:$0xff]
    %v1831 = vpack.c.bf16 %v1829, %v1829
    %1833 = vrot.lane.b32.xlu0 %v1831, 112
    %v1834 = vpop.permute.xlu0 %1833
    %1835 = vrot.lane.b32.xlu0 %v1831, 48
    %v1836 = vpop.permute.xlu0 %1835
    %v1838 = vsel %vm233, %v1834, 0
    %v1841 = vsel %vm233, %v1836, 0
    %1843 = vmatprep.subr.bf16.mxu0 0
    %1844 = vmatpush1.bf16.xpose.msra.mxu0 %v1841
    %1845 = vmatprep.subr.bf16.mxu0 0
    %1846 = vmatpush1.bf16.xpose.msra.mxu0 0
    %1847 = vmatprep.subr.bf16.mxu0 0
    %1848 = vmatpush1.bf16.xpose.msra.mxu0 0
    %1849 = vmatprep.subr.bf16.mxu0 0
    %1850 = vmatpush1.bf16.xpose.msra.mxu0 0
    %1851 = vmatprep.subr.bf16.mxu0 0
    %1852 = vmatpush1.bf16.xpose.msra.mxu0 0
    %1853 = vmatprep.subr.bf16.mxu0 0
    %1854 = vmatpush1.bf16.xpose.msra.mxu0 0
    %1855 = vmatprep.subr.bf16.mxu0 0
    %1856 = vmatpush1.bf16.xpose.msra.mxu0 0
    %1857 = vmatprep.subr.bf16.mxu0 0
    %1858 = vmatpush1.bf16.xpose.msra.mxu0 0
    %1859 = vmatprep.subr.bf16.mxu0 0
    %1860 = vmatpush1.bf16.xpose.msra.mxu0 0
    %1861 = vmatprep.subr.bf16.mxu0 0
    %1862 = vmatpush1.bf16.xpose.msra.mxu0 0
    %1863 = vmatprep.subr.bf16.mxu0 0
    %1864 = vmatpush1.bf16.xpose.msra.mxu0 0
    %1865 = vmatprep.subr.bf16.mxu0 0
    %1866 = vmatpush1.bf16.xpose.msra.mxu0 0
    %1867 = vmatprep.subr.bf16.mxu0 0
    %1868 = vmatpush1.bf16.xpose.msra.mxu0 0
    %1869 = vmatprep.subr.bf16.mxu0 0
    %1870 = vmatpush1.bf16.xpose.msra.mxu0 0
    %1871 = vmatprep.subr.bf16.mxu0 0
    %1872 = vmatpush1.bf16.xpose.msra.mxu0 0
    %1873 = vmatprep.subr.bf16.mxu0 0
    %1874 = vmatpush1.bf16.xpose.msra.mxu0 0
    %1875 = vmatprep.mubr.bf16.mxu0 0
    %1876 = vmatmul.mubr.bf16.gmra.mrb[0].mxu0 %v1838
    %v1877 = vpop.f32.mrb[0].mxu0
    %v1878 = vadd.f32 0.0, %v1877
    %v1879 = vpop.f32.mrb[0].mxu0
    %v1880 = vpop.f32.mrb[0].mxu0
    %v1881 = vpop.f32.mrb[0].mxu0
    %1882 = vdwg.mxu0
    %v1883 = vmul.f32 %v1878, 0.25
    %v1884 = vadd.f32 %v1883, %v284
    %v1885 = vsel %vm286, %v1884, -inf
    %1886 = vmax.xlane.f32.xlu0 %v1885
    %v1887 = vpop.xlane.xlu0 %1886
    %v1888 = vsub.f32 %v1884, %v1887
    %v1889 = vmul.f32 %v1888, 1.442695
    %v1890 = vpow.pop %v1889
    %v1891 = vsel %vm286, %v1890, 0.0
    %1892 = vadd.xlane.f32.xlu0 %v1891
    %v1893 = vpop.xlane.xlu0 %1892
    %v1894 = vrcp.pop %v1893
    %v1895 = vmul.f32 %v1890, %v1894
    %v1896 = vpack.c.bf16 %v1895, %v1895
    %v1897 = vpack.c.bf16 %v1830, %v1830
    %1899 = vrot.lane.b32.xlu0 %v1897, 112
    %v1900 = vpop.permute.xlu0 %1899
    %v1902 = vsel %vm286, %v1896, 0
    %v1905 = vsel %vm303, %v1900, 0
    %1907 = vmatprep.subr.bf16.mxu0 0
    %1908 = vmatpush1.bf16.msra.mxu0 %v1905
    %1909 = vmatprep.subr.bf16.mxu0 0
    %1910 = vmatpush1.bf16.msra.mxu0 0
    %1911 = vmatprep.subr.bf16.mxu0 0
    %1912 = vmatpush1.bf16.msra.mxu0 0
    %1913 = vmatprep.subr.bf16.mxu0 0
    %1914 = vmatpush1.bf16.msra.mxu0 0
    %1915 = vmatprep.subr.bf16.mxu0 0
    %1916 = vmatpush1.bf16.msra.mxu0 0
    %1917 = vmatprep.subr.bf16.mxu0 0
    %1918 = vmatpush1.bf16.msra.mxu0 0
    %1919 = vmatprep.subr.bf16.mxu0 0
    %1920 = vmatpush1.bf16.msra.mxu0 0
    %1921 = vmatprep.subr.bf16.mxu0 0
    %1922 = vmatpush1.bf16.msra.mxu0 0
    %1923 = vmatprep.subr.bf16.mxu0 0
    %1924 = vmatpush1.bf16.msra.mxu0 0
    %1925 = vmatprep.subr.bf16.mxu0 0
    %1926 = vmatpush1.bf16.msra.mxu0 0
    %1927 = vmatprep.subr.bf16.mxu0 0
    %1928 = vmatpush1.bf16.msra.mxu0 0
    %1929 = vmatprep.subr.bf16.mxu0 0
    %1930 = vmatpush1.bf16.msra.mxu0 0
    %1931 = vmatprep.subr.bf16.mxu0 0
    %1932 = vmatpush1.bf16.msra.mxu0 0
    %1933 = vmatprep.subr.bf16.mxu0 0
    %1934 = vmatpush1.bf16.msra.mxu0 0
    %1935 = vmatprep.subr.bf16.mxu0 0
    %1936 = vmatpush1.bf16.msra.mxu0 0
    %1937 = vmatprep.subr.bf16.mxu0 0
    %1938 = vmatpush1.bf16.msra.mxu0 0
    %1939 = vmatprep.mubr.bf16.mxu0 0
    %1940 = vmatmul.mubr.bf16.gmra.mrb[0].mxu0 %v1902
    %v1941 = vpop.f32.mrb[0].mxu0
    %v1942 = vadd.f32 0.0, %v1941
    %v1943 = vpop.f32.mrb[0].mxu0
    %v1944 = vpop.f32.mrb[0].mxu0
    %v1945 = vpop.f32.mrb[0].mxu0
    %1946 = vdwg.mxu0
    %1948 = vrot.lane.b32.xlu0 %v1942, 16
    %v1949 = vpop.permute.xlu0 %1948
    %1951 = vst.msk [vmem:[#allocation3] sm:$0xff] %vm470, %v1949
    %v1952 = vld [vmem:[#allocation2] sm:$0xff]
    %v1953 = vld [vmem:[#allocation2 + $0x8] sm:$0xff]
    %v1954 = vpack.c.bf16 %v1952, %v1952
    %1956 = vrot.lane.b32.xlu0 %v1954, 96
    %v1957 = vpop.permute.xlu0 %1956
    %1958 = vrot.lane.b32.xlu0 %v1954, 32
    %v1959 = vpop.permute.xlu0 %1958
    %v1961 = vsel %vm233, %v1957, 0
    %v1964 = vsel %vm233, %v1959, 0
    %1966 = vmatprep.subr.bf16.mxu0 0
    %1967 = vmatpush1.bf16.xpose.msra.mxu0 %v1964
    %1968 = vmatprep.subr.bf16.mxu0 0
    %1969 = vmatpush1.bf16.xpose.msra.mxu0 0
    %1970 = vmatprep.subr.bf16.mxu0 0
    %1971 = vmatpush1.bf16.xpose.msra.mxu0 0
    %1972 = vmatprep.subr.bf16.mxu0 0
    %1973 = vmatpush1.bf16.xpose.msra.mxu0 0
    %1974 = vmatprep.subr.bf16.mxu0 0
    %1975 = vmatpush1.bf16.xpose.msra.mxu0 0
    %1976 = vmatprep.subr.bf16.mxu0 0
    %1977 = vmatpush1.bf16.xpose.msra.mxu0 0
    %1978 = vmatprep.subr.bf16.mxu0 0
    %1979 = vmatpush1.bf16.xpose.msra.mxu0 0
    %1980 = vmatprep.subr.bf16.mxu0 0
    %1981 = vmatpush1.bf16.xpose.msra.mxu0 0
    %1982 = vmatprep.subr.bf16.mxu0 0
    %1983 = vmatpush1.bf16.xpose.msra.mxu0 0
    %1984 = vmatprep.subr.bf16.mxu0 0
    %1985 = vmatpush1.bf16.xpose.msra.mxu0 0
    %1986 = vmatprep.subr.bf16.mxu0 0
    %1987 = vmatpush1.bf16.xpose.msra.mxu0 0
    %1988 = vmatprep.subr.bf16.mxu0 0
    %1989 = vmatpush1.bf16.xpose.msra.mxu0 0
    %1990 = vmatprep.subr.bf16.mxu0 0
    %1991 = vmatpush1.bf16.xpose.msra.mxu0 0
    %1992 = vmatprep.subr.bf16.mxu0 0
    %1993 = vmatpush1.bf16.xpose.msra.mxu0 0
    %1994 = vmatprep.subr.bf16.mxu0 0
    %1995 = vmatpush1.bf16.xpose.msra.mxu0 0
    %1996 = vmatprep.subr.bf16.mxu0 0
    %1997 = vmatpush1.bf16.xpose.msra.mxu0 0
    %1998 = vmatprep.mubr.bf16.mxu0 0
    %1999 = vmatmul.mubr.bf16.gmra.mrb[0].mxu0 %v1961
    %v2000 = vpop.f32.mrb[0].mxu0
    %v2001 = vadd.f32 0.0, %v2000
    %v2002 = vpop.f32.mrb[0].mxu0
    %v2003 = vpop.f32.mrb[0].mxu0
    %v2004 = vpop.f32.mrb[0].mxu0
    %2005 = vdwg.mxu0
    %v2006 = vmul.f32 %v2001, 0.25
    %v2007 = vadd.f32 %v2006, %v284
    %v2008 = vsel %vm286, %v2007, -inf
    %2009 = vmax.xlane.f32.xlu0 %v2008
    %v2010 = vpop.xlane.xlu0 %2009
    %v2011 = vsub.f32 %v2007, %v2010
    %v2012 = vmul.f32 %v2011, 1.442695
    %v2013 = vpow.pop %v2012
    %v2014 = vsel %vm286, %v2013, 0.0
    %2015 = vadd.xlane.f32.xlu0 %v2014
    %v2016 = vpop.xlane.xlu0 %2015
    %v2017 = vrcp.pop %v2016
    %v2018 = vmul.f32 %v2013, %v2017
    %v2019 = vpack.c.bf16 %v2018, %v2018
    %v2020 = vpack.c.bf16 %v1953, %v1953
    %2022 = vrot.lane.b32.xlu0 %v2020, 96
    %v2023 = vpop.permute.xlu0 %2022
    %v2025 = vsel %vm286, %v2019, 0
    %v2028 = vsel %vm303, %v2023, 0
    %2030 = vmatprep.subr.bf16.mxu0 0
    %2031 = vmatpush1.bf16.msra.mxu0 %v2028
    %2032 = vmatprep.subr.bf16.mxu0 0
    %2033 = vmatpush1.bf16.msra.mxu0 0
    %2034 = vmatprep.subr.bf16.mxu0 0
    %2035 = vmatpush1.bf16.msra.mxu0 0
    %2036 = vmatprep.subr.bf16.mxu0 0
    %2037 = vmatpush1.bf16.msra.mxu0 0
    %2038 = vmatprep.subr.bf16.mxu0 0
    %2039 = vmatpush1.bf16.msra.mxu0 0
    %2040 = vmatprep.subr.bf16.mxu0 0
    %2041 = vmatpush1.bf16.msra.mxu0 0
    %2042 = vmatprep.subr.bf16.mxu0 0
    %2043 = vmatpush1.bf16.msra.mxu0 0
    %2044 = vmatprep.subr.bf16.mxu0 0
    %2045 = vmatpush1.bf16.msra.mxu0 0
    %2046 = vmatprep.subr.bf16.mxu0 0
    %2047 = vmatpush1.bf16.msra.mxu0 0
    %2048 = vmatprep.subr.bf16.mxu0 0
    %2049 = vmatpush1.bf16.msra.mxu0 0
    %2050 = vmatprep.subr.bf16.mxu0 0
    %2051 = vmatpush1.bf16.msra.mxu0 0
    %2052 = vmatprep.subr.bf16.mxu0 0
    %2053 = vmatpush1.bf16.msra.mxu0 0
    %2054 = vmatprep.subr.bf16.mxu0 0
    %2055 = vmatpush1.bf16.msra.mxu0 0
    %2056 = vmatprep.subr.bf16.mxu0 0
    %2057 = vmatpush1.bf16.msra.mxu0 0
    %2058 = vmatprep.subr.bf16.mxu0 0
    %2059 = vmatpush1.bf16.msra.mxu0 0
    %2060 = vmatprep.subr.bf16.mxu0 0
    %2061 = vmatpush1.bf16.msra.mxu0 0
    %2062 = vmatprep.mubr.bf16.mxu0 0
    %2063 = vmatmul.mubr.bf16.gmra.mrb[0].mxu0 %v2025
    %v2064 = vpop.f32.mrb[0].mxu0
    %v2065 = vadd.f32 0.0, %v2064
    %v2066 = vpop.f32.mrb[0].mxu0
    %v2067 = vpop.f32.mrb[0].mxu0
    %v2068 = vpop.f32.mrb[0].mxu0
    %2069 = vdwg.mxu0
    %2071 = vrot.lane.b32.xlu0 %v2065, 32
    %v2072 = vpop.permute.xlu0 %2071
    %2074 = vst.msk [vmem:[#allocation3] sm:$0xff] %vm594, %v2072
    %v2075 = vld [vmem:[#allocation2] sm:$0xff]
    %v2076 = vld [vmem:[#allocation2 + $0x8] sm:$0xff]
    %v2077 = vpack.c.bf16 %v2075, %v2075
    %2079 = vrot.lane.b32.xlu0 %v2077, 80
    %v2080 = vpop.permute.xlu0 %2079
    %2081 = vrot.lane.b32.xlu0 %v2077, 16
    %v2082 = vpop.permute.xlu0 %2081
    %v2084 = vsel %vm233, %v2080, 0
    %v2087 = vsel %vm233, %v2082, 0
    %2089 = vmatprep.subr.bf16.mxu0 0
    %2090 = vmatpush1.bf16.xpose.msra.mxu0 %v2087
    %2091 = vmatprep.subr.bf16.mxu0 0
    %2092 = vmatpush1.bf16.xpose.msra.mxu0 0
    %2093 = vmatprep.subr.bf16.mxu0 0
    %2094 = vmatpush1.bf16.xpose.msra.mxu0 0
    %2095 = vmatprep.subr.bf16.mxu0 0
    %2096 = vmatpush1.bf16.xpose.msra.mxu0 0
    %2097 = vmatprep.subr.bf16.mxu0 0
    %2098 = vmatpush1.bf16.xpose.msra.mxu0 0
    %2099 = vmatprep.subr.bf16.mxu0 0
    %2100 = vmatpush1.bf16.xpose.msra.mxu0 0
    %2101 = vmatprep.subr.bf16.mxu0 0
    %2102 = vmatpush1.bf16.xpose.msra.mxu0 0
    %2103 = vmatprep.subr.bf16.mxu0 0
    %2104 = vmatpush1.bf16.xpose.msra.mxu0 0
    %2105 = vmatprep.subr.bf16.mxu0 0
    %2106 = vmatpush1.bf16.xpose.msra.mxu0 0
    %2107 = vmatprep.subr.bf16.mxu0 0
    %2108 = vmatpush1.bf16.xpose.msra.mxu0 0
    %2109 = vmatprep.subr.bf16.mxu0 0
    %2110 = vmatpush1.bf16.xpose.msra.mxu0 0
    %2111 = vmatprep.subr.bf16.mxu0 0
    %2112 = vmatpush1.bf16.xpose.msra.mxu0 0
    %2113 = vmatprep.subr.bf16.mxu0 0
    %2114 = vmatpush1.bf16.xpose.msra.mxu0 0
    %2115 = vmatprep.subr.bf16.mxu0 0
    %2116 = vmatpush1.bf16.xpose.msra.mxu0 0
    %2117 = vmatprep.subr.bf16.mxu0 0
    %2118 = vmatpush1.bf16.xpose.msra.mxu0 0
    %2119 = vmatprep.subr.bf16.mxu0 0
    %2120 = vmatpush1.bf16.xpose.msra.mxu0 0
    %2121 = vmatprep.mubr.bf16.mxu0 0
    %2122 = vmatmul.mubr.bf16.gmra.mrb[0].mxu0 %v2084
    %v2123 = vpop.f32.mrb[0].mxu0
    %v2124 = vadd.f32 0.0, %v2123
    %v2125 = vpop.f32.mrb[0].mxu0
    %v2126 = vpop.f32.mrb[0].mxu0
    %v2127 = vpop.f32.mrb[0].mxu0
    %2128 = vdwg.mxu0
    %v2129 = vmul.f32 %v2124, 0.25
    %v2130 = vadd.f32 %v2129, %v284
    %v2131 = vsel %vm286, %v2130, -inf
    %2132 = vmax.xlane.f32.xlu0 %v2131
    %v2133 = vpop.xlane.xlu0 %2132
    %v2134 = vsub.f32 %v2130, %v2133
    %v2135 = vmul.f32 %v2134, 1.442695
    %v2136 = vpow.pop %v2135
    %v2137 = vsel %vm286, %v2136, 0.0
    %2138 = vadd.xlane.f32.xlu0 %v2137
    %v2139 = vpop.xlane.xlu0 %2138
    %v2140 = vrcp.pop %v2139
    %v2141 = vmul.f32 %v2136, %v2140
    %v2142 = vpack.c.bf16 %v2141, %v2141
    %v2143 = vpack.c.bf16 %v2076, %v2076
    %2145 = vrot.lane.b32.xlu0 %v2143, 80
    %v2146 = vpop.permute.xlu0 %2145
    %v2148 = vsel %vm286, %v2142, 0
    %v2151 = vsel %vm303, %v2146, 0
    %2153 = vmatprep.subr.bf16.mxu0 0
    %2154 = vmatpush1.bf16.msra.mxu0 %v2151
    %2155 = vmatprep.subr.bf16.mxu0 0
    %2156 = vmatpush1.bf16.msra.mxu0 0
    %2157 = vmatprep.subr.bf16.mxu0 0
    %2158 = vmatpush1.bf16.msra.mxu0 0
    %2159 = vmatprep.subr.bf16.mxu0 0
    %2160 = vmatpush1.bf16.msra.mxu0 0
    %2161 = vmatprep.subr.bf16.mxu0 0
    %2162 = vmatpush1.bf16.msra.mxu0 0
    %2163 = vmatprep.subr.bf16.mxu0 0
    %2164 = vmatpush1.bf16.msra.mxu0 0
    %2165 = vmatprep.subr.bf16.mxu0 0
    %2166 = vmatpush1.bf16.msra.mxu0 0
    %2167 = vmatprep.subr.bf16.mxu0 0
    %2168 = vmatpush1.bf16.msra.mxu0 0
    %2169 = vmatprep.subr.bf16.mxu0 0
    %2170 = vmatpush1.bf16.msra.mxu0 0
    %2171 = vmatprep.subr.bf16.mxu0 0
    %2172 = vmatpush1.bf16.msra.mxu0 0
    %2173 = vmatprep.subr.bf16.mxu0 0
    %2174 = vmatpush1.bf16.msra.mxu0 0
    %2175 = vmatprep.subr.bf16.mxu0 0
    %2176 = vmatpush1.bf16.msra.mxu0 0
    %2177 = vmatprep.subr.bf16.mxu0 0
    %2178 = vmatpush1.bf16.msra.mxu0 0
    %2179 = vmatprep.subr.bf16.mxu0 0
    %2180 = vmatpush1.bf16.msra.mxu0 0
    %2181 = vmatprep.subr.bf16.mxu0 0
    %2182 = vmatpush1.bf16.msra.mxu0 0
    %2183 = vmatprep.subr.bf16.mxu0 0
    %2184 = vmatpush1.bf16.msra.mxu0 0
    %2185 = vmatprep.mubr.bf16.mxu0 0
    %2186 = vmatmul.mubr.bf16.gmra.mrb[0].mxu0 %v2148
    %v2187 = vpop.f32.mrb[0].mxu0
    %v2188 = vadd.f32 0.0, %v2187
    %v2189 = vpop.f32.mrb[0].mxu0
    %v2190 = vpop.f32.mrb[0].mxu0
    %v2191 = vpop.f32.mrb[0].mxu0
    %2192 = vdwg.mxu0
    %2194 = vrot.lane.b32.xlu0 %v2188, 48
    %v2195 = vpop.permute.xlu0 %2194
    %2197 = vst.msk [vmem:[#allocation3] sm:$0xff] %vm718, %v2195
    %v2198 = vld [vmem:[#allocation2 + $0x10] sm:$0xff]
    %v2199 = vld [vmem:[#allocation2 + $0x18] sm:$0xff]
    %v2200 = vpack.c.bf16 %v2198, %v2198
    %2202 = vrot.lane.b32.xlu0 %v2200, 64
    %v2203 = vpop.permute.xlu0 %2202
    %v2205 = vsel %vm233, %v2200, 0
    %v2208 = vsel %vm233, %v2203, 0
    %2210 = vmatprep.subr.bf16.mxu0 0
    %2211 = vmatpush1.bf16.xpose.msra.mxu0 %v2208
    %2212 = vmatprep.subr.bf16.mxu0 0
    %2213 = vmatpush1.bf16.xpose.msra.mxu0 0
    %2214 = vmatprep.subr.bf16.mxu0 0
    %2215 = vmatpush1.bf16.xpose.msra.mxu0 0
    %2216 = vmatprep.subr.bf16.mxu0 0
    %2217 = vmatpush1.bf16.xpose.msra.mxu0 0
    %2218 = vmatprep.subr.bf16.mxu0 0
    %2219 = vmatpush1.bf16.xpose.msra.mxu0 0
    %2220 = vmatprep.subr.bf16.mxu0 0
    %2221 = vmatpush1.bf16.xpose.msra.mxu0 0
    %2222 = vmatprep.subr.bf16.mxu0 0
    %2223 = vmatpush1.bf16.xpose.msra.mxu0 0
    %2224 = vmatprep.subr.bf16.mxu0 0
    %2225 = vmatpush1.bf16.xpose.msra.mxu0 0
    %2226 = vmatprep.subr.bf16.mxu0 0
    %2227 = vmatpush1.bf16.xpose.msra.mxu0 0
    %2228 = vmatprep.subr.bf16.mxu0 0
    %2229 = vmatpush1.bf16.xpose.msra.mxu0 0
    %2230 = vmatprep.subr.bf16.mxu0 0
    %2231 = vmatpush1.bf16.xpose.msra.mxu0 0
    %2232 = vmatprep.subr.bf16.mxu0 0
    %2233 = vmatpush1.bf16.xpose.msra.mxu0 0
    %2234 = vmatprep.subr.bf16.mxu0 0
    %2235 = vmatpush1.bf16.xpose.msra.mxu0 0
    %2236 = vmatprep.subr.bf16.mxu0 0
    %2237 = vmatpush1.bf16.xpose.msra.mxu0 0
    %2238 = vmatprep.subr.bf16.mxu0 0
    %2239 = vmatpush1.bf16.xpose.msra.mxu0 0
    %2240 = vmatprep.subr.bf16.mxu0 0
    %2241 = vmatpush1.bf16.xpose.msra.mxu0 0
    %2242 = vmatprep.mubr.bf16.mxu0 0
    %2243 = vmatmul.mubr.bf16.gmra.mrb[0].mxu0 %v2205
    %v2244 = vpop.f32.mrb[0].mxu0
    %v2245 = vadd.f32 0.0, %v2244
    %v2246 = vpop.f32.mrb[0].mxu0
    %v2247 = vpop.f32.mrb[0].mxu0
    %v2248 = vpop.f32.mrb[0].mxu0
    %2249 = vdwg.mxu0
    %v2250 = vmul.f32 %v2245, 0.25
    %v2251 = vadd.f32 %v2250, %v776
    %v2252 = vsel %vm286, %v2251, -inf
    %2253 = vmax.xlane.f32.xlu0 %v2252
    %v2254 = vpop.xlane.xlu0 %2253
    %v2255 = vsub.f32 %v2251, %v2254
    %v2256 = vmul.f32 %v2255, 1.442695
    %v2257 = vpow.pop %v2256
    %v2258 = vsel %vm286, %v2257, 0.0
    %2259 = vadd.xlane.f32.xlu0 %v2258
    %v2260 = vpop.xlane.xlu0 %2259
    %v2261 = vrcp.pop %v2260
    %v2262 = vmul.f32 %v2257, %v2261
    %v2263 = vpack.c.bf16 %v2262, %v2262
    %v2264 = vpack.c.bf16 %v2199, %v2199
    %v2266 = vsel %vm286, %v2263, 0
    %v2269 = vsel %vm303, %v2264, 0
    %2271 = vmatprep.subr.bf16.mxu0 0
    %2272 = vmatpush1.bf16.msra.mxu0 %v2269
    %2273 = vmatprep.subr.bf16.mxu0 0
    %2274 = vmatpush1.bf16.msra.mxu0 0
    %2275 = vmatprep.subr.bf16.mxu0 0
    %2276 = vmatpush1.bf16.msra.mxu0 0
    %2277 = vmatprep.subr.bf16.mxu0 0
    %2278 = vmatpush1.bf16.msra.mxu0 0
    %2279 = vmatprep.subr.bf16.mxu0 0
    %2280 = vmatpush1.bf16.msra.mxu0 0
    %2281 = vmatprep.subr.bf16.mxu0 0
    %2282 = vmatpush1.bf16.msra.mxu0 0
    %2283 = vmatprep.subr.bf16.mxu0 0
    %2284 = vmatpush1.bf16.msra.mxu0 0
    %2285 = vmatprep.subr.bf16.mxu0 0
    %2286 = vmatpush1.bf16.msra.mxu0 0
    %2287 = vmatprep.subr.bf16.mxu0 0
    %2288 = vmatpush1.bf16.msra.mxu0 0
    %2289 = vmatprep.subr.bf16.mxu0 0
    %2290 = vmatpush1.bf16.msra.mxu0 0
    %2291 = vmatprep.subr.bf16.mxu0 0
    %2292 = vmatpush1.bf16.msra.mxu0 0
    %2293 = vmatprep.subr.bf16.mxu0 0
    %2294 = vmatpush1.bf16.msra.mxu0 0
    %2295 = vmatprep.subr.bf16.mxu0 0
    %2296 = vmatpush1.bf16.msra.mxu0 0
    %2297 = vmatprep.subr.bf16.mxu0 0
    %2298 = vmatpush1.bf16.msra.mxu0 0
    %2299 = vmatprep.subr.bf16.mxu0 0
    %2300 = vmatpush1.bf16.msra.mxu0 0
    %2301 = vmatprep.subr.bf16.mxu0 0
    %2302 = vmatpush1.bf16.msra.mxu0 0
    %2303 = vmatprep.mubr.bf16.mxu0 0
    %2304 = vmatmul.mubr.bf16.gmra.mrb[0].mxu0 %v2266
    %v2305 = vpop.f32.mrb[0].mxu0
    %v2306 = vadd.f32 0.0, %v2305
    %v2307 = vpop.f32.mrb[0].mxu0
    %v2308 = vpop.f32.mrb[0].mxu0
    %v2309 = vpop.f32.mrb[0].mxu0
    %2310 = vdwg.mxu0
    %2311 = vst.msk [vmem:[#allocation3 + $0x8] sm:$0xff] %vm233, %v2306
    %v2312 = vld [vmem:[#allocation2 + $0x10] sm:$0xff]
    %v2313 = vld [vmem:[#allocation2 + $0x18] sm:$0xff]
    %v2314 = vpack.c.bf16 %v2312, %v2312
    %2316 = vrot.lane.b32.xlu0 %v2314, 112
    %v2317 = vpop.permute.xlu0 %2316
    %2318 = vrot.lane.b32.xlu0 %v2314, 48
    %v2319 = vpop.permute.xlu0 %2318
    %v2321 = vsel %vm233, %v2317, 0
    %v2324 = vsel %vm233, %v2319, 0
    %2326 = vmatprep.subr.bf16.mxu0 0
    %2327 = vmatpush1.bf16.xpose.msra.mxu0 %v2324
    %2328 = vmatprep.subr.bf16.mxu0 0
    %2329 = vmatpush1.bf16.xpose.msra.mxu0 0
    %2330 = vmatprep.subr.bf16.mxu0 0
    %2331 = vmatpush1.bf16.xpose.msra.mxu0 0
    %2332 = vmatprep.subr.bf16.mxu0 0
    %2333 = vmatpush1.bf16.xpose.msra.mxu0 0
    %2334 = vmatprep.subr.bf16.mxu0 0
    %2335 = vmatpush1.bf16.xpose.msra.mxu0 0
    %2336 = vmatprep.subr.bf16.mxu0 0
    %2337 = vmatpush1.bf16.xpose.msra.mxu0 0
    %2338 = vmatprep.subr.bf16.mxu0 0
    %2339 = vmatpush1.bf16.xpose.msra.mxu0 0
    %2340 = vmatprep.subr.bf16.mxu0 0
    %2341 = vmatpush1.bf16.xpose.msra.mxu0 0
    %2342 = vmatprep.subr.bf16.mxu0 0
    %2343 = vmatpush1.bf16.xpose.msra.mxu0 0
    %2344 = vmatprep.subr.bf16.mxu0 0
    %2345 = vmatpush1.bf16.xpose.msra.mxu0 0
    %2346 = vmatprep.subr.bf16.mxu0 0
    %2347 = vmatpush1.bf16.xpose.msra.mxu0 0
    %2348 = vmatprep.subr.bf16.mxu0 0
    %2349 = vmatpush1.bf16.xpose.msra.mxu0 0
    %2350 = vmatprep.subr.bf16.mxu0 0
    %2351 = vmatpush1.bf16.xpose.msra.mxu0 0
    %2352 = vmatprep.subr.bf16.mxu0 0
    %2353 = vmatpush1.bf16.xpose.msra.mxu0 0
    %2354 = vmatprep.subr.bf16.mxu0 0
    %2355 = vmatpush1.bf16.xpose.msra.mxu0 0
    %2356 = vmatprep.subr.bf16.mxu0 0
    %2357 = vmatpush1.bf16.xpose.msra.mxu0 0
    %2358 = vmatprep.mubr.bf16.mxu0 0
    %2359 = vmatmul.mubr.bf16.gmra.mrb[0].mxu0 %v2321
    %v2360 = vpop.f32.mrb[0].mxu0
    %v2361 = vadd.f32 0.0, %v2360
    %v2362 = vpop.f32.mrb[0].mxu0
    %v2363 = vpop.f32.mrb[0].mxu0
    %v2364 = vpop.f32.mrb[0].mxu0
    %2365 = vdwg.mxu0
    %v2366 = vmul.f32 %v2361, 0.25
    %v2367 = vadd.f32 %v2366, %v776
    %v2368 = vsel %vm286, %v2367, -inf
    %2369 = vmax.xlane.f32.xlu0 %v2368
    %v2370 = vpop.xlane.xlu0 %2369
    %v2371 = vsub.f32 %v2367, %v2370
    %v2372 = vmul.f32 %v2371, 1.442695
    %v2373 = vpow.pop %v2372
    %v2374 = vsel %vm286, %v2373, 0.0
    %2375 = vadd.xlane.f32.xlu0 %v2374
    %v2376 = vpop.xlane.xlu0 %2375
    %v2377 = vrcp.pop %v2376
    %v2378 = vmul.f32 %v2373, %v2377
    %v2379 = vpack.c.bf16 %v2378, %v2378
    %v2380 = vpack.c.bf16 %v2313, %v2313
    %2382 = vrot.lane.b32.xlu0 %v2380, 112
    %v2383 = vpop.permute.xlu0 %2382
    %v2385 = vsel %vm286, %v2379, 0
    %v2388 = vsel %vm303, %v2383, 0
    %2390 = vmatprep.subr.bf16.mxu0 0
    %2391 = vmatpush1.bf16.msra.mxu0 %v2388
    %2392 = vmatprep.subr.bf16.mxu0 0
    %2393 = vmatpush1.bf16.msra.mxu0 0
    %2394 = vmatprep.subr.bf16.mxu0 0
    %2395 = vmatpush1.bf16.msra.mxu0 0
    %2396 = vmatprep.subr.bf16.mxu0 0
    %2397 = vmatpush1.bf16.msra.mxu0 0
    %2398 = vmatprep.subr.bf16.mxu0 0
    %2399 = vmatpush1.bf16.msra.mxu0 0
    %2400 = vmatprep.subr.bf16.mxu0 0
    %2401 = vmatpush1.bf16.msra.mxu0 0
    %2402 = vmatprep.subr.bf16.mxu0 0
    %2403 = vmatpush1.bf16.msra.mxu0 0
    %2404 = vmatprep.subr.bf16.mxu0 0
    %2405 = vmatpush1.bf16.msra.mxu0 0
    %2406 = vmatprep.subr.bf16.mxu0 0
    %2407 = vmatpush1.bf16.msra.mxu0 0
    %2408 = vmatprep.subr.bf16.mxu0 0
    %2409 = vmatpush1.bf16.msra.mxu0 0
    %2410 = vmatprep.subr.bf16.mxu0 0
    %2411 = vmatpush1.bf16.msra.mxu0 0
    %2412 = vmatprep.subr.bf16.mxu0 0
    %2413 = vmatpush1.bf16.msra.mxu0 0
    %2414 = vmatprep.subr.bf16.mxu0 0
    %2415 = vmatpush1.bf16.msra.mxu0 0
    %2416 = vmatprep.subr.bf16.mxu0 0
    %2417 = vmatpush1.bf16.msra.mxu0 0
    %2418 = vmatprep.subr.bf16.mxu0 0
    %2419 = vmatpush1.bf16.msra.mxu0 0
    %2420 = vmatprep.subr.bf16.mxu0 0
    %2421 = vmatpush1.bf16.msra.mxu0 0
    %2422 = vmatprep.mubr.bf16.mxu0 0
    %2423 = vmatmul.mubr.bf16.gmra.mrb[0].mxu0 %v2385
    %v2424 = vpop.f32.mrb[0].mxu0
    %v2425 = vadd.f32 0.0, %v2424
    %v2426 = vpop.f32.mrb[0].mxu0
    %v2427 = vpop.f32.mrb[0].mxu0
    %v2428 = vpop.f32.mrb[0].mxu0
    %2429 = vdwg.mxu0
    %2431 = vrot.lane.b32.xlu0 %v2425, 16
    %v2432 = vpop.permute.xlu0 %2431
    %2434 = vst.msk [vmem:[#allocation3 + $0x8] sm:$0xff] %vm470, %v2432
    %v2435 = vld [vmem:[#allocation2 + $0x10] sm:$0xff]
    %v2436 = vld [vmem:[#allocation2 + $0x18] sm:$0xff]
    %v2437 = vpack.c.bf16 %v2435, %v2435
    %2439 = vrot.lane.b32.xlu0 %v2437, 96
    %v2440 = vpop.permute.xlu0 %2439
    %2441 = vrot.lane.b32.xlu0 %v2437, 32
    %v2442 = vpop.permute.xlu0 %2441
    %v2444 = vsel %vm233, %v2440, 0
    %v2447 = vsel %vm233, %v2442, 0
    %2449 = vmatprep.subr.bf16.mxu0 0
    %2450 = vmatpush1.bf16.xpose.msra.mxu0 %v2447
    %2451 = vmatprep.subr.bf16.mxu0 0
    %2452 = vmatpush1.bf16.xpose.msra.mxu0 0
    %2453 = vmatprep.subr.bf16.mxu0 0
    %2454 = vmatpush1.bf16.xpose.msra.mxu0 0
    %2455 = vmatprep.subr.bf16.mxu0 0
    %2456 = vmatpush1.bf16.xpose.msra.mxu0 0
    %2457 = vmatprep.subr.bf16.mxu0 0
    %2458 = vmatpush1.bf16.xpose.msra.mxu0 0
    %2459 = vmatprep.subr.bf16.mxu0 0
    %2460 = vmatpush1.bf16.xpose.msra.mxu0 0
    %2461 = vmatprep.subr.bf16.mxu0 0
    %2462 = vmatpush1.bf16.xpose.msra.mxu0 0
    %2463 = vmatprep.subr.bf16.mxu0 0
    %2464 = vmatpush1.bf16.xpose.msra.mxu0 0
    %2465 = vmatprep.subr.bf16.mxu0 0
    %2466 = vmatpush1.bf16.xpose.msra.mxu0 0
    %2467 = vmatprep.subr.bf16.mxu0 0
    %2468 = vmatpush1.bf16.xpose.msra.mxu0 0
    %2469 = vmatprep.subr.bf16.mxu0 0
    %2470 = vmatpush1.bf16.xpose.msra.mxu0 0
    %2471 = vmatprep.subr.bf16.mxu0 0
    %2472 = vmatpush1.bf16.xpose.msra.mxu0 0
    %2473 = vmatprep.subr.bf16.mxu0 0
    %2474 = vmatpush1.bf16.xpose.msra.mxu0 0
    %2475 = vmatprep.subr.bf16.mxu0 0
    %2476 = vmatpush1.bf16.xpose.msra.mxu0 0
    %2477 = vmatprep.subr.bf16.mxu0 0
    %2478 = vmatpush1.bf16.xpose.msra.mxu0 0
    %2479 = vmatprep.subr.bf16.mxu0 0
    %2480 = vmatpush1.bf16.xpose.msra.mxu0 0
    %2481 = vmatprep.mubr.bf16.mxu0 0
    %2482 = vmatmul.mubr.bf16.gmra.mrb[0].mxu0 %v2444
    %v2483 = vpop.f32.mrb[0].mxu0
    %v2484 = vadd.f32 0.0, %v2483
    %v2485 = vpop.f32.mrb[0].mxu0
    %v2486 = vpop.f32.mrb[0].mxu0
    %v2487 = vpop.f32.mrb[0].mxu0
    %2488 = vdwg.mxu0
    %v2489 = vmul.f32 %v2484, 0.25
    %v2490 = vadd.f32 %v2489, %v776
    %v2491 = vsel %vm286, %v2490, -inf
    %2492 = vmax.xlane.f32.xlu0 %v2491
    %v2493 = vpop.xlane.xlu0 %2492
    %v2494 = vsub.f32 %v2490, %v2493
    %v2495 = vmul.f32 %v2494, 1.442695
    %v2496 = vpow.pop %v2495
    %v2497 = vsel %vm286, %v2496, 0.0
    %2498 = vadd.xlane.f32.xlu0 %v2497
    %v2499 = vpop.xlane.xlu0 %2498
    %v2500 = vrcp.pop %v2499
    %v2501 = vmul.f32 %v2496, %v2500
    %v2502 = vpack.c.bf16 %v2501, %v2501
    %v2503 = vpack.c.bf16 %v2436, %v2436
    %2505 = vrot.lane.b32.xlu0 %v2503, 96
    %v2506 = vpop.permute.xlu0 %2505
    %v2508 = vsel %vm286, %v2502, 0
    %v2511 = vsel %vm303, %v2506, 0
    %2513 = vmatprep.subr.bf16.mxu0 0
    %2514 = vmatpush1.bf16.msra.mxu0 %v2511
    %2515 = vmatprep.subr.bf16.mxu0 0
    %2516 = vmatpush1.bf16.msra.mxu0 0
    %2517 = vmatprep.subr.bf16.mxu0 0
    %2518 = vmatpush1.bf16.msra.mxu0 0
    %2519 = vmatprep.subr.bf16.mxu0 0
    %2520 = vmatpush1.bf16.msra.mxu0 0
    %2521 = vmatprep.subr.bf16.mxu0 0
    %2522 = vmatpush1.bf16.msra.mxu0 0
    %2523 = vmatprep.subr.bf16.mxu0 0
    %2524 = vmatpush1.bf16.msra.mxu0 0
    %2525 = vmatprep.subr.bf16.mxu0 0
    %2526 = vmatpush1.bf16.msra.mxu0 0
    %2527 = vmatprep.subr.bf16.mxu0 0
    %2528 = vmatpush1.bf16.msra.mxu0 0
    %2529 = vmatprep.subr.bf16.mxu0 0
    %2530 = vmatpush1.bf16.msra.mxu0 0
    %2531 = vmatprep.subr.bf16.mxu0 0
    %2532 = vmatpush1.bf16.msra.mxu0 0
    %2533 = vmatprep.subr.bf16.mxu0 0
    %2534 = vmatpush1.bf16.msra.mxu0 0
    %2535 = vmatprep.subr.bf16.mxu0 0
    %2536 = vmatpush1.bf16.msra.mxu0 0
    %2537 = vmatprep.subr.bf16.mxu0 0
    %2538 = vmatpush1.bf16.msra.mxu0 0
    %2539 = vmatprep.subr.bf16.mxu0 0
    %2540 = vmatpush1.bf16.msra.mxu0 0
    %2541 = vmatprep.subr.bf16.mxu0 0
    %2542 = vmatpush1.bf16.msra.mxu0 0
    %2543 = vmatprep.subr.bf16.mxu0 0
    %2544 = vmatpush1.bf16.msra.mxu0 0
    %2545 = vmatprep.mubr.bf16.mxu0 0
    %2546 = vmatmul.mubr.bf16.gmra.mrb[0].mxu0 %v2508
    %v2547 = vpop.f32.mrb[0].mxu0
    %v2548 = vadd.f32 0.0, %v2547
    %v2549 = vpop.f32.mrb[0].mxu0
    %v2550 = vpop.f32.mrb[0].mxu0
    %v2551 = vpop.f32.mrb[0].mxu0
    %2552 = vdwg.mxu0
    %2554 = vrot.lane.b32.xlu0 %v2548, 32
    %v2555 = vpop.permute.xlu0 %2554
    %2557 = vst.msk [vmem:[#allocation3 + $0x8] sm:$0xff] %vm594, %v2555
    %v2558 = vld [vmem:[#allocation2 + $0x10] sm:$0xff]
    %v2559 = vld [vmem:[#allocation2 + $0x18] sm:$0xff]
    %v2560 = vpack.c.bf16 %v2558, %v2558
    %2562 = vrot.lane.b32.xlu0 %v2560, 80
    %v2563 = vpop.permute.xlu0 %2562
    %2564 = vrot.lane.b32.xlu0 %v2560, 16
    %v2565 = vpop.permute.xlu0 %2564
    %v2567 = vsel %vm233, %v2563, 0
    %v2570 = vsel %vm233, %v2565, 0
    %2572 = vmatprep.subr.bf16.mxu0 0
    %2573 = vmatpush1.bf16.xpose.msra.mxu0 %v2570
    %2574 = vmatprep.subr.bf16.mxu0 0
    %2575 = vmatpush1.bf16.xpose.msra.mxu0 0
    %2576 = vmatprep.subr.bf16.mxu0 0
    %2577 = vmatpush1.bf16.xpose.msra.mxu0 0
    %2578 = vmatprep.subr.bf16.mxu0 0
    %2579 = vmatpush1.bf16.xpose.msra.mxu0 0
    %2580 = vmatprep.subr.bf16.mxu0 0
    %2581 = vmatpush1.bf16.xpose.msra.mxu0 0
    %2582 = vmatprep.subr.bf16.mxu0 0
    %2583 = vmatpush1.bf16.xpose.msra.mxu0 0
    %2584 = vmatprep.subr.bf16.mxu0 0
    %2585 = vmatpush1.bf16.xpose.msra.mxu0 0
    %2586 = vmatprep.subr.bf16.mxu0 0
    %2587 = vmatpush1.bf16.xpose.msra.mxu0 0
    %2588 = vmatprep.subr.bf16.mxu0 0
    %2589 = vmatpush1.bf16.xpose.msra.mxu0 0
    %2590 = vmatprep.subr.bf16.mxu0 0
    %2591 = vmatpush1.bf16.xpose.msra.mxu0 0
    %2592 = vmatprep.subr.bf16.mxu0 0
    %2593 = vmatpush1.bf16.xpose.msra.mxu0 0
    %2594 = vmatprep.subr.bf16.mxu0 0
    %2595 = vmatpush1.bf16.xpose.msra.mxu0 0
    %2596 = vmatprep.subr.bf16.mxu0 0
    %2597 = vmatpush1.bf16.xpose.msra.mxu0 0
    %2598 = vmatprep.subr.bf16.mxu0 0
    %2599 = vmatpush1.bf16.xpose.msra.mxu0 0
    %2600 = vmatprep.subr.bf16.mxu0 0
    %2601 = vmatpush1.bf16.xpose.msra.mxu0 0
    %2602 = vmatprep.subr.bf16.mxu0 0
    %2603 = vmatpush1.bf16.xpose.msra.mxu0 0
    %2604 = vmatprep.mubr.bf16.mxu0 0
    %2605 = vmatmul.mubr.bf16.gmra.mrb[0].mxu0 %v2567
    %v2606 = vpop.f32.mrb[0].mxu0
    %v2607 = vadd.f32 0.0, %v2606
    %v2608 = vpop.f32.mrb[0].mxu0
    %v2609 = vpop.f32.mrb[0].mxu0
    %v2610 = vpop.f32.mrb[0].mxu0
    %2611 = vdwg.mxu0
    %v2612 = vmul.f32 %v2607, 0.25
    %v2613 = vadd.f32 %v2612, %v776
    %v2614 = vsel %vm286, %v2613, -inf
    %2615 = vmax.xlane.f32.xlu0 %v2614
    %v2616 = vpop.xlane.xlu0 %2615
    %v2617 = vsub.f32 %v2613, %v2616
    %v2618 = vmul.f32 %v2617, 1.442695
    %v2619 = vpow.pop %v2618
    %v2620 = vsel %vm286, %v2619, 0.0
    %2621 = vadd.xlane.f32.xlu0 %v2620
    %v2622 = vpop.xlane.xlu0 %2621
    %v2623 = vrcp.pop %v2622
    %v2624 = vmul.f32 %v2619, %v2623
    %v2625 = vpack.c.bf16 %v2624, %v2624
    %v2626 = vpack.c.bf16 %v2559, %v2559
    %2628 = vrot.lane.b32.xlu0 %v2626, 80
    %v2629 = vpop.permute.xlu0 %2628
    %v2631 = vsel %vm286, %v2625, 0
    %v2634 = vsel %vm303, %v2629, 0
    %2636 = vmatprep.subr.bf16.mxu0 0
    %2637 = vmatpush1.bf16.msra.mxu0 %v2634
    %2638 = vmatprep.subr.bf16.mxu0 0
    %2639 = vmatpush1.bf16.msra.mxu0 0
    %2640 = vmatprep.subr.bf16.mxu0 0
    %2641 = vmatpush1.bf16.msra.mxu0 0
    %2642 = vmatprep.subr.bf16.mxu0 0
    %2643 = vmatpush1.bf16.msra.mxu0 0
    %2644 = vmatprep.subr.bf16.mxu0 0
    %2645 = vmatpush1.bf16.msra.mxu0 0
    %2646 = vmatprep.subr.bf16.mxu0 0
    %2647 = vmatpush1.bf16.msra.mxu0 0
    %2648 = vmatprep.subr.bf16.mxu0 0
    %2649 = vmatpush1.bf16.msra.mxu0 0
    %2650 = vmatprep.subr.bf16.mxu0 0
    %2651 = vmatpush1.bf16.msra.mxu0 0
    %2652 = vmatprep.subr.bf16.mxu0 0
    %2653 = vmatpush1.bf16.msra.mxu0 0
    %2654 = vmatprep.subr.bf16.mxu0 0
    %2655 = vmatpush1.bf16.msra.mxu0 0
    %2656 = vmatprep.subr.bf16.mxu0 0
    %2657 = vmatpush1.bf16.msra.mxu0 0
    %2658 = vmatprep.subr.bf16.mxu0 0
    %2659 = vmatpush1.bf16.msra.mxu0 0
    %2660 = vmatprep.subr.bf16.mxu0 0
    %2661 = vmatpush1.bf16.msra.mxu0 0
    %2662 = vmatprep.subr.bf16.mxu0 0
    %2663 = vmatpush1.bf16.msra.mxu0 0
    %2664 = vmatprep.subr.bf16.mxu0 0
    %2665 = vmatpush1.bf16.msra.mxu0 0
    %2666 = vmatprep.subr.bf16.mxu0 0
    %2667 = vmatpush1.bf16.msra.mxu0 0
    %2668 = vmatprep.mubr.bf16.mxu0 0
    %2669 = vmatmul.mubr.bf16.gmra.mrb[0].mxu0 %v2631
    %v2670 = vpop.f32.mrb[0].mxu0
    %v2671 = vadd.f32 0.0, %v2670
    %v2672 = vpop.f32.mrb[0].mxu0
    %v2673 = vpop.f32.mrb[0].mxu0
    %v2674 = vpop.f32.mrb[0].mxu0
    %2675 = vdwg.mxu0
    %2677 = vrot.lane.b32.xlu0 %v2671, 48
    %v2678 = vpop.permute.xlu0 %2677
    %2680 = vst.msk [vmem:[#allocation3 + $0x8] sm:$0xff] %vm718, %v2678
    %v2681 = vld [vmem:[#allocation3] sm:$0xff]
    %v2682 = vld [vmem:[#allocation3 + $0x8] sm:$0xff]
    %s2683 = scalar_lea.vmem %s6, 32
    %v2684 = vld [vmem:[%s2683] sm:$0xf]
    %v2685 = vld [vmem:[%s2683 + $0x4] sm:$0xf]
    %v2686 = vld [vmem:[%s2683 + $0x8] sm:$0xf]
    %v2687 = vld [vmem:[%s2683 + $0xc] sm:$0xf]
    %v2688 = vld [vmem:[%s2683 + $0x10] sm:$0xf]
    %v2689 = vld [vmem:[%s2683 + $0x14] sm:$0xf]
    %v2690 = vld [vmem:[%s2683 + $0x18] sm:$0xf]
    %v2691 = vld [vmem:[%s2683 + $0x1c] sm:$0xf]
    %v2692 = vpack.c.bf16 %v2682, %v2681
    %s2693 = scalar_lea.vmem %s7, 1
    %v2694 = vld [vmem:[%s2693] sm:$0x1]
    %v2696 = vlaneseq
    %v2697 = vshrl.u32 %v2696, 7
    %v2698 = vsub.s32 0, %v2697
    %v2699 = vrot.slane %v2694, %v2698
    %v2709 = vunpack.c.l.b16 %v2684
    %v2710 = vunpack.c.l.b16 %v2685
    %v2711 = vunpack.c.l.b16 %v2686
    %v2712 = vunpack.c.l.b16 %v2687
    %v2713 = vunpack.c.l.b16 %v2688
    %v2714 = vunpack.c.l.b16 %v2689
    %v2715 = vunpack.c.l.b16 %v2690
    %v2716 = vunpack.c.l.b16 %v2691
    %v2717 = vpack.c.b16 %v2710, %v2709
    %v2718 = vpack.c.b16 %v2712, %v2711
    %v2719 = vpack.c.b16 %v2714, %v2713
    %v2720 = vpack.c.b16 %v2716, %v2715
    %v2726 = vsel %vm71, %v2692, 0
    %2728 = vmatprep.subr.bf16.mxu0 0
    %2729 = vmatpush1.bf16.msra.mxu0 %v2717
    %2730 = vmatprep.subr.bf16.mxu0 0
    %2731 = vmatpush1.bf16.msra.mxu0 %v2718
    %2732 = vmatprep.subr.bf16.mxu0 0
    %2733 = vmatpush1.bf16.msra.mxu0 %v2719
    %2734 = vmatprep.subr.bf16.mxu0 0
    %2735 = vmatpush1.bf16.msra.mxu0 %v2720
    %2736 = vmatprep.subr.bf16.mxu0 0
    %2737 = vmatpush1.bf16.msra.mxu0 0
    %2738 = vmatprep.subr.bf16.mxu0 0
    %2739 = vmatpush1.bf16.msra.mxu0 0
    %2740 = vmatprep.subr.bf16.mxu0 0
    %2741 = vmatpush1.bf16.msra.mxu0 0
    %2742 = vmatprep.subr.bf16.mxu0 0
    %2743 = vmatpush1.bf16.msra.mxu0 0
    %2744 = vmatprep.subr.bf16.mxu0 0
    %2745 = vmatpush1.bf16.msra.mxu0 0
    %2746 = vmatprep.subr.bf16.mxu0 0
    %2747 = vmatpush1.bf16.msra.mxu0 0
    %2748 = vmatprep.subr.bf16.mxu0 0
    %2749 = vmatpush1.bf16.msra.mxu0 0
    %2750 = vmatprep.subr.bf16.mxu0 0
    %2751 = vmatpush1.bf16.msra.mxu0 0
    %2752 = vmatprep.subr.bf16.mxu0 0
    %2753 = vmatpush1.bf16.msra.mxu0 0
    %2754 = vmatprep.subr.bf16.mxu0 0
    %2755 = vmatpush1.bf16.msra.mxu0 0
    %2756 = vmatprep.subr.bf16.mxu0 0
    %2757 = vmatpush1.bf16.msra.mxu0 0
    %2758 = vmatprep.subr.bf16.mxu0 0
    %2759 = vmatpush1.bf16.msra.mxu0 0
    %2760 = vmatprep.mubr.bf16.mxu0 0
    %2761 = vmatmul.mubr.bf16.gmra.mrb[0].mxu0 %v2726
    %v2762 = vpop.f32.mrb[0].mxu0
    %v2763 = vadd.f32 %v2699, %v2762
    %v2764 = vpop.f32.mrb[0].mxu0
    %v2765 = vpop.f32.mrb[0].mxu0
    %v2766 = vadd.f32 %v2699, %v2765
    %v2767 = vpop.f32.mrb[0].mxu0
    %2768 = vdwg.mxu0
    %v2769 = vadd.f32 %v1600, %v2763
    %v2770 = vadd.f32 %v1601, %v2766
    %s2771 = scalar_lea.vmem %s8, 1
    %v2772 = vld [vmem:[%s2771] sm:$0x1]
    %s2773 = scalar_lea.vmem %s9, 1
    %v2774 = vld [vmem:[%s2773] sm:$0x1]
    %v2775 = vsel %vm71, %v2769, 0.0
    %2776 = vadd.xlane.f32.xlu0 %v2775
    %v2777 = vpop.xlane.xlu0 %2776
    %v2778 = vsel %vm71, %v2770, 0.0
    %2779 = vadd.xlane.f32.xlu0 %v2778
    %v2780 = vpop.xlane.xlu0 %2779
    %v2781 = vmul.f32 %v2777, %v78
    %v2782 = vmul.f32 %v2780, %v78
    %v2783 = vsub.f32 %v2769, %v2781
    %v2784 = vsub.f32 %v2770, %v2782
    %v2785 = vmul.f32 %v2783, %v2783
    %v2786 = vmul.f32 %v2784, %v2784
    %v2787 = vsel %vm71, %v2785, 0.0
    %2788 = vadd.xlane.f32.xlu0 %v2787
    %v2789 = vpop.xlane.xlu0 %2788
    %v2790 = vsel %vm71, %v2786, 0.0
    %2791 = vadd.xlane.f32.xlu0 %v2790
    %v2792 = vpop.xlane.xlu0 %2791
    %v2793 = vmul.f32 %v2789, %v78
    %v2794 = vmul.f32 %v2792, %v78
    %v2795 = vadd.f32 %v2793, 1e-05
    %v2796 = vadd.f32 %v2794, 1e-05
    %v2797 = vrsqrt.pop %v2795
    %v2798 = vrsqrt.pop %v2796
    %v2799 = vmul.f32 %v2783, %v2797
    %v2800 = vmul.f32 %v2784, %v2798
    %v2802 = vlaneseq
    %v2803 = vshrl.u32 %v2802, 7
    %v2804 = vsub.s32 0, %v2803
    %v2805 = vrot.slane %v2772, %v2804
    %v2807 = vmul.f32 %v2799, %v2805
    %v2808 = vmul.f32 %v2800, %v2805
    %v2810 = vlaneseq
    %v2811 = vshrl.u32 %v2810, 7
    %v2812 = vsub.s32 0, %v2811
    %v2813 = vrot.slane %v2774, %v2812
    %v2815 = vadd.f32 %v2807, %v2813
    %v2816 = vadd.f32 %v2808, %v2813
    %s2817 = scalar_lea.vmem %s10, 32
    %v2818 = vld [vmem:[%s2817] sm:$0xf]
    %v2819 = vld [vmem:[%s2817 + $0x4] sm:$0xf]
    %v2820 = vld [vmem:[%s2817 + $0x8] sm:$0xf]
    %v2821 = vld [vmem:[%s2817 + $0xc] sm:$0xf]
    %v2822 = vld [vmem:[%s2817 + $0x10] sm:$0xf]
    %v2823 = vld [vmem:[%s2817 + $0x14] sm:$0xf]
    %v2824 = vld [vmem:[%s2817 + $0x18] sm:$0xf]
    %v2825 = vld [vmem:[%s2817 + $0x1c] sm:$0xf]
    %v2826 = vpack.c.bf16 %v2816, %v2815
    %s2827 = scalar_lea.vmem %s11, 1
    %v2828 = vld [vmem:[%s2827] sm:$0x1]
    %v2830 = vlaneseq
    %v2831 = vshrl.u32 %v2830, 7
    %v2832 = vsub.s32 0, %v2831
    %v2833 = vrot.slane %v2828, %v2832
    %v2843 = vunpack.c.l.b16 %v2818
    %v2844 = vunpack.c.l.b16 %v2819
    %v2845 = vunpack.c.l.b16 %v2820
    %v2846 = vunpack.c.l.b16 %v2821
    %v2847 = vunpack.c.l.b16 %v2822
    %v2848 = vunpack.c.l.b16 %v2823
    %v2849 = vunpack.c.l.b16 %v2824
    %v2850 = vunpack.c.l.b16 %v2825
    %v2851 = vpack.c.b16 %v2844, %v2843
    %v2852 = vpack.c.b16 %v2846, %v2845
    %v2853 = vpack.c.b16 %v2848, %v2847
    %v2854 = vpack.c.b16 %v2850, %v2849
    %v2860 = vsel %vm71, %v2826, 0
    %2862 = vmatprep.subr.bf16.mxu0 0
    %2863 = vmatpush1.bf16.msra.mxu0 %v2851
    %2864 = vmatprep.subr.bf16.mxu0 0
    %2865 = vmatpush1.bf16.msra.mxu0 %v2852
    %2866 = vmatprep.subr.bf16.mxu0 0
    %2867 = vmatpush1.bf16.msra.mxu0 %v2853
    %2868 = vmatprep.subr.bf16.mxu0 0
    %2869 = vmatpush1.bf16.msra.mxu0 %v2854
    %2870 = vmatprep.subr.bf16.mxu0 0
    %2871 = vmatpush1.bf16.msra.mxu0 0
    %2872 = vmatprep.subr.bf16.mxu0 0
    %2873 = vmatpush1.bf16.msra.mxu0 0
    %2874 = vmatprep.subr.bf16.mxu0 0
    %2875 = vmatpush1.bf16.msra.mxu0 0
    %2876 = vmatprep.subr.bf16.mxu0 0
    %2877 = vmatpush1.bf16.msra.mxu0 0
    %2878 = vmatprep.subr.bf16.mxu0 0
    %2879 = vmatpush1.bf16.msra.mxu0 0
    %2880 = vmatprep.subr.bf16.mxu0 0
    %2881 = vmatpush1.bf16.msra.mxu0 0
    %2882 = vmatprep.subr.bf16.mxu0 0
    %2883 = vmatpush1.bf16.msra.mxu0 0
    %2884 = vmatprep.subr.bf16.mxu0 0
    %2885 = vmatpush1.bf16.msra.mxu0 0
    %2886 = vmatprep.subr.bf16.mxu0 0
    %2887 = vmatpush1.bf16.msra.mxu0 0
    %2888 = vmatprep.subr.bf16.mxu0 0
    %2889 = vmatpush1.bf16.msra.mxu0 0
    %2890 = vmatprep.subr.bf16.mxu0 0
    %2891 = vmatpush1.bf16.msra.mxu0 0
    %2892 = vmatprep.subr.bf16.mxu0 0
    %2893 = vmatpush1.bf16.msra.mxu0 0
    %2894 = vmatprep.mubr.bf16.mxu0 0
    %2895 = vmatmul.mubr.bf16.gmra.mrb[0].mxu0 %v2860
    %v2896 = vpop.f32.mrb[0].mxu0
    %v2897 = vadd.f32 %v2833, %v2896
    %v2898 = vpop.f32.mrb[0].mxu0
    %v2899 = vpop.f32.mrb[0].mxu0
    %v2900 = vadd.f32 %v2833, %v2899
    %v2901 = vpop.f32.mrb[0].mxu0
    %2902 = vdwg.mxu0
    %v2903 = vmul.f32 %v2897, 0.5
    %v2904 = vmul.f32 %v2900, 0.5
    %v2905 = vmul.f32 %v2897, 0.044715
    %v2906 = vmul.f32 %v2900, 0.044715
    %v2907 = vmul.f32 %v2905, %v2897
    %v2908 = vmul.f32 %v2906, %v2900
    %v2909 = vmul.f32 %v2907, %v2897
    %v2910 = vmul.f32 %v2908, %v2900
    %v2911 = vadd.f32 %v2897, %v2909
    %v2912 = vadd.f32 %v2900, %v2910
    %v2913 = vmul.f32 %v2911, 0.7978846
    %v2914 = vmul.f32 %v2912, 0.7978846
    %v2915 = vtanh.pop %v2913
    %v2916 = vtanh.pop %v2914
    %v2917 = vadd.f32 %v2915, 1.0
    %v2918 = vadd.f32 %v2916, 1.0
    %v2919 = vmul.f32 %v2903, %v2917
    %v2920 = vmul.f32 %v2904, %v2918
    %s2921 = scalar_lea.vmem %s12, 64
    %v2922 = vld [vmem:[%s2921] sm:$0xf]
    %v2923 = vld [vmem:[%s2921 + $0x4] sm:$0xf]
    %v2924 = vld [vmem:[%s2921 + $0x8] sm:$0xf]
    %v2925 = vld [vmem:[%s2921 + $0xc] sm:$0xf]
    %v2926 = vld [vmem:[%s2921 + $0x10] sm:$0xf]
    %v2927 = vld [vmem:[%s2921 + $0x14] sm:$0xf]
    %v2928 = vld [vmem:[%s2921 + $0x18] sm:$0xf]
    %v2929 = vld [vmem:[%s2921 + $0x1c] sm:$0xf]
    %v2930 = vld [vmem:[%s2921 + $0x20] sm:$0xf]
    %v2931 = vld [vmem:[%s2921 + $0x24] sm:$0xf]
    %v2932 = vld [vmem:[%s2921 + $0x28] sm:$0xf]
    %v2933 = vld [vmem:[%s2921 + $0x2c] sm:$0xf]
    %v2934 = vld [vmem:[%s2921 + $0x30] sm:$0xf]
    %v2935 = vld [vmem:[%s2921 + $0x34] sm:$0xf]
    %v2936 = vld [vmem:[%s2921 + $0x38] sm:$0xf]
    %v2937 = vld [vmem:[%s2921 + $0x3c] sm:$0xf]
    %v2938 = vpack.c.bf16 %v2920, %v2919
    %v2955 = vunpack.c.l.b16 %v2922
    %v2956 = vunpack.c.l.b16 %v2923
    %v2957 = vunpack.c.l.b16 %v2924
    %v2958 = vunpack.c.l.b16 %v2925
    %v2959 = vunpack.c.l.b16 %v2926
    %v2960 = vunpack.c.l.b16 %v2927
    %v2961 = vunpack.c.l.b16 %v2928
    %v2962 = vunpack.c.l.b16 %v2929
    %v2963 = vunpack.c.l.b16 %v2930
    %v2964 = vunpack.c.l.b16 %v2931
    %v2965 = vunpack.c.l.b16 %v2932
    %v2966 = vunpack.c.l.b16 %v2933
    %v2967 = vunpack.c.l.b16 %v2934
    %v2968 = vunpack.c.l.b16 %v2935
    %v2969 = vunpack.c.l.b16 %v2936
    %v2970 = vunpack.c.l.b16 %v2937
    %v2971 = vpack.c.b16 %v2956, %v2955
    %v2972 = vpack.c.b16 %v2958, %v2957
    %v2973 = vpack.c.b16 %v2960, %v2959
    %v2974 = vpack.c.b16 %v2962, %v2961
    %v2975 = vpack.c.b16 %v2964, %v2963
    %v2976 = vpack.c.b16 %v2966, %v2965
    %v2977 = vpack.c.b16 %v2968, %v2967
    %v2978 = vpack.c.b16 %v2970, %v2969
    %2987 = vmatprep.subr.bf16.mxu0 0
    %2988 = vmatpush1.bf16.msra.mxu0 %v2971
    %2989 = vmatprep.subr.bf16.mxu0 0
    %2990 = vmatpush1.bf16.msra.mxu0 %v2972
    %2991 = vmatprep.subr.bf16.mxu0 0
    %2992 = vmatpush1.bf16.msra.mxu0 %v2973
    %2993 = vmatprep.subr.bf16.mxu0 0
    %2994 = vmatpush1.bf16.msra.mxu0 %v2974
    %2995 = vmatprep.subr.bf16.mxu0 0
    %2996 = vmatpush1.bf16.msra.mxu0 %v2975
    %2997 = vmatprep.subr.bf16.mxu0 0
    %2998 = vmatpush1.bf16.msra.mxu0 %v2976
    %2999 = vmatprep.subr.bf16.mxu0 0
    %3000 = vmatpush1.bf16.msra.mxu0 %v2977
    %3001 = vmatprep.subr.bf16.mxu0 0
    %3002 = vmatpush1.bf16.msra.mxu0 %v2978
    %3003 = vmatprep.subr.bf16.mxu0 0
    %3004 = vmatpush1.bf16.msra.mxu0 0
    %3005 = vmatprep.subr.bf16.mxu0 0
    %3006 = vmatpush1.bf16.msra.mxu0 0
    %3007 = vmatprep.subr.bf16.mxu0 0
    %3008 = vmatpush1.bf16.msra.mxu0 0
    %3009 = vmatprep.subr.bf16.mxu0 0
    %3010 = vmatpush1.bf16.msra.mxu0 0
    %3011 = vmatprep.subr.bf16.mxu0 0
    %3012 = vmatpush1.bf16.msra.mxu0 0
    %3013 = vmatprep.subr.bf16.mxu0 0
    %3014 = vmatpush1.bf16.msra.mxu0 0
    %3015 = vmatprep.subr.bf16.mxu0 0
    %3016 = vmatpush1.bf16.msra.mxu0 0
    %3017 = vmatprep.subr.bf16.mxu0 0
    %3018 = vmatpush1.bf16.msra.mxu0 0
    %3019 = vmatprep.mubr.bf16.mxu0 0
    %3020 = vmatmul.mubr.bf16.gmra.mrb[0].mxu0 %v2938
    %v3021 = vpop.f32.mrb[0].mxu0
    %v3022 = vadd.f32 0.0, %v3021
    %v3023 = vpop.f32.mrb[0].mxu0
    %v3024 = vpop.f32.mrb[0].mxu0
    %v3025 = vadd.f32 0.0, %v3024
    %v3026 = vpop.f32.mrb[0].mxu0
    %3027 = vdwg.mxu0
    %v3028 = vadd.f32 %v2815, %v3022
    %v3029 = vadd.f32 %v2816, %v3025
    %s3030 = scalar_lea.vmem %s13, 1
    %v3031 = vld [vmem:[%s3030] sm:$0x1]
    %v3033 = vlaneseq
    %v3034 = vshrl.u32 %v3033, 7
    %v3035 = vsub.s32 0, %v3034
    %v3036 = vrot.slane %v3031, %v3035
    %v3038 = vadd.f32 %v3028, %v3036
    %v3039 = vadd.f32 %v3029, %v3036
    %s3040 = scalar_lea.vmem %s14, 1
    %v3041 = vld [vmem:[%s3040] sm:$0x1]
    %s3042 = scalar_lea.vmem %s15, 1
    %v3043 = vld [vmem:[%s3042] sm:$0x1]
    %v3044 = vsel %vm71, %v3038, 0.0
    %3045 = vadd.xlane.f32.xlu0 %v3044
    %v3046 = vpop.xlane.xlu0 %3045
    %v3047 = vsel %vm71, %v3039, 0.0
    %3048 = vadd.xlane.f32.xlu0 %v3047
    %v3049 = vpop.xlane.xlu0 %3048
    %v3050 = vmul.f32 %v3046, %v78
    %v3051 = vmul.f32 %v3049, %v78
    %v3052 = vsub.f32 %v3038, %v3050
    %v3053 = vsub.f32 %v3039, %v3051
    %v3054 = vmul.f32 %v3052, %v3052
    %v3055 = vmul.f32 %v3053, %v3053
    %v3056 = vsel %vm71, %v3054, 0.0
    %3057 = vadd.xlane.f32.xlu0 %v3056
    %v3058 = vpop.xlane.xlu0 %3057
    %v3059 = vsel %vm71, %v3055, 0.0
    %3060 = vadd.xlane.f32.xlu0 %v3059
    %v3061 = vpop.xlane.xlu0 %3060
    %v3062 = vmul.f32 %v3058, %v78
    %v3063 = vmul.f32 %v3061, %v78
    %v3064 = vadd.f32 %v3062, 1e-05
    %v3065 = vadd.f32 %v3063, 1e-05
    %v3066 = vrsqrt.pop %v3064
    %v3067 = vrsqrt.pop %v3065
    %v3068 = vmul.f32 %v3052, %v3066
    %v3069 = vmul.f32 %v3053, %v3067
    %v3071 = vlaneseq
    %v3072 = vshrl.u32 %v3071, 7
    %v3073 = vsub.s32 0, %v3072
    %v3074 = vrot.slane %v3041, %v3073
    %v3076 = vmul.f32 %v3068, %v3074
    %v3077 = vmul.f32 %v3069, %v3074
    %v3079 = vlaneseq
    %v3080 = vshrl.u32 %v3079, 7
    %v3081 = vsub.s32 0, %v3080
    %v3082 = vrot.slane %v3043, %v3081
    %v3084 = vadd.f32 %v3076, %v3082
    %v3085 = vadd.f32 %v3077, %v3082
    %v3086 = vld [vmem:[%s16] sm:$0xf]
    %v3087 = vld [vmem:[%s16 + $0x4] sm:$0xf]
    %v3088 = vld [vmem:[%s16 + $0x8] sm:$0xf]
    %v3089 = vld [vmem:[%s16 + $0xc] sm:$0xf]
    %v3090 = vld [vmem:[%s16 + $0x10] sm:$0xf]
    %v3091 = vld [vmem:[%s16 + $0x14] sm:$0xf]
    %v3092 = vld [vmem:[%s16 + $0x18] sm:$0xf]
    %v3093 = vld [vmem:[%s16 + $0x1c] sm:$0xf]
    %v3094 = vpack.c.bf16 %v3084, %v3084
    %v3095 = vld [vmem:[%s17] sm:$0x1]
    %v3104 = vunpack.c.l.b16 %v3086
    %v3105 = vunpack.c.l.b16 %v3087
    %v3106 = vunpack.c.l.b16 %v3088
    %v3107 = vunpack.c.l.b16 %v3089
    %v3108 = vunpack.c.l.b16 %v3090
    %v3109 = vunpack.c.l.b16 %v3091
    %v3110 = vunpack.c.l.b16 %v3092
    %v3111 = vunpack.c.l.b16 %v3093
    %v3112 = vpack.c.b16 %v3105, %v3104
    %v3113 = vpack.c.b16 %v3107, %v3106
    %v3114 = vpack.c.b16 %v3109, %v3108
    %v3115 = vpack.c.b16 %v3111, %v3110
    %v3121 = vsel %vm71, %v3094, 0
    %3123 = vmatprep.subr.bf16.mxu0 0
    %3124 = vmatpush1.bf16.msra.mxu0 %v3112
    %3125 = vmatprep.subr.bf16.mxu0 0
    %3126 = vmatpush1.bf16.msra.mxu0 %v3113
    %3127 = vmatprep.subr.bf16.mxu0 0
    %3128 = vmatpush1.bf16.msra.mxu0 %v3114
    %3129 = vmatprep.subr.bf16.mxu0 0
    %3130 = vmatpush1.bf16.msra.mxu0 %v3115
    %3131 = vmatprep.subr.bf16.mxu0 0
    %3132 = vmatpush1.bf16.msra.mxu0 0
    %3133 = vmatprep.subr.bf16.mxu0 0
    %3134 = vmatpush1.bf16.msra.mxu0 0
    %3135 = vmatprep.subr.bf16.mxu0 0
    %3136 = vmatpush1.bf16.msra.mxu0 0
    %3137 = vmatprep.subr.bf16.mxu0 0
    %3138 = vmatpush1.bf16.msra.mxu0 0
    %3139 = vmatprep.subr.bf16.mxu0 0
    %3140 = vmatpush1.bf16.msra.mxu0 0
    %3141 = vmatprep.subr.bf16.mxu0 0
    %3142 = vmatpush1.bf16.msra.mxu0 0
    %3143 = vmatprep.subr.bf16.mxu0 0
    %3144 = vmatpush1.bf16.msra.mxu0 0
    %3145 = vmatprep.subr.bf16.mxu0 0
    %3146 = vmatpush1.bf16.msra.mxu0 0
    %3147 = vmatprep.subr.bf16.mxu0 0
    %3148 = vmatpush1.bf16.msra.mxu0 0
    %3149 = vmatprep.subr.bf16.mxu0 0
    %3150 = vmatpush1.bf16.msra.mxu0 0
    %3151 = vmatprep.subr.bf16.mxu0 0
    %3152 = vmatpush1.bf16.msra.mxu0 0
    %3153 = vmatprep.subr.bf16.mxu0 0
    %3154 = vmatpush1.bf16.msra.mxu0 0
    %3155 = vmatprep.mubr.bf16.mxu0 0
    %3156 = vmatmul.mubr.bf16.gmra.mrb[0].mxu0 %v3121
    %v3157 = vpop.f32.mrb[0].mxu0
    %v3158 = vadd.f32 %v3095, %v3157
    %v3159 = vpop.f32.mrb[0].mxu0
    %v3160 = vpop.f32.mrb[0].mxu0
    %v3161 = vpop.f32.mrb[0].mxu0
    %3162 = vdwg.mxu0
    %v3163 = vmax.f32 %v3158, 0.0
    %v3164 = vld [vmem:[%s18] sm:$0xf]
    %v3165 = vld [vmem:[%s18 + $0x4] sm:$0xf]
    %v3166 = vld [vmem:[%s18 + $0x8] sm:$0xf]
    %v3167 = vld [vmem:[%s18 + $0xc] sm:$0xf]
    %v3168 = vld [vmem:[%s18 + $0x10] sm:$0xf]
    %v3169 = vld [vmem:[%s18 + $0x14] sm:$0xf]
    %v3170 = vld [vmem:[%s18 + $0x18] sm:$0xf]
    %v3171 = vld [vmem:[%s18 + $0x1c] sm:$0xf]
    %v3172 = vpack.c.bf16 %v3163, %v3163
    %v3173 = vld [vmem:[%s19] sm:$0x1]
    %v3182 = vunpack.c.l.b16 %v3164
    %v3183 = vunpack.c.l.b16 %v3165
    %v3184 = vunpack.c.l.b16 %v3166
    %v3185 = vunpack.c.l.b16 %v3167
    %v3186 = vunpack.c.l.b16 %v3168
    %v3187 = vunpack.c.l.b16 %v3169
    %v3188 = vunpack.c.l.b16 %v3170
    %v3189 = vunpack.c.l.b16 %v3171
    %v3190 = vpack.c.b16 %v3183, %v3182
    %v3191 = vpack.c.b16 %v3185, %v3184
    %v3192 = vpack.c.b16 %v3187, %v3186
    %v3193 = vpack.c.b16 %v3189, %v3188
    %v3199 = vsel %vm71, %v3172, 0
    %3201 = vmatprep.subr.bf16.mxu0 0
    %3202 = vmatpush1.bf16.msra.mxu0 %v3190
    %3203 = vmatprep.subr.bf16.mxu0 0
    %3204 = vmatpush1.bf16.msra.mxu0 %v3191
    %3205 = vmatprep.subr.bf16.mxu0 0
    %3206 = vmatpush1.bf16.msra.mxu0 %v3192
    %3207 = vmatprep.subr.bf16.mxu0 0
    %3208 = vmatpush1.bf16.msra.mxu0 %v3193
    %3209 = vmatprep.subr.bf16.mxu0 0
    %3210 = vmatpush1.bf16.msra.mxu0 0
    %3211 = vmatprep.subr.bf16.mxu0 0
    %3212 = vmatpush1.bf16.msra.mxu0 0
    %3213 = vmatprep.subr.bf16.mxu0 0
    %3214 = vmatpush1.bf16.msra.mxu0 0
    %3215 = vmatprep.subr.bf16.mxu0 0
    %3216 = vmatpush1.bf16.msra.mxu0 0
    %3217 = vmatprep.subr.bf16.mxu0 0
    %3218 = vmatpush1.bf16.msra.mxu0 0
    %3219 = vmatprep.subr.bf16.mxu0 0
    %3220 = vmatpush1.bf16.msra.mxu0 0
    %3221 = vmatprep.subr.bf16.mxu0 0
    %3222 = vmatpush1.bf16.msra.mxu0 0
    %3223 = vmatprep.subr.bf16.mxu0 0
    %3224 = vmatpush1.bf16.msra.mxu0 0
    %3225 = vmatprep.subr.bf16.mxu0 0
    %3226 = vmatpush1.bf16.msra.mxu0 0
    %3227 = vmatprep.subr.bf16.mxu0 0
    %3228 = vmatpush1.bf16.msra.mxu0 0
    %3229 = vmatprep.subr.bf16.mxu0 0
    %3230 = vmatpush1.bf16.msra.mxu0 0
    %3231 = vmatprep.subr.bf16.mxu0 0
    %3232 = vmatpush1.bf16.msra.mxu0 0
    %3233 = vmatprep.mubr.bf16.mxu0 0
    %3234 = vmatmul.mubr.bf16.gmra.mrb[0].mxu0 %v3199
    %v3235 = vpop.f32.mrb[0].mxu0
    %v3236 = vadd.f32 %v3173, %v3235
    %v3237 = vpop.f32.mrb[0].mxu0
    %v3238 = vpop.f32.mrb[0].mxu0
    %v3239 = vpop.f32.mrb[0].mxu0
    %3240 = vdwg.mxu0
    %vm3241 = vcmask 24576
    %3242 = vst.msk [vmem:[#allocation4] sm:$0x1] %vm3241, %v3236
    %v3243 = vld [vmem:[%s16] sm:$0xf]
    %v3244 = vld [vmem:[%s16 + $0x4] sm:$0xf]
    %v3245 = vld [vmem:[%s16 + $0x8] sm:$0xf]
    %v3246 = vld [vmem:[%s16 + $0xc] sm:$0xf]
    %v3247 = vld [vmem:[%s16 + $0x10] sm:$0xf]
    %v3248 = vld [vmem:[%s16 + $0x14] sm:$0xf]
    %v3249 = vld [vmem:[%s16 + $0x18] sm:$0xf]
    %v3250 = vld [vmem:[%s16 + $0x1c] sm:$0xf]
    %v3251 = vpack.c.bf16 %v3085, %v3085
    %v3252 = vld [vmem:[%s17] sm:$0x1]
    %v3261 = vunpack.c.l.b16 %v3243
    %v3262 = vunpack.c.l.b16 %v3244
    %v3263 = vunpack.c.l.b16 %v3245
    %v3264 = vunpack.c.l.b16 %v3246
    %v3265 = vunpack.c.l.b16 %v3247
    %v3266 = vunpack.c.l.b16 %v3248
    %v3267 = vunpack.c.l.b16 %v3249
    %v3268 = vunpack.c.l.b16 %v3250
    %v3269 = vpack.c.b16 %v3262, %v3261
    %v3270 = vpack.c.b16 %v3264, %v3263
    %v3271 = vpack.c.b16 %v3266, %v3265
    %v3272 = vpack.c.b16 %v3268, %v3267
    %v3278 = vsel %vm71, %v3251, 0
    %3280 = vmatprep.subr.bf16.mxu0 0
    %3281 = vmatpush1.bf16.msra.mxu0 %v3269
    %3282 = vmatprep.subr.bf16.mxu0 0
    %3283 = vmatpush1.bf16.msra.mxu0 %v3270
    %3284 = vmatprep.subr.bf16.mxu0 0
    %3285 = vmatpush1.bf16.msra.mxu0 %v3271
    %3286 = vmatprep.subr.bf16.mxu0 0
    %3287 = vmatpush1.bf16.msra.mxu0 %v3272
    %3288 = vmatprep.subr.bf16.mxu0 0
    %3289 = vmatpush1.bf16.msra.mxu0 0
    %3290 = vmatprep.subr.bf16.mxu0 0
    %3291 = vmatpush1.bf16.msra.mxu0 0
    %3292 = vmatprep.subr.bf16.mxu0 0
    %3293 = vmatpush1.bf16.msra.mxu0 0
    %3294 = vmatprep.subr.bf16.mxu0 0
    %3295 = vmatpush1.bf16.msra.mxu0 0
    %3296 = vmatprep.subr.bf16.mxu0 0
    %3297 = vmatpush1.bf16.msra.mxu0 0
    %3298 = vmatprep.subr.bf16.mxu0 0
    %3299 = vmatpush1.bf16.msra.mxu0 0
    %3300 = vmatprep.subr.bf16.mxu0 0
    %3301 = vmatpush1.bf16.msra.mxu0 0
    %3302 = vmatprep.subr.bf16.mxu0 0
    %3303 = vmatpush1.bf16.msra.mxu0 0
    %3304 = vmatprep.subr.bf16.mxu0 0
    %3305 = vmatpush1.bf16.msra.mxu0 0
    %3306 = vmatprep.subr.bf16.mxu0 0
    %3307 = vmatpush1.bf16.msra.mxu0 0
    %3308 = vmatprep.subr.bf16.mxu0 0
    %3309 = vmatpush1.bf16.msra.mxu0 0
    %3310 = vmatprep.subr.bf16.mxu0 0
    %3311 = vmatpush1.bf16.msra.mxu0 0
    %3312 = vmatprep.mubr.bf16.mxu0 0
    %3313 = vmatmul.mubr.bf16.gmra.mrb[0].mxu0 %v3278
    %v3314 = vpop.f32.mrb[0].mxu0
    %v3315 = vadd.f32 %v3252, %v3314
    %v3316 = vpop.f32.mrb[0].mxu0
    %v3317 = vpop.f32.mrb[0].mxu0
    %v3318 = vpop.f32.mrb[0].mxu0
    %3319 = vdwg.mxu0
    %v3320 = vmax.f32 %v3315, 0.0
    %v3321 = vld [vmem:[%s18] sm:$0xf]
    %v3322 = vld [vmem:[%s18 + $0x4] sm:$0xf]
    %v3323 = vld [vmem:[%s18 + $0x8] sm:$0xf]
    %v3324 = vld [vmem:[%s18 + $0xc] sm:$0xf]
    %v3325 = vld [vmem:[%s18 + $0x10] sm:$0xf]
    %v3326 = vld [vmem:[%s18 + $0x14] sm:$0xf]
    %v3327 = vld [vmem:[%s18 + $0x18] sm:$0xf]
    %v3328 = vld [vmem:[%s18 + $0x1c] sm:$0xf]
    %v3329 = vpack.c.bf16 %v3320, %v3320
    %v3330 = vld [vmem:[%s19] sm:$0x1]
    %v3339 = vunpack.c.l.b16 %v3321
    %v3340 = vunpack.c.l.b16 %v3322
    %v3341 = vunpack.c.l.b16 %v3323
    %v3342 = vunpack.c.l.b16 %v3324
    %v3343 = vunpack.c.l.b16 %v3325
    %v3344 = vunpack.c.l.b16 %v3326
    %v3345 = vunpack.c.l.b16 %v3327
    %v3346 = vunpack.c.l.b16 %v3328
    %v3347 = vpack.c.b16 %v3340, %v3339
    %v3348 = vpack.c.b16 %v3342, %v3341
    %v3349 = vpack.c.b16 %v3344, %v3343
    %v3350 = vpack.c.b16 %v3346, %v3345
    %v3356 = vsel %vm71, %v3329, 0
    %3358 = vmatprep.subr.bf16.mxu0 0
    %3359 = vmatpush1.bf16.msra.mxu0 %v3347
    %3360 = vmatprep.subr.bf16.mxu0 0
    %3361 = vmatpush1.bf16.msra.mxu0 %v3348
    %3362 = vmatprep.subr.bf16.mxu0 0
    %3363 = vmatpush1.bf16.msra.mxu0 %v3349
    %3364 = vmatprep.subr.bf16.mxu0 0
    %3365 = vmatpush1.bf16.msra.mxu0 %v3350
    %3366 = vmatprep.subr.bf16.mxu0 0
    %3367 = vmatpush1.bf16.msra.mxu0 0
    %3368 = vmatprep.subr.bf16.mxu0 0
    %3369 = vmatpush1.bf16.msra.mxu0 0
    %3370 = vmatprep.subr.bf16.mxu0 0
    %3371 = vmatpush1.bf16.msra.mxu0 0
    %3372 = vmatprep.subr.bf16.mxu0 0
    %3373 = vmatpush1.bf16.msra.mxu0 0
    %3374 = vmatprep.subr.bf16.mxu0 0
    %3375 = vmatpush1.bf16.msra.mxu0 0
    %3376 = vmatprep.subr.bf16.mxu0 0
    %3377 = vmatpush1.bf16.msra.mxu0 0
    %3378 = vmatprep.subr.bf16.mxu0 0
    %3379 = vmatpush1.bf16.msra.mxu0 0
    %3380 = vmatprep.subr.bf16.mxu0 0
    %3381 = vmatpush1.bf16.msra.mxu0 0
    %3382 = vmatprep.subr.bf16.mxu0 0
    %3383 = vmatpush1.bf16.msra.mxu0 0
    %3384 = vmatprep.subr.bf16.mxu0 0
    %3385 = vmatpush1.bf16.msra.mxu0 0
    %3386 = vmatprep.subr.bf16.mxu0 0
    %3387 = vmatpush1.bf16.msra.mxu0 0
    %3388 = vmatprep.subr.bf16.mxu0 0
    %3389 = vmatpush1.bf16.msra.mxu0 0
    %3390 = vmatprep.mubr.bf16.mxu0 0
    %3391 = vmatmul.mubr.bf16.gmra.mrb[0].mxu0 %v3356
    %v3392 = vpop.f32.mrb[0].mxu0
    %v3393 = vadd.f32 %v3330, %v3392
    %v3394 = vpop.f32.mrb[0].mxu0
    %v3395 = vpop.f32.mrb[0].mxu0
    %v3396 = vpop.f32.mrb[0].mxu0
    %3397 = vdwg.mxu0
    %3398 = vst.msk [vmem:[#allocation4 + $0x1] sm:$0x1] %vm3241, %v3393
    // Predicated region
    $region82: #{roberta_class_forward.1} parent=1 // pred_check
      _
    $region83: #{roberta_class_forward.1} parent=1 // pred_check_branch
      %3400 = sbr.rel (0) target = $region85
    $region84: #{roberta_class_forward.1} parent=1 // pred_region
      %s3402 = ssub.s32 32, 32
      %3403 = vsyncadd [#allocation5], %s3402
      %s3405 = sshll.u32 [#allocation4], 4
      %s3406 = int_to_ptr.vmem [resolvable:$true] %s3405
      %3408 = dma.vmem_to_hbm [thread:$0]  %s3406, 32, %s20, [#allocation5]
    $region85: #{roberta_class_forward.1} parent=1 // pred_fallthru
      _
    // Predicated region
    $region86: #{roberta_class_forward.1} parent=1 // pred_check
      _
    $region87: #{roberta_class_forward.1} parent=1 // pred_check_branch
      %3410 = sbr.rel (0) target = $region89
    $region88: #{roberta_class_forward.1} parent=1 // pred_region
      %3411 = dma.done [#allocation5], 32
    $region89: #{roberta_class_forward.1} parent=1 // pred_fallthru
      _
    %3412 = vsyncpa [#allocation5], 1

</llo_original>
